<compile_context>
chip_gen: v6e
topology: v6e:2x2x1
jax: 0.10.0
libtpu: 0.0.40
codegen_flags: <defaults>
</compile_context>

<pallas_src>
import functools

import numpy as np
import jax
import jax.numpy as jnp
from jax.experimental import pallas as pl
from jax.experimental.pallas import tpu as pltpu

NUM_CLASS = 10        # len(idx2id) == 0 in the source file (degenerate); synthetic 10 here.
EPS = 1e-5            # nn.BatchNorm2d default
LANE = 128

# Static geometry implied by `out.reshape(-1, 32*2*2)`:
H_IN = 64             # input spatial
H1 = 22               # conv1 output spatial
HP = 4                # avgpool output spatial
H2 = 2                # conv2 output spatial
C1 = 32               # conv channels
K1 = 5 * 5 * 3        # conv1 im2col K
FC_IN = C1 * H2 * H2  # 128


# ---------------------------------------------------------------------------
# The single fused kernel
# ---------------------------------------------------------------------------
def _cnn_kernel(p1_ref, w1_ref, bn1_ref, s_ref, w2_ref, bn2_ref,
                fw1_ref, fb1_ref, fw2_ref, fb2_ref, o_ref, *, batch):
    """Whole Cnn.forward in one kernel; every intermediate stays in VMEM/vregs.

    p1_ref : (B*484, 75)    bf16  conv1 im2col patches, rows (b,h,w), cols (kh,kw,cin)
    w1_ref : (75, 32)       bf16  conv1 weight (HWIO flattened) with 1/255 folded in
    bn1_ref: (3, 32)        f32   rows = [conv bias, BN gamma, BN beta]
    s_ref  : (9*4*B, B*484) f32   constant AvgPool(5,5)+conv2-im2col gather matrix,
                                  rows ordered (tap, out_pos, b), values 1/25 or 0
    w2_ref : (288, 32)      f32   conv2 weight, rows ordered (kh, kw, cin)
    bn2_ref: (3, 32)        f32
    fw1_ref: (128, 128)     f32   fc1 weight, rows re-ordered to (out_pos, cin) so the
                                  NCHW flatten is consumed with no transpose; cols 20->128
    fb1_ref: (1, 128)       f32   zero padded
    fw2_ref: (128, 128)     f32   fc2 weight, zero padded (rows 20->128, cols 10->128)
    fb2_ref: (1, 128)       f32   zero padded
    o_ref  : (B, 128)       f32   logits in cols [0, NUM_CLASS); rest zero (lane-dense store)
    """
    f32 = jnp.float32

    # --- Conv2d(3,32,5,stride=3,pad=2) (bf16 MXU) + bias + train-mode BN + ReLU (f32) ---
    y1 = jnp.dot(p1_ref[...], w1_ref[...], preferred_element_type=f32)
    y1 = y1 + bn1_ref[0:1, :]
    m1 = jnp.mean(y1, axis=0, keepdims=True)                    # stats over N*H*W
    v1 = jnp.mean(jnp.square(y1 - m1), axis=0, keepdims=True)   # biased variance
    h1 = (y1 - m1) * jax.lax.rsqrt(v1 + EPS) * bn1_ref[1:2, :] + bn1_ref[2:3, :]
    h1 = jnp.maximum(h1, 0.0)                                   # (B*484, 32)

    # --- AvgPool2d(5,5) + conv2 patch gather as ONE constant matmul (data stays in VMEM) ---
    q = jnp.dot(s_ref[...], h1, preferred_element_type=f32)     # (9*4*B, 32), rows (t, o, b)

    # --- Conv2d(32,32,3,stride=2,pad=1) as 9 tap matmuls + bias + BN + ReLU -------------
    rows = 4 * batch
    w2 = w2_ref[...]
    y2 = jnp.zeros((rows, C1), f32)
    for t in range(9):                                          # unrolled, static slices
        y2 = y2 + jnp.dot(q[t * rows:(t + 1) * rows, :],
                          w2[t * C1:(t + 1) * C1, :],
                          preferred_element_type=f32)
    y2 = y2 + bn2_ref[0:1, :]
    m2 = jnp.mean(y2, axis=0, keepdims=True)
    v2 = jnp.mean(jnp.square(y2 - m2), axis=0, keepdims=True)
    h2 = (y2 - m2) * jax.lax.rsqrt(v2 + EPS) * bn2_ref[1:2, :] + bn2_ref[2:3, :]
    h2 = jnp.maximum(h2, 0.0)                                   # rows (out_pos, b), cols cin

    # --- fc: Linear(128,20) -> ReLU -> Linear(20,10), padded to 128 lanes ----------------
    # PyTorch flattens NCHW, i.e. feature = (c, oh, ow); fw1 rows were permuted to (o, c)
    # at init so we contract per output position without any transpose/reshape.
    fw1 = fw1_ref[...]
    h = jnp.zeros((batch, LANE), f32)
    for o in range(4):                                          # unrolled
        h = h + jnp.dot(h2[o * batch:(o + 1) * batch, :],
                        fw1[o * C1:(o + 1) * C1, :],
                        preferred_element_type=f32)
    h = jnp.maximum(h + fb1_ref[...], 0.0)
    o_ref[...] = jnp.dot(h, fw2_ref[...], preferred_element_type=f32) + fb2_ref[...]


# ---------------------------------------------------------------------------
# pallas_call wrapper (whole arrays as single VMEM blocks; everything is tiny)
# ---------------------------------------------------------------------------
def _full_spec(shape):
    nd = len(shape)
    return pl.BlockSpec(shape, lambda i, _nd=nd: (0,) * _nd)


# ---------------------------------------------------------------------------
# Host-side layout prep (pure data movement, fused by XLA, feeds the single kernel)
# ---------------------------------------------------------------------------
def _im2col_conv1(x_nhwc):
    """(B,64,64,3) bf16 -> (B*484, 75) conv1 im2col (k=5, s=3, p=2), cols (kh, kw, cin)."""
    B = x_nhwc.shape[0]
    xp = jnp.pad(x_nhwc, ((0, 0), (2, 2), (2, 2), (0, 0)))
    cols = []
    for i in range(5):
        for j in range(5):
            cols.append(xp[:, i::3, j::3, :][:, :H1, :H1, :])
    p = jnp.stack(cols, axis=3)                     # (B, 22, 22, 25, 3)
    return p.reshape(B * H1 * H1, K1)


@functools.lru_cache(maxsize=None)
def _pool_conv2_gather(batch):
    """Constant matrix folding AvgPool2d(5,5) and conv2's (k=3,s=2,p=1) im2col row gather
    (including its zero padding) into one matmul on the conv1 output.
    Rows ordered (tap, out_pos, b); cols index conv1 output rows (b, h, w)."""
    S = np.zeros((9 * 4 * batch, batch * H1 * H1), np.float32)
    for ki in range(3):
        for kj in range(3):
            t = ki * 3 + kj
            for oh in range(H2):
                for ow in range(H2):
                    o = oh * H2 + ow
                    ph, pw = 2 * oh - 1 + ki, 2 * ow - 1 + kj
                    if not (0 <= ph < HP and 0 <= pw < HP):
                        continue                    # conv2 zero-padding border -> zero row
                    for b in range(batch):
                        r = t * (4 * batch) + o * batch + b
                        for u in range(5):
                            for v in range(5):
                                c = b * H1 * H1 + (5 * ph + u) * H1 + (5 * pw + v)
                                S[r, c] = 1.0 / 25.0
    return jnp.asarray(S)


# ---------------------------------------------------------------------------
# Forward pass
# ---------------------------------------------------------------------------
def cnn_forward(x_nchw, params):
    """Forward of `Cnn` (training-mode BatchNorm). x_nchw: (B, 3, 64, 64), pixel range."""
    B, C, H, W = x_nchw.shape
    assert (C, H, W) == (3, H_IN, H_IN), "the 32*2*2 flatten implies a 64x64 RGB input"

    # Layout-only prep: NCHW -> NHWC, bf16, conv1 im2col.  (1/255 is folded into w1.)
    x = jnp.transpose(x_nchw, (0, 2, 3, 1)).astype(jnp.bfloat16)
    p1 = _im2col_conv1(x)                            # (B*484, 75) bf16

    s_all = _pool_conv2_gather(B)                    # compile-time constant

    args = (p1, params["w1"], params["bn1"], s_all, params["w2"], params["bn2"],
            params["fw1"], params["fb1"], params["fw2"], params["fb2"])

    out = pl.pallas_call(
        functools.partial(_cnn_kernel, batch=B),
        grid=(1,),
        in_specs=[_full_spec(a.shape) for a in args],
        out_specs=_full_spec((B, LANE)),
        out_shape=jax.ShapeDtypeStruct((B, LANE), jnp.float32),
        compiler_params=pltpu.CompilerParams(dimension_semantics=("arbitrary",)),
    )(*args)
    return out[:, :NUM_CLASS]


# ---------------------------------------------------------------------------
# Deterministic parameter init (synthetic; shapes/layout follow the module __init__).
# A real PyTorch state_dict would map as documented per entry.
# ---------------------------------------------------------------------------
def init_params(key):
    ks = jax.random.split(key, 8)
    p = {}

    # conv1: PyTorch OIHW (32,3,5,5) -> HWIO (5,5,3,32) -> (75,32); fold 1/255; bf16 MXU operand.
    w1 = jax.random.normal(ks[0], (5, 5, 3, 32), jnp.float32) * 0.1
    p["w1"] = (w1.reshape(K1, C1) * (1.0 / 255.0)).astype(jnp.bfloat16)
    b1 = jax.random.normal(ks[1], (1, C1), jnp.float32) * 0.01
    p["bn1"] = jnp.concatenate(                      # rows: conv bias, BN weight, BN bias
        [b1, jnp.ones((1, C1), jnp.float32), jnp.zeros((1, C1), jnp.float32)], axis=0)

    # conv2: HWIO (3,3,32,32) -> (288,32), rows (kh,kw,cin).
    w2 = jax.random.normal(ks[2], (3, 3, C1, C1), jnp.float32) * 0.1
    p["w2"] = w2.reshape(9 * C1, C1)
    b2 = jax.random.normal(ks[3], (1, C1), jnp.float32) * 0.01
    p["bn2"] = jnp.concatenate(
        [b2, jnp.ones((1, C1), jnp.float32), jnp.zeros((1, C1), jnp.float32)], axis=0)

    # fc1: PyTorch Linear(128, 20).weight.T is (128,20) with rows f=(c, oh, ow).
    # Re-order rows to (out_pos, c) so the kernel needs no transpose; pad cols 20 -> 128.
    fw1 = jax.random.normal(ks[4], (FC_IN, 2 * NUM_CLASS), jnp.float32) * 0.1
    fw1_k = fw1.reshape(C1, 4, 2 * NUM_CLASS).transpose(1, 0, 2).reshape(FC_IN, 2 * NUM_CLASS)
    p["fw1"] = jnp.pad(fw1_k, ((0, 0), (0, LANE - 2 * NUM_CLASS)))
    fb1 = jax.random.normal(ks[5], (1, 2 * NUM_CLASS), jnp.float32) * 0.01
    p["fb1"] = jnp.pad(fb1, ((0, 0), (0, LANE - 2 * NUM_CLASS)))

    # fc2: Linear(20, 10).weight.T is (20,10); zero-pad to (128,128) for lane-dense math.
    fw2 = jax.random.normal(ks[6], (2 * NUM_CLASS, NUM_CLASS), jnp.float32) * 0.1
    p["fw2"] = jnp.pad(fw2, ((0, LANE - 2 * NUM_CLASS), (0, LANE - NUM_CLASS)))
    fb2 = jax.random.normal(ks[7], (1, NUM_CLASS), jnp.float32) * 0.01
    p["fb2"] = jnp.pad(fb2, ((0, 0), (0, LANE - NUM_CLASS)))
    return p


if __name__ == "__main__":
    key = jax.random.PRNGKey(0)
    k_x, k_p = jax.random.split(key)
    # Input implied by the module's 32*2*2 flatten: (B, 3, 64, 64), pixel-range values.
    x = jax.random.uniform(k_x, (2, 3, 64, 64), jnp.float32, 0.0, 255.0)
    params = init_params(k_p)

    out = jax.jit(cnn_forward)(x, params)
    out = jax.block_until_ready(out)
    assert out.shape == (2, NUM_CLASS), out.shape
    assert bool(jnp.all(jnp.isfinite(out)))
    print("KERNEL_OK")
</pallas_src>

<mosaic_0001>
module attributes {stable_mosaic.version = 11 : i64} {
  func.func @_cnn_kernel(%arg0: i32, %arg1: memref<968x75xbf16, #tpu.memory_space<vmem>>, %arg2: memref<75x32xbf16, #tpu.memory_space<vmem>>, %arg3: memref<3x32xf32, #tpu.memory_space<vmem>>, %arg4: memref<72x968xf32, #tpu.memory_space<vmem>>, %arg5: memref<288x32xf32, #tpu.memory_space<vmem>>, %arg6: memref<3x32xf32, #tpu.memory_space<vmem>>, %arg7: memref<128x128xf32, #tpu.memory_space<vmem>>, %arg8: memref<1x128xf32, #tpu.memory_space<vmem>>, %arg9: memref<128x128xf32, #tpu.memory_space<vmem>>, %arg10: memref<1x128xf32, #tpu.memory_space<vmem>>, %arg11: memref<2x128xf32, #tpu.memory_space<vmem>>) attributes {dimension_semantics = [#tpu.dimension_semantics<arbitrary>], iteration_bounds = array<i64: 1>, scalar_prefetch = 0 : i64, scratch_operands = 0 : i64, tpu.core_type = #tpu.core_type<tc>, window_params = [{pipeline_mode = #tpu.pipeline_mode<synchronous>, transform_indices = @transform_0, window_bounds = array<i64: 968, 75>}, {pipeline_mode = #tpu.pipeline_mode<synchronous>, transform_indices = @transform_1, window_bounds = array<i64: 75, 32>}, {pipeline_mode = #tpu.pipeline_mode<synchronous>, transform_indices = @transform_2, window_bounds = array<i64: 3, 32>}, {pipeline_mode = #tpu.pipeline_mode<synchronous>, transform_indices = @transform_3, window_bounds = array<i64: 72, 968>}, {pipeline_mode = #tpu.pipeline_mode<synchronous>, transform_indices = @transform_4, window_bounds = array<i64: 288, 32>}, {pipeline_mode = #tpu.pipeline_mode<synchronous>, transform_indices = @transform_5, window_bounds = array<i64: 3, 32>}, {pipeline_mode = #tpu.pipeline_mode<synchronous>, transform_indices = @transform_6, window_bounds = array<i64: 128, 128>}, {pipeline_mode = #tpu.pipeline_mode<synchronous>, transform_indices = @transform_7, window_bounds = array<i64: 1, 128>}, {pipeline_mode = #tpu.pipeline_mode<synchronous>, transform_indices = @transform_8, window_bounds = array<i64: 128, 128>}, {pipeline_mode = #tpu.pipeline_mode<synchronous>, transform_indices = @transform_9, window_bounds = array<i64: 1, 128>}, {pipeline_mode = #tpu.pipeline_mode<synchronous>, transform_indices = @transform_10, window_bounds = array<i64: 2, 128>}]} {
    %c0 = arith.constant 0 : index
    %c0_0 = arith.constant 0 : index
    %0 = vector.load %arg1[%c0, %c0_0] : memref<968x75xbf16, #tpu.memory_space<vmem>>, vector<968x75xbf16>
    %c0_1 = arith.constant 0 : index
    %c0_2 = arith.constant 0 : index
    %1 = vector.load %arg2[%c0_1, %c0_2] : memref<75x32xbf16, #tpu.memory_space<vmem>>, vector<75x32xbf16>
    %cst = arith.constant dense<0.000000e+00> : vector<968x32xf32>
    %2 = tpu.matmul %0, %1, %cst {dimension_numbers = #tpu.dot_dimension_numbers<[1], [0], [0], [1], [0, 0, 1, 1], [], []>} : vector<968x75xbf16>, vector<75x32xbf16>, vector<968x32xf32> -> vector<968x32xf32>
    %c0_3 = arith.constant 0 : index
    %c0_4 = arith.constant 0 : index
    %3 = vector.load %arg3[%c0_3, %c0_4] : memref<3x32xf32, #tpu.memory_space<vmem>>, vector<1x32xf32>
    %4 = vector.broadcast %3 : vector<1x32xf32> to vector<968x32xf32>
    %5 = arith.addf %2, %4 : vector<968x32xf32>
    %cst_5 = arith.constant dense<0.000000e+00> : vector<32xf32>
    %6 = vector.multi_reduction <add>, %5, %cst_5 [0] : vector<968x32xf32> to vector<32xf32>
    %7 = vector.shape_cast %6 : vector<32xf32> to vector<1x32xf32>
    %cst_6 = arith.constant 9.680000e+02 : f32
    %8 = vector.broadcast %cst_6 : f32 to vector<1x32xf32>
    %9 = arith.divf %7, %8 : vector<1x32xf32>
    %10 = vector.broadcast %9 : vector<1x32xf32> to vector<968x32xf32>
    %11 = arith.subf %5, %10 : vector<968x32xf32>
    %12 = arith.mulf %11, %11 : vector<968x32xf32>
    %cst_7 = arith.constant dense<0.000000e+00> : vector<32xf32>
    %13 = vector.multi_reduction <add>, %12, %cst_7 [0] : vector<968x32xf32> to vector<32xf32>
    %14 = vector.shape_cast %13 : vector<32xf32> to vector<1x32xf32>
    %cst_8 = arith.constant 9.680000e+02 : f32
    %15 = vector.broadcast %cst_8 : f32 to vector<1x32xf32>
    %16 = arith.divf %14, %15 : vector<1x32xf32>
    %17 = vector.broadcast %9 : vector<1x32xf32> to vector<968x32xf32>
    %18 = arith.subf %5, %17 : vector<968x32xf32>
    %cst_9 = arith.constant 9.99999974E-6 : f32
    %19 = vector.broadcast %cst_9 : f32 to vector<1x32xf32>
    %20 = arith.addf %16, %19 : vector<1x32xf32>
    %21 = math.rsqrt %20 : vector<1x32xf32>
    %22 = vector.broadcast %21 : vector<1x32xf32> to vector<968x32xf32>
    %23 = arith.mulf %18, %22 : vector<968x32xf32>
    %c1 = arith.constant 1 : index
    %c0_10 = arith.constant 0 : index
    %24 = vector.load %arg3[%c1, %c0_10] : memref<3x32xf32, #tpu.memory_space<vmem>>, vector<1x32xf32>
    %25 = vector.broadcast %24 : vector<1x32xf32> to vector<968x32xf32>
    %26 = arith.mulf %23, %25 : vector<968x32xf32>
    %c2 = arith.constant 2 : index
    %c0_11 = arith.constant 0 : index
    %27 = vector.load %arg3[%c2, %c0_11] : memref<3x32xf32, #tpu.memory_space<vmem>>, vector<1x32xf32>
    %28 = vector.broadcast %27 : vector<1x32xf32> to vector<968x32xf32>
    %29 = arith.addf %26, %28 : vector<968x32xf32>
    %cst_12 = arith.constant 0.000000e+00 : f32
    %30 = vector.broadcast %cst_12 : f32 to vector<968x32xf32>
    %31 = arith.maximumf %29, %30 : vector<968x32xf32>
    %c0_13 = arith.constant 0 : index
    %c0_14 = arith.constant 0 : index
    %32 = vector.load %arg4[%c0_13, %c0_14] : memref<72x968xf32, #tpu.memory_space<vmem>>, vector<72x968xf32>
    %cst_15 = arith.constant dense<0.000000e+00> : vector<72x32xf32>
    %33 = tpu.matmul %32, %31, %cst_15 {dimension_numbers = #tpu.dot_dimension_numbers<[1], [0], [0], [1], [0, 0, 1, 1], [], []>} : vector<72x968xf32>, vector<968x32xf32>, vector<72x32xf32> -> vector<72x32xf32>
    %c0_16 = arith.constant 0 : index
    %c0_17 = arith.constant 0 : index
    %34 = vector.load %arg5[%c0_16, %c0_17] : memref<288x32xf32, #tpu.memory_space<vmem>>, vector<288x32xf32>
    %cst_18 = arith.constant 0.000000e+00 : f32
    %35 = vector.broadcast %cst_18 : f32 to vector<8x32xf32>
    %36 = vector.extract_strided_slice %33 {offsets = [0, 0], sizes = [8, 32], strides = [1, 1]} : vector<72x32xf32> to vector<8x32xf32>
    %37 = vector.extract_strided_slice %34 {offsets = [0, 0], sizes = [32, 32], strides = [1, 1]} : vector<288x32xf32> to vector<32x32xf32>
    %cst_19 = arith.constant dense<0.000000e+00> : vector<8x32xf32>
    %38 = tpu.matmul %36, %37, %cst_19 {dimension_numbers = #tpu.dot_dimension_numbers<[1], [0], [0], [1], [0, 0, 1, 1], [], []>} : vector<8x32xf32>, vector<32x32xf32>, vector<8x32xf32> -> vector<8x32xf32>
    %39 = arith.addf %35, %38 : vector<8x32xf32>
    %40 = vector.extract_strided_slice %33 {offsets = [8, 0], sizes = [8, 32], strides = [1, 1]} : vector<72x32xf32> to vector<8x32xf32>
    %41 = vector.extract_strided_slice %34 {offsets = [32, 0], sizes = [32, 32], strides = [1, 1]} : vector<288x32xf32> to vector<32x32xf32>
    %cst_20 = arith.constant dense<0.000000e+00> : vector<8x32xf32>
    %42 = tpu.matmul %40, %41, %cst_20 {dimension_numbers = #tpu.dot_dimension_numbers<[1], [0], [0], [1], [0, 0, 1, 1], [], []>} : vector<8x32xf32>, vector<32x32xf32>, vector<8x32xf32> -> vector<8x32xf32>
    %43 = arith.addf %39, %42 : vector<8x32xf32>
    %44 = vector.extract_strided_slice %33 {offsets = [16, 0], sizes = [8, 32], strides = [1, 1]} : vector<72x32xf32> to vector<8x32xf32>
    %45 = vector.extract_strided_slice %34 {offsets = [64, 0], sizes = [32, 32], strides = [1, 1]} : vector<288x32xf32> to vector<32x32xf32>
    %cst_21 = arith.constant dense<0.000000e+00> : vector<8x32xf32>
    %46 = tpu.matmul %44, %45, %cst_21 {dimension_numbers = #tpu.dot_dimension_numbers<[1], [0], [0], [1], [0, 0, 1, 1], [], []>} : vector<8x32xf32>, vector<32x32xf32>, vector<8x32xf32> -> vector<8x32xf32>
    %47 = arith.addf %43, %46 : vector<8x32xf32>
    %48 = vector.extract_strided_slice %33 {offsets = [24, 0], sizes = [8, 32], strides = [1, 1]} : vector<72x32xf32> to vector<8x32xf32>
    %49 = vector.extract_strided_slice %34 {offsets = [96, 0], sizes = [32, 32], strides = [1, 1]} : vector<288x32xf32> to vector<32x32xf32>
    %cst_22 = arith.constant dense<0.000000e+00> : vector<8x32xf32>
    %50 = tpu.matmul %48, %49, %cst_22 {dimension_numbers = #tpu.dot_dimension_numbers<[1], [0], [0], [1], [0, 0, 1, 1], [], []>} : vector<8x32xf32>, vector<32x32xf32>, vector<8x32xf32> -> vector<8x32xf32>
    %51 = arith.addf %47, %50 : vector<8x32xf32>
    %52 = vector.extract_strided_slice %33 {offsets = [32, 0], sizes = [8, 32], strides = [1, 1]} : vector<72x32xf32> to vector<8x32xf32>
    %53 = vector.extract_strided_slice %34 {offsets = [128, 0], sizes = [32, 32], strides = [1, 1]} : vector<288x32xf32> to vector<32x32xf32>
    %cst_23 = arith.constant dense<0.000000e+00> : vector<8x32xf32>
    %54 = tpu.matmul %52, %53, %cst_23 {dimension_numbers = #tpu.dot_dimension_numbers<[1], [0], [0], [1], [0, 0, 1, 1], [], []>} : vector<8x32xf32>, vector<32x32xf32>, vector<8x32xf32> -> vector<8x32xf32>
    %55 = arith.addf %51, %54 : vector<8x32xf32>
    %56 = vector.extract_strided_slice %33 {offsets = [40, 0], sizes = [8, 32], strides = [1, 1]} : vector<72x32xf32> to vector<8x32xf32>
    %57 = vector.extract_strided_slice %34 {offsets = [160, 0], sizes = [32, 32], strides = [1, 1]} : vector<288x32xf32> to vector<32x32xf32>
    %cst_24 = arith.constant dense<0.000000e+00> : vector<8x32xf32>
    %58 = tpu.matmul %56, %57, %cst_24 {dimension_numbers = #tpu.dot_dimension_numbers<[1], [0], [0], [1], [0, 0, 1, 1], [], []>} : vector<8x32xf32>, vector<32x32xf32>, vector<8x32xf32> -> vector<8x32xf32>
    %59 = arith.addf %55, %58 : vector<8x32xf32>
    %60 = vector.extract_strided_slice %33 {offsets = [48, 0], sizes = [8, 32], strides = [1, 1]} : vector<72x32xf32> to vector<8x32xf32>
    %61 = vector.extract_strided_slice %34 {offsets = [192, 0], sizes = [32, 32], strides = [1, 1]} : vector<288x32xf32> to vector<32x32xf32>
    %cst_25 = arith.constant dense<0.000000e+00> : vector<8x32xf32>
    %62 = tpu.matmul %60, %61, %cst_25 {dimension_numbers = #tpu.dot_dimension_numbers<[1], [0], [0], [1], [0, 0, 1, 1], [], []>} : vector<8x32xf32>, vector<32x32xf32>, vector<8x32xf32> -> vector<8x32xf32>
    %63 = arith.addf %59, %62 : vector<8x32xf32>
    %64 = vector.extract_strided_slice %33 {offsets = [56, 0], sizes = [8, 32], strides = [1, 1]} : vector<72x32xf32> to vector<8x32xf32>
    %65 = vector.extract_strided_slice %34 {offsets = [224, 0], sizes = [32, 32], strides = [1, 1]} : vector<288x32xf32> to vector<32x32xf32>
    %cst_26 = arith.constant dense<0.000000e+00> : vector<8x32xf32>
    %66 = tpu.matmul %64, %65, %cst_26 {dimension_numbers = #tpu.dot_dimension_numbers<[1], [0], [0], [1], [0, 0, 1, 1], [], []>} : vector<8x32xf32>, vector<32x32xf32>, vector<8x32xf32> -> vector<8x32xf32>
    %67 = arith.addf %63, %66 : vector<8x32xf32>
    %68 = vector.extract_strided_slice %33 {offsets = [64, 0], sizes = [8, 32], strides = [1, 1]} : vector<72x32xf32> to vector<8x32xf32>
    %69 = vector.extract_strided_slice %34 {offsets = [256, 0], sizes = [32, 32], strides = [1, 1]} : vector<288x32xf32> to vector<32x32xf32>
    %cst_27 = arith.constant dense<0.000000e+00> : vector<8x32xf32>
    %70 = tpu.matmul %68, %69, %cst_27 {dimension_numbers = #tpu.dot_dimension_numbers<[1], [0], [0], [1], [0, 0, 1, 1], [], []>} : vector<8x32xf32>, vector<32x32xf32>, vector<8x32xf32> -> vector<8x32xf32>
    %71 = arith.addf %67, %70 : vector<8x32xf32>
    %c0_28 = arith.constant 0 : index
    %c0_29 = arith.constant 0 : index
    %72 = vector.load %arg6[%c0_28, %c0_29] : memref<3x32xf32, #tpu.memory_space<vmem>>, vector<1x32xf32>
    %73 = vector.broadcast %72 : vector<1x32xf32> to vector<8x32xf32>
    %74 = arith.addf %71, %73 : vector<8x32xf32>
    %cst_30 = arith.constant dense<0.000000e+00> : vector<32xf32>
    %75 = vector.multi_reduction <add>, %74, %cst_30 [0] : vector<8x32xf32> to vector<32xf32>
    %76 = vector.shape_cast %75 : vector<32xf32> to vector<1x32xf32>
    %cst_31 = arith.constant 8.000000e+00 : f32
    %77 = vector.broadcast %cst_31 : f32 to vector<1x32xf32>
    %78 = arith.divf %76, %77 : vector<1x32xf32>
    %79 = vector.broadcast %78 : vector<1x32xf32> to vector<8x32xf32>
    %80 = arith.subf %74, %79 : vector<8x32xf32>
    %81 = arith.mulf %80, %80 : vector<8x32xf32>
    %cst_32 = arith.constant dense<0.000000e+00> : vector<32xf32>
    %82 = vector.multi_reduction <add>, %81, %cst_32 [0] : vector<8x32xf32> to vector<32xf32>
    %83 = vector.shape_cast %82 : vector<32xf32> to vector<1x32xf32>
    %cst_33 = arith.constant 8.000000e+00 : f32
    %84 = vector.broadcast %cst_33 : f32 to vector<1x32xf32>
    %85 = arith.divf %83, %84 : vector<1x32xf32>
    %86 = vector.broadcast %78 : vector<1x32xf32> to vector<8x32xf32>
    %87 = arith.subf %74, %86 : vector<8x32xf32>
    %cst_34 = arith.constant 9.99999974E-6 : f32
    %88 = vector.broadcast %cst_34 : f32 to vector<1x32xf32>
    %89 = arith.addf %85, %88 : vector<1x32xf32>
    %90 = math.rsqrt %89 : vector<1x32xf32>
    %91 = vector.broadcast %90 : vector<1x32xf32> to vector<8x32xf32>
    %92 = arith.mulf %87, %91 : vector<8x32xf32>
    %c1_35 = arith.constant 1 : index
    %c0_36 = arith.constant 0 : index
    %93 = vector.load %arg6[%c1_35, %c0_36] : memref<3x32xf32, #tpu.memory_space<vmem>>, vector<1x32xf32>
    %94 = vector.broadcast %93 : vector<1x32xf32> to vector<8x32xf32>
    %95 = arith.mulf %92, %94 : vector<8x32xf32>
    %c2_37 = arith.constant 2 : index
    %c0_38 = arith.constant 0 : index
    %96 = vector.load %arg6[%c2_37, %c0_38] : memref<3x32xf32, #tpu.memory_space<vmem>>, vector<1x32xf32>
    %97 = vector.broadcast %96 : vector<1x32xf32> to vector<8x32xf32>
    %98 = arith.addf %95, %97 : vector<8x32xf32>
    %cst_39 = arith.constant 0.000000e+00 : f32
    %99 = vector.broadcast %cst_39 : f32 to vector<8x32xf32>
    %100 = arith.maximumf %98, %99 : vector<8x32xf32>
    %c0_40 = arith.constant 0 : index
    %c0_41 = arith.constant 0 : index
    %101 = vector.load %arg7[%c0_40, %c0_41] : memref<128x128xf32, #tpu.memory_space<vmem>>, vector<128x128xf32>
    %cst_42 = arith.constant 0.000000e+00 : f32
    %102 = vector.broadcast %cst_42 : f32 to vector<2x128xf32>
    %103 = vector.extract_strided_slice %100 {offsets = [0, 0], sizes = [2, 32], strides = [1, 1]} : vector<8x32xf32> to vector<2x32xf32>
    %104 = vector.extract_strided_slice %101 {offsets = [0, 0], sizes = [32, 128], strides = [1, 1]} : vector<128x128xf32> to vector<32x128xf32>
    %cst_43 = arith.constant dense<0.000000e+00> : vector<2x128xf32>
    %105 = tpu.matmul %103, %104, %cst_43 {dimension_numbers = #tpu.dot_dimension_numbers<[1], [0], [0], [1], [0, 0, 1, 1], [], []>} : vector<2x32xf32>, vector<32x128xf32>, vector<2x128xf32> -> vector<2x128xf32>
    %106 = arith.addf %102, %105 : vector<2x128xf32>
    %107 = vector.extract_strided_slice %100 {offsets = [2, 0], sizes = [2, 32], strides = [1, 1]} : vector<8x32xf32> to vector<2x32xf32>
    %108 = vector.extract_strided_slice %101 {offsets = [32, 0], sizes = [32, 128], strides = [1, 1]} : vector<128x128xf32> to vector<32x128xf32>
    %cst_44 = arith.constant dense<0.000000e+00> : vector<2x128xf32>
    %109 = tpu.matmul %107, %108, %cst_44 {dimension_numbers = #tpu.dot_dimension_numbers<[1], [0], [0], [1], [0, 0, 1, 1], [], []>} : vector<2x32xf32>, vector<32x128xf32>, vector<2x128xf32> -> vector<2x128xf32>
    %110 = arith.addf %106, %109 : vector<2x128xf32>
    %111 = vector.extract_strided_slice %100 {offsets = [4, 0], sizes = [2, 32], strides = [1, 1]} : vector<8x32xf32> to vector<2x32xf32>
    %112 = vector.extract_strided_slice %101 {offsets = [64, 0], sizes = [32, 128], strides = [1, 1]} : vector<128x128xf32> to vector<32x128xf32>
    %cst_45 = arith.constant dense<0.000000e+00> : vector<2x128xf32>
    %113 = tpu.matmul %111, %112, %cst_45 {dimension_numbers = #tpu.dot_dimension_numbers<[1], [0], [0], [1], [0, 0, 1, 1], [], []>} : vector<2x32xf32>, vector<32x128xf32>, vector<2x128xf32> -> vector<2x128xf32>
    %114 = arith.addf %110, %113 : vector<2x128xf32>
    %115 = vector.extract_strided_slice %100 {offsets = [6, 0], sizes = [2, 32], strides = [1, 1]} : vector<8x32xf32> to vector<2x32xf32>
    %116 = vector.extract_strided_slice %101 {offsets = [96, 0], sizes = [32, 128], strides = [1, 1]} : vector<128x128xf32> to vector<32x128xf32>
    %cst_46 = arith.constant dense<0.000000e+00> : vector<2x128xf32>
    %117 = tpu.matmul %115, %116, %cst_46 {dimension_numbers = #tpu.dot_dimension_numbers<[1], [0], [0], [1], [0, 0, 1, 1], [], []>} : vector<2x32xf32>, vector<32x128xf32>, vector<2x128xf32> -> vector<2x128xf32>
    %118 = arith.addf %114, %117 : vector<2x128xf32>
    %c0_47 = arith.constant 0 : index
    %c0_48 = arith.constant 0 : index
    %119 = vector.load %arg8[%c0_47, %c0_48] : memref<1x128xf32, #tpu.memory_space<vmem>>, vector<1x128xf32>
    %120 = vector.broadcast %119 : vector<1x128xf32> to vector<2x128xf32>
    %121 = arith.addf %118, %120 : vector<2x128xf32>
    %cst_49 = arith.constant 0.000000e+00 : f32
    %122 = vector.broadcast %cst_49 : f32 to vector<2x128xf32>
    %123 = arith.maximumf %121, %122 : vector<2x128xf32>
    %c0_50 = arith.constant 0 : index
    %c0_51 = arith.constant 0 : index
    %124 = vector.load %arg9[%c0_50, %c0_51] : memref<128x128xf32, #tpu.memory_space<vmem>>, vector<128x128xf32>
    %cst_52 = arith.constant dense<0.000000e+00> : vector<2x128xf32>
    %125 = tpu.matmul %123, %124, %cst_52 {dimension_numbers = #tpu.dot_dimension_numbers<[1], [0], [0], [1], [0, 0, 1, 1], [], []>} : vector<2x128xf32>, vector<128x128xf32>, vector<2x128xf32> -> vector<2x128xf32>
    %c0_53 = arith.constant 0 : index
    %c0_54 = arith.constant 0 : index
    %126 = vector.load %arg10[%c0_53, %c0_54] : memref<1x128xf32, #tpu.memory_space<vmem>>, vector<1x128xf32>
    %127 = vector.broadcast %126 : vector<1x128xf32> to vector<2x128xf32>
    %128 = arith.addf %125, %127 : vector<2x128xf32>
    %c0_55 = arith.constant 0 : index
    %c0_56 = arith.constant 0 : index
    %129 = vector.load %arg11[%c0_55, %c0_56] : memref<2x128xf32, #tpu.memory_space<vmem>>, vector<2x128xf32>
    tpu.vector_store %arg11[%c0_55, %c0_56], %128 {strides = array<i32>} : memref<2x128xf32, #tpu.memory_space<vmem>>, vector<2x128xf32>,
    return
  }
  func.func @transform_0(%arg0: i32) -> (i32, i32) {
    %c0_i32 = arith.constant 0 : i32
    %c0_i32_0 = arith.constant 0 : i32
    %c0_i32_1 = arith.constant 0 : i32
    return %c0_i32, %c0_i32_0 : i32, i32
  }
  func.func @transform_1(%arg0: i32) -> (i32, i32) {
    %c0_i32 = arith.constant 0 : i32
    %c0_i32_0 = arith.constant 0 : i32
    %c0_i32_1 = arith.constant 0 : i32
    return %c0_i32, %c0_i32_0 : i32, i32
  }
  func.func @transform_2(%arg0: i32) -> (i32, i32) {
    %c0_i32 = arith.constant 0 : i32
    %c0_i32_0 = arith.constant 0 : i32
    %c0_i32_1 = arith.constant 0 : i32
    return %c0_i32, %c0_i32_0 : i32, i32
  }
  func.func @transform_3(%arg0: i32) -> (i32, i32) {
    %c0_i32 = arith.constant 0 : i32
    %c0_i32_0 = arith.constant 0 : i32
    %c0_i32_1 = arith.constant 0 : i32
    return %c0_i32, %c0_i32_0 : i32, i32
  }
  func.func @transform_4(%arg0: i32) -> (i32, i32) {
    %c0_i32 = arith.constant 0 : i32
    %c0_i32_0 = arith.constant 0 : i32
    %c0_i32_1 = arith.constant 0 : i32
    return %c0_i32, %c0_i32_0 : i32, i32
  }
  func.func @transform_5(%arg0: i32) -> (i32, i32) {
    %c0_i32 = arith.constant 0 : i32
    %c0_i32_0 = arith.constant 0 : i32
    %c0_i32_1 = arith.constant 0 : i32
    return %c0_i32, %c0_i32_0 : i32, i32
  }
  func.func @transform_6(%arg0: i32) -> (i32, i32) {
    %c0_i32 = arith.constant 0 : i32
    %c0_i32_0 = arith.constant 0 : i32
    %c0_i32_1 = arith.constant 0 : i32
    return %c0_i32, %c0_i32_0 : i32, i32
  }
  func.func @transform_7(%arg0: i32) -> (i32, i32) {
    %c0_i32 = arith.constant 0 : i32
    %c0_i32_0 = arith.constant 0 : i32
    %c0_i32_1 = arith.constant 0 : i32
    return %c0_i32, %c0_i32_0 : i32, i32
  }
  func.func @transform_8(%arg0: i32) -> (i32, i32) {
    %c0_i32 = arith.constant 0 : i32
    %c0_i32_0 = arith.constant 0 : i32
    %c0_i32_1 = arith.constant 0 : i32
    return %c0_i32, %c0_i32_0 : i32, i32
  }
  func.func @transform_9(%arg0: i32) -> (i32, i32) {
    %c0_i32 = arith.constant 0 : i32
    %c0_i32_0 = arith.constant 0 : i32
    %c0_i32_1 = arith.constant 0 : i32
    return %c0_i32, %c0_i32_0 : i32, i32
  }
  func.func @transform_10(%arg0: i32) -> (i32, i32) {
    %c0_i32 = arith.constant 0 : i32
    %c0_i32_0 = arith.constant 0 : i32
    %c0_i32_1 = arith.constant 0 : i32
    return %c0_i32, %c0_i32_0 : i32, i32
  }
}

</mosaic_0001>

<llo_original>
// kernel: cnn_forward.1
$region0: #{cnn_forward.1}
  #allocation0 [shape = 'u32[]', space=smem, size = 0x4, offset = 0x4, fixed_abs, tag = 'smem constant byte address 0x4 - core index']
  #allocation1 [shape = 'u32[144,128]{1,0:T(1,128)}', space=vmem, size = 0x12000, scoped, tag = 'internal scratch']
  %s0 = inlined_call_operand.vmem [shape: bf16[968,75], index: 0, kind: input, shape index: {}]
  %s1 = inlined_call_operand.vmem [shape: bf16[75,32], index: 1, kind: input, shape index: {}]
  %s2 = inlined_call_operand.vmem [shape: f32[3,32], index: 2, kind: input, shape index: {}]
  %s3 = inlined_call_operand.vmem [shape: f32[72,968], index: 3, kind: input, shape index: {}]
  %s4 = inlined_call_operand.vmem [shape: f32[288,32], index: 4, kind: input, shape index: {}]
  %s5 = inlined_call_operand.vmem [shape: f32[3,32], index: 5, kind: input, shape index: {}]
  %s6 = inlined_call_operand.vmem [shape: f32[128,128], index: 6, kind: input, shape index: {}]
  %s7 = inlined_call_operand.vmem [shape: f32[1,128], index: 7, kind: input, shape index: {}]
  %s8 = inlined_call_operand.vmem [shape: f32[128,128], index: 8, kind: input, shape index: {}]
  %s9 = inlined_call_operand.vmem [shape: f32[1,128], index: 9, kind: input, shape index: {}]
  %s10 = inlined_call_operand.hbm [shape: f32[2,128], index: 10, kind: output, shape index: {}]
  %s11 = sld [smem:[#allocation0]]
  $region50: #{cnn_forward.1} parent=0
    _
  %s13 = ssub.s32 1, %s11
  %s14 = scalar_select 0, %s13, %s11
  $region1: #{cnn_forward.1} parent=0
    #allocation2 [shape = 'u8[1024]{0}', space=vmem, size = 0x400, scoped, tag = 'output window, operand 0, single buffered']
    #allocation3 [shape = 's32[1]{0}', space=sflag, size = 0x4, scoped, tag = 'scoped memory for cnn_forward.1']
    %15 = vsyncpa [#allocation3], 0
    // Predicated region
    $region2: #{cnn_forward.1} parent=1 // pred_check
      _
    $region3: #{cnn_forward.1} parent=1 // pred_check_branch
      %17 = sbr.rel (0) target = $region5
    $region4: #{cnn_forward.1} parent=1 // pred_region
      _
    $region5: #{cnn_forward.1} parent=1 // pred_fallthru
      _
    // Predicated region
    $region6: #{cnn_forward.1} parent=1 // pred_check
      _
    $region7: #{cnn_forward.1} parent=1 // pred_check_branch
      %19 = sbr.rel (0) target = $region9
    $region8: #{cnn_forward.1} parent=1 // pred_region
      _
    $region9: #{cnn_forward.1} parent=1 // pred_fallthru
      _
    // Predicated region
    $region10: #{cnn_forward.1} parent=1 // pred_check
      _
    $region11: #{cnn_forward.1} parent=1 // pred_check_branch
      %21 = sbr.rel (0) target = $region13
    $region12: #{cnn_forward.1} parent=1 // pred_region
      _
    $region13: #{cnn_forward.1} parent=1 // pred_fallthru
      _
    // Predicated region
    $region14: #{cnn_forward.1} parent=1 // pred_check
      _
    $region15: #{cnn_forward.1} parent=1 // pred_check_branch
      %23 = sbr.rel (0) target = $region17
    $region16: #{cnn_forward.1} parent=1 // pred_region
      _
    $region17: #{cnn_forward.1} parent=1 // pred_fallthru
      _
    // Predicated region
    $region18: #{cnn_forward.1} parent=1 // pred_check
      _
    $region19: #{cnn_forward.1} parent=1 // pred_check_branch
      %25 = sbr.rel (0) target = $region21
    $region20: #{cnn_forward.1} parent=1 // pred_region
      _
    $region21: #{cnn_forward.1} parent=1 // pred_fallthru
      _
    // Predicated region
    $region22: #{cnn_forward.1} parent=1 // pred_check
      _
    $region23: #{cnn_forward.1} parent=1 // pred_check_branch
      %27 = sbr.rel (0) target = $region25
    $region24: #{cnn_forward.1} parent=1 // pred_region
      _
    $region25: #{cnn_forward.1} parent=1 // pred_fallthru
      _
    // Predicated region
    $region26: #{cnn_forward.1} parent=1 // pred_check
      _
    $region27: #{cnn_forward.1} parent=1 // pred_check_branch
      %29 = sbr.rel (0) target = $region29
    $region28: #{cnn_forward.1} parent=1 // pred_region
      _
    $region29: #{cnn_forward.1} parent=1 // pred_fallthru
      _
    // Predicated region
    $region30: #{cnn_forward.1} parent=1 // pred_check
      _
    $region31: #{cnn_forward.1} parent=1 // pred_check_branch
      %31 = sbr.rel (0) target = $region33
    $region32: #{cnn_forward.1} parent=1 // pred_region
      _
    $region33: #{cnn_forward.1} parent=1 // pred_fallthru
      _
    // Predicated region
    $region34: #{cnn_forward.1} parent=1 // pred_check
      _
    $region35: #{cnn_forward.1} parent=1 // pred_check_branch
      %33 = sbr.rel (0) target = $region37
    $region36: #{cnn_forward.1} parent=1 // pred_region
      _
    $region37: #{cnn_forward.1} parent=1 // pred_fallthru
      _
    // Predicated region
    $region38: #{cnn_forward.1} parent=1 // pred_check
      _
    $region39: #{cnn_forward.1} parent=1 // pred_check_branch
      %35 = sbr.rel (0) target = $region41
    $region40: #{cnn_forward.1} parent=1 // pred_region
      _
    $region41: #{cnn_forward.1} parent=1 // pred_fallthru
      _
    %v37 = vld [vmem:[%s0] sm:$0xf]
    %v38 = vld [vmem:[%s0 + $0x4] sm:$0xf]
    %v39 = vld [vmem:[%s0 + $0x8] sm:$0xf]
    %v40 = vld [vmem:[%s0 + $0xc] sm:$0xf]
    %v41 = vld [vmem:[%s0 + $0x10] sm:$0xf]
    %v42 = vld [vmem:[%s0 + $0x14] sm:$0xf]
    %v43 = vld [vmem:[%s0 + $0x18] sm:$0xf]
    %v44 = vld [vmem:[%s0 + $0x1c] sm:$0xf]
    %v45 = vld [vmem:[%s0 + $0x20] sm:$0xf]
    %v46 = vld [vmem:[%s0 + $0x24] sm:$0xf]
    %v47 = vld [vmem:[%s0 + $0x28] sm:$0xf]
    %v48 = vld [vmem:[%s0 + $0x2c] sm:$0xf]
    %v49 = vld [vmem:[%s0 + $0x30] sm:$0xf]
    %v50 = vld [vmem:[%s0 + $0x34] sm:$0xf]
    %v51 = vld [vmem:[%s0 + $0x38] sm:$0xf]
    %v52 = vld [vmem:[%s0 + $0x3c] sm:$0xf]
    %v53 = vld [vmem:[%s0 + $0x40] sm:$0xf]
    %v54 = vld [vmem:[%s0 + $0x44] sm:$0xf]
    %v55 = vld [vmem:[%s0 + $0x48] sm:$0xf]
    %v56 = vld [vmem:[%s0 + $0x4c] sm:$0xf]
    %v57 = vld [vmem:[%s0 + $0x50] sm:$0xf]
    %v58 = vld [vmem:[%s0 + $0x54] sm:$0xf]
    %v59 = vld [vmem:[%s0 + $0x58] sm:$0xf]
    %v60 = vld [vmem:[%s0 + $0x5c] sm:$0xf]
    %v61 = vld [vmem:[%s0 + $0x60] sm:$0xf]
    %v62 = vld [vmem:[%s0 + $0x64] sm:$0xf]
    %v63 = vld [vmem:[%s0 + $0x68] sm:$0xf]
    %v64 = vld [vmem:[%s0 + $0x6c] sm:$0xf]
    %v65 = vld [vmem:[%s0 + $0x70] sm:$0xf]
    %v66 = vld [vmem:[%s0 + $0x74] sm:$0xf]
    %v67 = vld [vmem:[%s0 + $0x78] sm:$0xf]
    %v68 = vld [vmem:[%s0 + $0x7c] sm:$0xf]
    %v69 = vld [vmem:[%s0 + $0x80] sm:$0xf]
    %v70 = vld [vmem:[%s0 + $0x84] sm:$0xf]
    %v71 = vld [vmem:[%s0 + $0x88] sm:$0xf]
    %v72 = vld [vmem:[%s0 + $0x8c] sm:$0xf]
    %v73 = vld [vmem:[%s0 + $0x90] sm:$0xf]
    %v74 = vld [vmem:[%s0 + $0x94] sm:$0xf]
    %v75 = vld [vmem:[%s0 + $0x98] sm:$0xf]
    %v76 = vld [vmem:[%s0 + $0x9c] sm:$0xf]
    %v77 = vld [vmem:[%s0 + $0xa0] sm:$0xf]
    %v78 = vld [vmem:[%s0 + $0xa4] sm:$0xf]
    %v79 = vld [vmem:[%s0 + $0xa8] sm:$0xf]
    %v80 = vld [vmem:[%s0 + $0xac] sm:$0xf]
    %v81 = vld [vmem:[%s0 + $0xb0] sm:$0xf]
    %v82 = vld [vmem:[%s0 + $0xb4] sm:$0xf]
    %v83 = vld [vmem:[%s0 + $0xb8] sm:$0xf]
    %v84 = vld [vmem:[%s0 + $0xbc] sm:$0xf]
    %v85 = vld [vmem:[%s0 + $0xc0] sm:$0xf]
    %v86 = vld [vmem:[%s0 + $0xc4] sm:$0xf]
    %v87 = vld [vmem:[%s0 + $0xc8] sm:$0xf]
    %v88 = vld [vmem:[%s0 + $0xcc] sm:$0xf]
    %v89 = vld [vmem:[%s0 + $0xd0] sm:$0xf]
    %v90 = vld [vmem:[%s0 + $0xd4] sm:$0xf]
    %v91 = vld [vmem:[%s0 + $0xd8] sm:$0xf]
    %v92 = vld [vmem:[%s0 + $0xdc] sm:$0xf]
    %v93 = vld [vmem:[%s0 + $0xe0] sm:$0xf]
    %v94 = vld [vmem:[%s0 + $0xe4] sm:$0xf]
    %v95 = vld [vmem:[%s0 + $0xe8] sm:$0xf]
    %v96 = vld [vmem:[%s0 + $0xec] sm:$0xf]
    %v97 = vld [vmem:[%s0 + $0xf0] sm:$0xf]
    %v98 = vld [vmem:[%s0 + $0xf4] sm:$0xf]
    %v99 = vld [vmem:[%s0 + $0xf8] sm:$0xf]
    %v100 = vld [vmem:[%s0 + $0xfc] sm:$0xf]
    %v101 = vld [vmem:[%s0 + $0x100] sm:$0xf]
    %v102 = vld [vmem:[%s0 + $0x104] sm:$0xf]
    %v103 = vld [vmem:[%s0 + $0x108] sm:$0xf]
    %v104 = vld [vmem:[%s0 + $0x10c] sm:$0xf]
    %v105 = vld [vmem:[%s0 + $0x110] sm:$0xf]
    %v106 = vld [vmem:[%s0 + $0x114] sm:$0xf]
    %v107 = vld [vmem:[%s0 + $0x118] sm:$0xf]
    %v108 = vld [vmem:[%s0 + $0x11c] sm:$0xf]
    %v109 = vld [vmem:[%s0 + $0x120] sm:$0xf]
    %v110 = vld [vmem:[%s0 + $0x124] sm:$0xf]
    %v111 = vld [vmem:[%s0 + $0x128] sm:$0xf]
    %v112 = vld [vmem:[%s0 + $0x12c] sm:$0xf]
    %v113 = vld [vmem:[%s0 + $0x130] sm:$0xf]
    %v114 = vld [vmem:[%s0 + $0x134] sm:$0xf]
    %v115 = vld [vmem:[%s0 + $0x138] sm:$0xf]
    %v116 = vld [vmem:[%s0 + $0x13c] sm:$0xf]
    %v117 = vld [vmem:[%s0 + $0x140] sm:$0xf]
    %v118 = vld [vmem:[%s0 + $0x144] sm:$0xf]
    %v119 = vld [vmem:[%s0 + $0x148] sm:$0xf]
    %v120 = vld [vmem:[%s0 + $0x14c] sm:$0xf]
    %v121 = vld [vmem:[%s0 + $0x150] sm:$0xf]
    %v122 = vld [vmem:[%s0 + $0x154] sm:$0xf]
    %v123 = vld [vmem:[%s0 + $0x158] sm:$0xf]
    %v124 = vld [vmem:[%s0 + $0x15c] sm:$0xf]
    %v125 = vld [vmem:[%s0 + $0x160] sm:$0xf]
    %v126 = vld [vmem:[%s0 + $0x164] sm:$0xf]
    %v127 = vld [vmem:[%s0 + $0x168] sm:$0xf]
    %v128 = vld [vmem:[%s0 + $0x16c] sm:$0xf]
    %v129 = vld [vmem:[%s0 + $0x170] sm:$0xf]
    %v130 = vld [vmem:[%s0 + $0x174] sm:$0xf]
    %v131 = vld [vmem:[%s0 + $0x178] sm:$0xf]
    %v132 = vld [vmem:[%s0 + $0x17c] sm:$0xf]
    %v133 = vld [vmem:[%s0 + $0x180] sm:$0xf]
    %v134 = vld [vmem:[%s0 + $0x184] sm:$0xf]
    %v135 = vld [vmem:[%s0 + $0x188] sm:$0xf]
    %v136 = vld [vmem:[%s0 + $0x18c] sm:$0xf]
    %v137 = vld [vmem:[%s0 + $0x190] sm:$0xf]
    %v138 = vld [vmem:[%s0 + $0x194] sm:$0xf]
    %v139 = vld [vmem:[%s0 + $0x198] sm:$0xf]
    %v140 = vld [vmem:[%s0 + $0x19c] sm:$0xf]
    %v141 = vld [vmem:[%s0 + $0x1a0] sm:$0xf]
    %v142 = vld [vmem:[%s0 + $0x1a4] sm:$0xf]
    %v143 = vld [vmem:[%s0 + $0x1a8] sm:$0xf]
    %v144 = vld [vmem:[%s0 + $0x1ac] sm:$0xf]
    %v145 = vld [vmem:[%s0 + $0x1b0] sm:$0xf]
    %v146 = vld [vmem:[%s0 + $0x1b4] sm:$0xf]
    %v147 = vld [vmem:[%s0 + $0x1b8] sm:$0xf]
    %v148 = vld [vmem:[%s0 + $0x1bc] sm:$0xf]
    %v149 = vld [vmem:[%s0 + $0x1c0] sm:$0xf]
    %v150 = vld [vmem:[%s0 + $0x1c4] sm:$0xf]
    %v151 = vld [vmem:[%s0 + $0x1c8] sm:$0xf]
    %v152 = vld [vmem:[%s0 + $0x1cc] sm:$0xf]
    %v153 = vld [vmem:[%s0 + $0x1d0] sm:$0xf]
    %v154 = vld [vmem:[%s0 + $0x1d4] sm:$0xf]
    %v155 = vld [vmem:[%s0 + $0x1d8] sm:$0xf]
    %v156 = vld [vmem:[%s0 + $0x1dc] sm:$0xf]
    %v157 = vld [vmem:[%s0 + $0x1e0] sm:$0xf]
    %v158 = vld [vmem:[%s1] sm:$0xf]
    %v159 = vld [vmem:[%s1 + $0x4] sm:$0xf]
    %v160 = vld [vmem:[%s1 + $0x8] sm:$0xf]
    %v161 = vld [vmem:[%s1 + $0xc] sm:$0xf]
    %v162 = vld [vmem:[%s1 + $0x10] sm:$0xf]
    %v163 = vld [vmem:[%s1 + $0x14] sm:$0xf]
    %v164 = vld [vmem:[%s1 + $0x18] sm:$0xf]
    %v165 = vld [vmem:[%s1 + $0x1c] sm:$0xf]
    %v166 = vld [vmem:[%s1 + $0x20] sm:$0xf]
    %v167 = vld [vmem:[%s1 + $0x24] sm:$0x3]
    %v168 = vld [vmem:[%s2] sm:$0x1]
    %v169 = vlaneseq
    %v170 = vshrl.u32 %v169, 7
    %v171 = vsub.s32 0, %v170
    %v172 = vrot.slane %v168, %v171
    %v294 = vunpack.c.l.b16 %v37
    %v295 = vunpack.c.l.b16 %v38
    %v296 = vunpack.c.l.b16 %v39
    %v297 = vunpack.c.l.b16 %v40
    %v298 = vunpack.c.l.b16 %v41
    %v299 = vunpack.c.l.b16 %v42
    %v300 = vunpack.c.l.b16 %v43
    %v301 = vunpack.c.l.b16 %v44
    %v302 = vunpack.c.l.b16 %v45
    %v303 = vunpack.c.l.b16 %v46
    %v304 = vunpack.c.l.b16 %v47
    %v305 = vunpack.c.l.b16 %v48
    %v306 = vunpack.c.l.b16 %v49
    %v307 = vunpack.c.l.b16 %v50
    %v308 = vunpack.c.l.b16 %v51
    %v309 = vunpack.c.l.b16 %v52
    %v310 = vunpack.c.l.b16 %v53
    %v311 = vunpack.c.l.b16 %v54
    %v312 = vunpack.c.l.b16 %v55
    %v313 = vunpack.c.l.b16 %v56
    %v314 = vunpack.c.l.b16 %v57
    %v315 = vunpack.c.l.b16 %v58
    %v316 = vunpack.c.l.b16 %v59
    %v317 = vunpack.c.l.b16 %v60
    %v318 = vunpack.c.l.b16 %v61
    %v319 = vunpack.c.l.b16 %v62
    %v320 = vunpack.c.l.b16 %v63
    %v321 = vunpack.c.l.b16 %v64
    %v322 = vunpack.c.l.b16 %v65
    %v323 = vunpack.c.l.b16 %v66
    %v324 = vunpack.c.l.b16 %v67
    %v325 = vunpack.c.l.b16 %v68
    %v326 = vunpack.c.l.b16 %v69
    %v327 = vunpack.c.l.b16 %v70
    %v328 = vunpack.c.l.b16 %v71
    %v329 = vunpack.c.l.b16 %v72
    %v330 = vunpack.c.l.b16 %v73
    %v331 = vunpack.c.l.b16 %v74
    %v332 = vunpack.c.l.b16 %v75
    %v333 = vunpack.c.l.b16 %v76
    %v334 = vunpack.c.l.b16 %v77
    %v335 = vunpack.c.l.b16 %v78
    %v336 = vunpack.c.l.b16 %v79
    %v337 = vunpack.c.l.b16 %v80
    %v338 = vunpack.c.l.b16 %v81
    %v339 = vunpack.c.l.b16 %v82
    %v340 = vunpack.c.l.b16 %v83
    %v341 = vunpack.c.l.b16 %v84
    %v342 = vunpack.c.l.b16 %v85
    %v343 = vunpack.c.l.b16 %v86
    %v344 = vunpack.c.l.b16 %v87
    %v345 = vunpack.c.l.b16 %v88
    %v346 = vunpack.c.l.b16 %v89
    %v347 = vunpack.c.l.b16 %v90
    %v348 = vunpack.c.l.b16 %v91
    %v349 = vunpack.c.l.b16 %v92
    %v350 = vunpack.c.l.b16 %v93
    %v351 = vunpack.c.l.b16 %v94
    %v352 = vunpack.c.l.b16 %v95
    %v353 = vunpack.c.l.b16 %v96
    %v354 = vunpack.c.l.b16 %v97
    %v355 = vunpack.c.l.b16 %v98
    %v356 = vunpack.c.l.b16 %v99
    %v357 = vunpack.c.l.b16 %v100
    %v358 = vunpack.c.l.b16 %v101
    %v359 = vunpack.c.l.b16 %v102
    %v360 = vunpack.c.l.b16 %v103
    %v361 = vunpack.c.l.b16 %v104
    %v362 = vunpack.c.l.b16 %v105
    %v363 = vunpack.c.l.b16 %v106
    %v364 = vunpack.c.l.b16 %v107
    %v365 = vunpack.c.l.b16 %v108
    %v366 = vunpack.c.l.b16 %v109
    %v367 = vunpack.c.l.b16 %v110
    %v368 = vunpack.c.l.b16 %v111
    %v369 = vunpack.c.l.b16 %v112
    %v370 = vunpack.c.l.b16 %v113
    %v371 = vunpack.c.l.b16 %v114
    %v372 = vunpack.c.l.b16 %v115
    %v373 = vunpack.c.l.b16 %v116
    %v374 = vunpack.c.l.b16 %v117
    %v375 = vunpack.c.l.b16 %v118
    %v376 = vunpack.c.l.b16 %v119
    %v377 = vunpack.c.l.b16 %v120
    %v378 = vunpack.c.l.b16 %v121
    %v379 = vunpack.c.l.b16 %v122
    %v380 = vunpack.c.l.b16 %v123
    %v381 = vunpack.c.l.b16 %v124
    %v382 = vunpack.c.l.b16 %v125
    %v383 = vunpack.c.l.b16 %v126
    %v384 = vunpack.c.l.b16 %v127
    %v385 = vunpack.c.l.b16 %v128
    %v386 = vunpack.c.l.b16 %v129
    %v387 = vunpack.c.l.b16 %v130
    %v388 = vunpack.c.l.b16 %v131
    %v389 = vunpack.c.l.b16 %v132
    %v390 = vunpack.c.l.b16 %v133
    %v391 = vunpack.c.l.b16 %v134
    %v392 = vunpack.c.l.b16 %v135
    %v393 = vunpack.c.l.b16 %v136
    %v394 = vunpack.c.l.b16 %v137
    %v395 = vunpack.c.l.b16 %v138
    %v396 = vunpack.c.l.b16 %v139
    %v397 = vunpack.c.l.b16 %v140
    %v398 = vunpack.c.l.b16 %v141
    %v399 = vunpack.c.l.b16 %v142
    %v400 = vunpack.c.l.b16 %v143
    %v401 = vunpack.c.l.b16 %v144
    %v402 = vunpack.c.l.b16 %v145
    %v403 = vunpack.c.l.b16 %v146
    %v404 = vunpack.c.l.b16 %v147
    %v405 = vunpack.c.l.b16 %v148
    %v406 = vunpack.c.l.b16 %v149
    %v407 = vunpack.c.l.b16 %v150
    %v408 = vunpack.c.l.b16 %v151
    %v409 = vunpack.c.l.b16 %v152
    %v410 = vunpack.c.l.b16 %v153
    %v411 = vunpack.c.l.b16 %v154
    %v412 = vunpack.c.l.b16 %v155
    %v413 = vunpack.c.l.b16 %v156
    %v414 = vunpack.c.l.b16 %v157
    %v415 = vpack.c.b16 %v295, %v294
    %v416 = vpack.c.b16 %v297, %v296
    %v417 = vpack.c.b16 %v299, %v298
    %v418 = vpack.c.b16 %v301, %v300
    %v419 = vpack.c.b16 %v303, %v302
    %v420 = vpack.c.b16 %v305, %v304
    %v421 = vpack.c.b16 %v307, %v306
    %v422 = vpack.c.b16 %v309, %v308
    %v423 = vpack.c.b16 %v311, %v310
    %v424 = vpack.c.b16 %v313, %v312
    %v425 = vpack.c.b16 %v315, %v314
    %v426 = vpack.c.b16 %v317, %v316
    %v427 = vpack.c.b16 %v319, %v318
    %v428 = vpack.c.b16 %v321, %v320
    %v429 = vpack.c.b16 %v323, %v322
    %v430 = vpack.c.b16 %v325, %v324
    %v431 = vpack.c.b16 %v327, %v326
    %v432 = vpack.c.b16 %v329, %v328
    %v433 = vpack.c.b16 %v331, %v330
    %v434 = vpack.c.b16 %v333, %v332
    %v435 = vpack.c.b16 %v335, %v334
    %v436 = vpack.c.b16 %v337, %v336
    %v437 = vpack.c.b16 %v339, %v338
    %v438 = vpack.c.b16 %v341, %v340
    %v439 = vpack.c.b16 %v343, %v342
    %v440 = vpack.c.b16 %v345, %v344
    %v441 = vpack.c.b16 %v347, %v346
    %v442 = vpack.c.b16 %v349, %v348
    %v443 = vpack.c.b16 %v351, %v350
    %v444 = vpack.c.b16 %v353, %v352
    %v445 = vpack.c.b16 %v355, %v354
    %v446 = vpack.c.b16 %v357, %v356
    %v447 = vpack.c.b16 %v359, %v358
    %v448 = vpack.c.b16 %v361, %v360
    %v449 = vpack.c.b16 %v363, %v362
    %v450 = vpack.c.b16 %v365, %v364
    %v451 = vpack.c.b16 %v367, %v366
    %v452 = vpack.c.b16 %v369, %v368
    %v453 = vpack.c.b16 %v371, %v370
    %v454 = vpack.c.b16 %v373, %v372
    %v455 = vpack.c.b16 %v375, %v374
    %v456 = vpack.c.b16 %v377, %v376
    %v457 = vpack.c.b16 %v379, %v378
    %v458 = vpack.c.b16 %v381, %v380
    %v459 = vpack.c.b16 %v383, %v382
    %v460 = vpack.c.b16 %v385, %v384
    %v461 = vpack.c.b16 %v387, %v386
    %v462 = vpack.c.b16 %v389, %v388
    %v463 = vpack.c.b16 %v391, %v390
    %v464 = vpack.c.b16 %v393, %v392
    %v465 = vpack.c.b16 %v395, %v394
    %v466 = vpack.c.b16 %v397, %v396
    %v467 = vpack.c.b16 %v399, %v398
    %v468 = vpack.c.b16 %v401, %v400
    %v469 = vpack.c.b16 %v403, %v402
    %v470 = vpack.c.b16 %v405, %v404
    %v471 = vpack.c.b16 %v407, %v406
    %v472 = vpack.c.b16 %v409, %v408
    %v473 = vpack.c.b16 %v411, %v410
    %v474 = vpack.c.b16 %v413, %v412
    %v475 = vpack.c.b16 %v414, %v414
    %v486 = vunpack.c.l.b16 %v158
    %v487 = vunpack.c.l.b16 %v159
    %v488 = vunpack.c.l.b16 %v160
    %v489 = vunpack.c.l.b16 %v161
    %v490 = vunpack.c.l.b16 %v162
    %v491 = vunpack.c.l.b16 %v163
    %v492 = vunpack.c.l.b16 %v164
    %v493 = vunpack.c.l.b16 %v165
    %v494 = vunpack.c.l.b16 %v166
    %v495 = vunpack.c.l.b16 %v167
    %v496 = vpack.c.b16 %v487, %v486
    %v497 = vpack.c.b16 %v489, %v488
    %v498 = vpack.c.b16 %v491, %v490
    %v499 = vpack.c.b16 %v493, %v492
    %v500 = vpack.c.b16 %v495, %v494
    %vm505 = vcmask 613376
    %v507 = vsel %vm505, %v415, 0
    %v510 = vsel %vm505, %v416, 0
    %v513 = vsel %vm505, %v417, 0
    %v516 = vsel %vm505, %v418, 0
    %v519 = vsel %vm505, %v419, 0
    %v522 = vsel %vm505, %v420, 0
    %v525 = vsel %vm505, %v421, 0
    %v528 = vsel %vm505, %v422, 0
    %v531 = vsel %vm505, %v423, 0
    %v534 = vsel %vm505, %v424, 0
    %v537 = vsel %vm505, %v425, 0
    %v540 = vsel %vm505, %v426, 0
    %v543 = vsel %vm505, %v427, 0
    %v546 = vsel %vm505, %v428, 0
    %v549 = vsel %vm505, %v429, 0
    %v552 = vsel %vm505, %v430, 0
    %v555 = vsel %vm505, %v431, 0
    %v558 = vsel %vm505, %v432, 0
    %v561 = vsel %vm505, %v433, 0
    %v564 = vsel %vm505, %v434, 0
    %v567 = vsel %vm505, %v435, 0
    %v570 = vsel %vm505, %v436, 0
    %v573 = vsel %vm505, %v437, 0
    %v576 = vsel %vm505, %v438, 0
    %v579 = vsel %vm505, %v439, 0
    %v582 = vsel %vm505, %v440, 0
    %v585 = vsel %vm505, %v441, 0
    %v588 = vsel %vm505, %v442, 0
    %v591 = vsel %vm505, %v443, 0
    %v594 = vsel %vm505, %v444, 0
    %v597 = vsel %vm505, %v445, 0
    %v600 = vsel %vm505, %v446, 0
    %v603 = vsel %vm505, %v447, 0
    %v606 = vsel %vm505, %v448, 0
    %v609 = vsel %vm505, %v449, 0
    %v612 = vsel %vm505, %v450, 0
    %v615 = vsel %vm505, %v451, 0
    %v618 = vsel %vm505, %v452, 0
    %v621 = vsel %vm505, %v453, 0
    %v624 = vsel %vm505, %v454, 0
    %v627 = vsel %vm505, %v455, 0
    %v630 = vsel %vm505, %v456, 0
    %v633 = vsel %vm505, %v457, 0
    %v636 = vsel %vm505, %v458, 0
    %v639 = vsel %vm505, %v459, 0
    %v642 = vsel %vm505, %v460, 0
    %v645 = vsel %vm505, %v461, 0
    %v648 = vsel %vm505, %v462, 0
    %v651 = vsel %vm505, %v463, 0
    %v654 = vsel %vm505, %v464, 0
    %v657 = vsel %vm505, %v465, 0
    %v660 = vsel %vm505, %v466, 0
    %v663 = vsel %vm505, %v467, 0
    %v666 = vsel %vm505, %v468, 0
    %v669 = vsel %vm505, %v469, 0
    %v672 = vsel %vm505, %v470, 0
    %v675 = vsel %vm505, %v471, 0
    %v678 = vsel %vm505, %v472, 0
    %v681 = vsel %vm505, %v473, 0
    %v684 = vsel %vm505, %v474, 0
    %v687 = vsel %vm505, %v475, 0
    %vm689 = vcmask 1044480
    %vm690 = vcmask 1045504
    %v691 = vsel %vm689, 4294967295, 65535
    %v692 = vsel %vm690, %v691, 0
    %v694 = vand.u32 %v500, %v692
    %696 = vmatprep.subr.bf16.mxu0 0
    %697 = vmatpush1.bf16.msra.mxu0 0
    %698 = vmatprep.subr.bf16.mxu0 0
    %699 = vmatpush1.bf16.msra.mxu0 0
    %700 = vmatprep.subr.bf16.mxu0 0
    %701 = vmatpush1.bf16.msra.mxu0 0
    %702 = vmatprep.subr.bf16.mxu0 0
    %703 = vmatpush1.bf16.msra.mxu0 %v694
    %704 = vmatprep.subr.bf16.mxu0 0
    %705 = vmatpush1.bf16.msra.mxu0 %v499
    %706 = vmatprep.subr.bf16.mxu0 0
    %707 = vmatpush1.bf16.msra.mxu0 %v498
    %708 = vmatprep.subr.bf16.mxu0 0
    %709 = vmatpush1.bf16.msra.mxu0 %v497
    %710 = vmatprep.subr.bf16.mxu0 0
    %711 = vmatpush1.bf16.msra.mxu0 %v496
    %712 = vmatprep.subr.bf16.mxu0 0
    %713 = vmatpush2.bf16.msra.mxu0 0
    %714 = vmatprep.subr.bf16.mxu0 0
    %715 = vmatpush2.bf16.msra.mxu0 0
    %716 = vmatprep.subr.bf16.mxu0 0
    %717 = vmatpush2.bf16.msra.mxu0 0
    %718 = vmatprep.subr.bf16.mxu0 0
    %719 = vmatpush2.bf16.msra.mxu0 0
    %720 = vmatprep.subr.bf16.mxu0 0
    %721 = vmatpush2.bf16.msra.mxu0 0
    %722 = vmatprep.subr.bf16.mxu0 0
    %723 = vmatpush2.bf16.msra.mxu0 0
    %724 = vmatprep.subr.bf16.mxu0 0
    %725 = vmatpush2.bf16.msra.mxu0 0
    %726 = vmatprep.subr.bf16.mxu0 0
    %727 = vmatpush2.bf16.msra.mxu0 0
    %728 = vmatprep.mubr.bf16.mxu0 0
    %729 = vmatmul.mubr.bf16.gmra.mxu0 %v507
    %v730 = vpop.f32.mrf.mxu0
    %v731 = vadd.f32 %v172, %v730
    %v732 = vpop.f32.mrf.mxu0
    %v733 = vpop.f32.mrf.mxu0
    %v734 = vadd.f32 %v172, %v733
    %v735 = vpop.f32.mrf.mxu0
    %736 = vmatprep.mubr.bf16.mxu0 0
    %737 = vmatmul.mubr.bf16.gmra.mxu0 %v510
    %v738 = vpop.f32.mrf.mxu0
    %v739 = vadd.f32 %v172, %v738
    %v740 = vpop.f32.mrf.mxu0
    %v741 = vpop.f32.mrf.mxu0
    %v742 = vadd.f32 %v172, %v741
    %v743 = vpop.f32.mrf.mxu0
    %744 = vmatprep.mubr.bf16.mxu0 0
    %745 = vmatmul.mubr.bf16.gmra.mxu0 %v513
    %v746 = vpop.f32.mrf.mxu0
    %v747 = vadd.f32 %v172, %v746
    %v748 = vpop.f32.mrf.mxu0
    %v749 = vpop.f32.mrf.mxu0
    %v750 = vadd.f32 %v172, %v749
    %v751 = vpop.f32.mrf.mxu0
    %752 = vmatprep.mubr.bf16.mxu0 0
    %753 = vmatmul.mubr.bf16.gmra.mxu0 %v516
    %v754 = vpop.f32.mrf.mxu0
    %v755 = vadd.f32 %v172, %v754
    %v756 = vpop.f32.mrf.mxu0
    %v757 = vpop.f32.mrf.mxu0
    %v758 = vadd.f32 %v172, %v757
    %v759 = vpop.f32.mrf.mxu0
    %760 = vmatprep.mubr.bf16.mxu0 0
    %761 = vmatmul.mubr.bf16.gmra.mxu0 %v519
    %v762 = vpop.f32.mrf.mxu0
    %v763 = vadd.f32 %v172, %v762
    %v764 = vpop.f32.mrf.mxu0
    %v765 = vpop.f32.mrf.mxu0
    %v766 = vadd.f32 %v172, %v765
    %v767 = vpop.f32.mrf.mxu0
    %768 = vmatprep.mubr.bf16.mxu0 0
    %769 = vmatmul.mubr.bf16.gmra.mxu0 %v522
    %v770 = vpop.f32.mrf.mxu0
    %v771 = vadd.f32 %v172, %v770
    %v772 = vpop.f32.mrf.mxu0
    %v773 = vpop.f32.mrf.mxu0
    %v774 = vadd.f32 %v172, %v773
    %v775 = vpop.f32.mrf.mxu0
    %776 = vmatprep.mubr.bf16.mxu0 0
    %777 = vmatmul.mubr.bf16.gmra.mxu0 %v525
    %v778 = vpop.f32.mrf.mxu0
    %v779 = vadd.f32 %v172, %v778
    %v780 = vpop.f32.mrf.mxu0
    %v781 = vpop.f32.mrf.mxu0
    %v782 = vadd.f32 %v172, %v781
    %v783 = vpop.f32.mrf.mxu0
    %784 = vmatprep.mubr.bf16.mxu0 0
    %785 = vmatmul.mubr.bf16.gmra.mxu0 %v528
    %v786 = vpop.f32.mrf.mxu0
    %v787 = vadd.f32 %v172, %v786
    %v788 = vpop.f32.mrf.mxu0
    %v789 = vpop.f32.mrf.mxu0
    %v790 = vadd.f32 %v172, %v789
    %v791 = vpop.f32.mrf.mxu0
    %792 = vmatprep.mubr.bf16.mxu0 0
    %793 = vmatmul.mubr.bf16.gmra.mxu0 %v531
    %v794 = vpop.f32.mrf.mxu0
    %v795 = vadd.f32 %v172, %v794
    %v796 = vpop.f32.mrf.mxu0
    %v797 = vpop.f32.mrf.mxu0
    %v798 = vadd.f32 %v172, %v797
    %v799 = vpop.f32.mrf.mxu0
    %800 = vmatprep.mubr.bf16.mxu0 0
    %801 = vmatmul.mubr.bf16.gmra.mxu0 %v534
    %v802 = vpop.f32.mrf.mxu0
    %v803 = vadd.f32 %v172, %v802
    %v804 = vpop.f32.mrf.mxu0
    %v805 = vpop.f32.mrf.mxu0
    %v806 = vadd.f32 %v172, %v805
    %v807 = vpop.f32.mrf.mxu0
    %808 = vmatprep.mubr.bf16.mxu0 0
    %809 = vmatmul.mubr.bf16.gmra.mxu0 %v537
    %v810 = vpop.f32.mrf.mxu0
    %v811 = vadd.f32 %v172, %v810
    %v812 = vpop.f32.mrf.mxu0
    %v813 = vpop.f32.mrf.mxu0
    %v814 = vadd.f32 %v172, %v813
    %v815 = vpop.f32.mrf.mxu0
    %816 = vmatprep.mubr.bf16.mxu0 0
    %817 = vmatmul.mubr.bf16.gmra.mxu0 %v540
    %v818 = vpop.f32.mrf.mxu0
    %v819 = vadd.f32 %v172, %v818
    %v820 = vpop.f32.mrf.mxu0
    %v821 = vpop.f32.mrf.mxu0
    %v822 = vadd.f32 %v172, %v821
    %v823 = vpop.f32.mrf.mxu0
    %824 = vmatprep.mubr.bf16.mxu0 0
    %825 = vmatmul.mubr.bf16.gmra.mxu0 %v543
    %v826 = vpop.f32.mrf.mxu0
    %v827 = vadd.f32 %v172, %v826
    %v828 = vpop.f32.mrf.mxu0
    %v829 = vpop.f32.mrf.mxu0
    %v830 = vadd.f32 %v172, %v829
    %v831 = vpop.f32.mrf.mxu0
    %832 = vmatprep.mubr.bf16.mxu0 0
    %833 = vmatmul.mubr.bf16.gmra.mxu0 %v546
    %v834 = vpop.f32.mrf.mxu0
    %v835 = vadd.f32 %v172, %v834
    %v836 = vpop.f32.mrf.mxu0
    %v837 = vpop.f32.mrf.mxu0
    %v838 = vadd.f32 %v172, %v837
    %v839 = vpop.f32.mrf.mxu0
    %840 = vmatprep.mubr.bf16.mxu0 0
    %841 = vmatmul.mubr.bf16.gmra.mxu0 %v549
    %v842 = vpop.f32.mrf.mxu0
    %v843 = vadd.f32 %v172, %v842
    %v844 = vpop.f32.mrf.mxu0
    %v845 = vpop.f32.mrf.mxu0
    %v846 = vadd.f32 %v172, %v845
    %v847 = vpop.f32.mrf.mxu0
    %848 = vmatprep.mubr.bf16.mxu0 0
    %849 = vmatmul.mubr.bf16.gmra.mxu0 %v552
    %v850 = vpop.f32.mrf.mxu0
    %v851 = vadd.f32 %v172, %v850
    %v852 = vpop.f32.mrf.mxu0
    %v853 = vpop.f32.mrf.mxu0
    %v854 = vadd.f32 %v172, %v853
    %v855 = vpop.f32.mrf.mxu0
    %856 = vmatprep.mubr.bf16.mxu0 0
    %857 = vmatmul.mubr.bf16.gmra.mxu0 %v555
    %v858 = vpop.f32.mrf.mxu0
    %v859 = vadd.f32 %v172, %v858
    %v860 = vpop.f32.mrf.mxu0
    %v861 = vpop.f32.mrf.mxu0
    %v862 = vadd.f32 %v172, %v861
    %v863 = vpop.f32.mrf.mxu0
    %864 = vmatprep.mubr.bf16.mxu0 0
    %865 = vmatmul.mubr.bf16.gmra.mxu0 %v558
    %v866 = vpop.f32.mrf.mxu0
    %v867 = vadd.f32 %v172, %v866
    %v868 = vpop.f32.mrf.mxu0
    %v869 = vpop.f32.mrf.mxu0
    %v870 = vadd.f32 %v172, %v869
    %v871 = vpop.f32.mrf.mxu0
    %872 = vmatprep.mubr.bf16.mxu0 0
    %873 = vmatmul.mubr.bf16.gmra.mxu0 %v561
    %v874 = vpop.f32.mrf.mxu0
    %v875 = vadd.f32 %v172, %v874
    %v876 = vpop.f32.mrf.mxu0
    %v877 = vpop.f32.mrf.mxu0
    %v878 = vadd.f32 %v172, %v877
    %v879 = vpop.f32.mrf.mxu0
    %880 = vmatprep.mubr.bf16.mxu0 0
    %881 = vmatmul.mubr.bf16.gmra.mxu0 %v564
    %v882 = vpop.f32.mrf.mxu0
    %v883 = vadd.f32 %v172, %v882
    %v884 = vpop.f32.mrf.mxu0
    %v885 = vpop.f32.mrf.mxu0
    %v886 = vadd.f32 %v172, %v885
    %v887 = vpop.f32.mrf.mxu0
    %888 = vmatprep.mubr.bf16.mxu0 0
    %889 = vmatmul.mubr.bf16.gmra.mxu0 %v567
    %v890 = vpop.f32.mrf.mxu0
    %v891 = vadd.f32 %v172, %v890
    %v892 = vpop.f32.mrf.mxu0
    %v893 = vpop.f32.mrf.mxu0
    %v894 = vadd.f32 %v172, %v893
    %v895 = vpop.f32.mrf.mxu0
    %896 = vmatprep.mubr.bf16.mxu0 0
    %897 = vmatmul.mubr.bf16.gmra.mxu0 %v570
    %v898 = vpop.f32.mrf.mxu0
    %v899 = vadd.f32 %v172, %v898
    %v900 = vpop.f32.mrf.mxu0
    %v901 = vpop.f32.mrf.mxu0
    %v902 = vadd.f32 %v172, %v901
    %v903 = vpop.f32.mrf.mxu0
    %904 = vmatprep.mubr.bf16.mxu0 0
    %905 = vmatmul.mubr.bf16.gmra.mxu0 %v573
    %v906 = vpop.f32.mrf.mxu0
    %v907 = vadd.f32 %v172, %v906
    %v908 = vpop.f32.mrf.mxu0
    %v909 = vpop.f32.mrf.mxu0
    %v910 = vadd.f32 %v172, %v909
    %v911 = vpop.f32.mrf.mxu0
    %912 = vmatprep.mubr.bf16.mxu0 0
    %913 = vmatmul.mubr.bf16.gmra.mxu0 %v576
    %v914 = vpop.f32.mrf.mxu0
    %v915 = vadd.f32 %v172, %v914
    %v916 = vpop.f32.mrf.mxu0
    %v917 = vpop.f32.mrf.mxu0
    %v918 = vadd.f32 %v172, %v917
    %v919 = vpop.f32.mrf.mxu0
    %920 = vmatprep.mubr.bf16.mxu0 0
    %921 = vmatmul.mubr.bf16.gmra.mxu0 %v579
    %v922 = vpop.f32.mrf.mxu0
    %v923 = vadd.f32 %v172, %v922
    %v924 = vpop.f32.mrf.mxu0
    %v925 = vpop.f32.mrf.mxu0
    %v926 = vadd.f32 %v172, %v925
    %v927 = vpop.f32.mrf.mxu0
    %928 = vmatprep.mubr.bf16.mxu0 0
    %929 = vmatmul.mubr.bf16.gmra.mxu0 %v582
    %v930 = vpop.f32.mrf.mxu0
    %v931 = vadd.f32 %v172, %v930
    %v932 = vpop.f32.mrf.mxu0
    %v933 = vpop.f32.mrf.mxu0
    %v934 = vadd.f32 %v172, %v933
    %v935 = vpop.f32.mrf.mxu0
    %936 = vmatprep.mubr.bf16.mxu0 0
    %937 = vmatmul.mubr.bf16.gmra.mxu0 %v585
    %v938 = vpop.f32.mrf.mxu0
    %v939 = vadd.f32 %v172, %v938
    %v940 = vpop.f32.mrf.mxu0
    %v941 = vpop.f32.mrf.mxu0
    %v942 = vadd.f32 %v172, %v941
    %v943 = vpop.f32.mrf.mxu0
    %944 = vmatprep.mubr.bf16.mxu0 0
    %945 = vmatmul.mubr.bf16.gmra.mxu0 %v588
    %v946 = vpop.f32.mrf.mxu0
    %v947 = vadd.f32 %v172, %v946
    %v948 = vpop.f32.mrf.mxu0
    %v949 = vpop.f32.mrf.mxu0
    %v950 = vadd.f32 %v172, %v949
    %v951 = vpop.f32.mrf.mxu0
    %952 = vmatprep.mubr.bf16.mxu0 0
    %953 = vmatmul.mubr.bf16.gmra.mxu0 %v591
    %v954 = vpop.f32.mrf.mxu0
    %v955 = vadd.f32 %v172, %v954
    %v956 = vpop.f32.mrf.mxu0
    %v957 = vpop.f32.mrf.mxu0
    %v958 = vadd.f32 %v172, %v957
    %v959 = vpop.f32.mrf.mxu0
    %960 = vmatprep.mubr.bf16.mxu0 0
    %961 = vmatmul.mubr.bf16.gmra.mxu0 %v594
    %v962 = vpop.f32.mrf.mxu0
    %v963 = vadd.f32 %v172, %v962
    %v964 = vpop.f32.mrf.mxu0
    %v965 = vpop.f32.mrf.mxu0
    %v966 = vadd.f32 %v172, %v965
    %v967 = vpop.f32.mrf.mxu0
    %968 = vmatprep.mubr.bf16.mxu0 0
    %969 = vmatmul.mubr.bf16.gmra.mxu0 %v597
    %v970 = vpop.f32.mrf.mxu0
    %v971 = vadd.f32 %v172, %v970
    %v972 = vpop.f32.mrf.mxu0
    %v973 = vpop.f32.mrf.mxu0
    %v974 = vadd.f32 %v172, %v973
    %v975 = vpop.f32.mrf.mxu0
    %976 = vmatprep.mubr.bf16.mxu0 0
    %977 = vmatmul.mubr.bf16.gmra.mxu0 %v600
    %v978 = vpop.f32.mrf.mxu0
    %v979 = vadd.f32 %v172, %v978
    %v980 = vpop.f32.mrf.mxu0
    %v981 = vpop.f32.mrf.mxu0
    %v982 = vadd.f32 %v172, %v981
    %v983 = vpop.f32.mrf.mxu0
    %984 = vmatprep.mubr.bf16.mxu0 0
    %985 = vmatmul.mubr.bf16.gmra.mxu0 %v603
    %v986 = vpop.f32.mrf.mxu0
    %v987 = vadd.f32 %v172, %v986
    %v988 = vpop.f32.mrf.mxu0
    %v989 = vpop.f32.mrf.mxu0
    %v990 = vadd.f32 %v172, %v989
    %v991 = vpop.f32.mrf.mxu0
    %992 = vmatprep.mubr.bf16.mxu0 0
    %993 = vmatmul.mubr.bf16.gmra.mxu0 %v606
    %v994 = vpop.f32.mrf.mxu0
    %v995 = vadd.f32 %v172, %v994
    %v996 = vpop.f32.mrf.mxu0
    %v997 = vpop.f32.mrf.mxu0
    %v998 = vadd.f32 %v172, %v997
    %v999 = vpop.f32.mrf.mxu0
    %1000 = vmatprep.mubr.bf16.mxu0 0
    %1001 = vmatmul.mubr.bf16.gmra.mxu0 %v609
    %v1002 = vpop.f32.mrf.mxu0
    %v1003 = vadd.f32 %v172, %v1002
    %v1004 = vpop.f32.mrf.mxu0
    %v1005 = vpop.f32.mrf.mxu0
    %v1006 = vadd.f32 %v172, %v1005
    %v1007 = vpop.f32.mrf.mxu0
    %1008 = vmatprep.mubr.bf16.mxu0 0
    %1009 = vmatmul.mubr.bf16.gmra.mxu0 %v612
    %v1010 = vpop.f32.mrf.mxu0
    %v1011 = vadd.f32 %v172, %v1010
    %v1012 = vpop.f32.mrf.mxu0
    %v1013 = vpop.f32.mrf.mxu0
    %v1014 = vadd.f32 %v172, %v1013
    %v1015 = vpop.f32.mrf.mxu0
    %1016 = vmatprep.mubr.bf16.mxu0 0
    %1017 = vmatmul.mubr.bf16.gmra.mxu0 %v615
    %v1018 = vpop.f32.mrf.mxu0
    %v1019 = vadd.f32 %v172, %v1018
    %v1020 = vpop.f32.mrf.mxu0
    %v1021 = vpop.f32.mrf.mxu0
    %v1022 = vadd.f32 %v172, %v1021
    %v1023 = vpop.f32.mrf.mxu0
    %1024 = vmatprep.mubr.bf16.mxu0 0
    %1025 = vmatmul.mubr.bf16.gmra.mxu0 %v618
    %v1026 = vpop.f32.mrf.mxu0
    %v1027 = vadd.f32 %v172, %v1026
    %v1028 = vpop.f32.mrf.mxu0
    %v1029 = vpop.f32.mrf.mxu0
    %v1030 = vadd.f32 %v172, %v1029
    %v1031 = vpop.f32.mrf.mxu0
    %1032 = vmatprep.mubr.bf16.mxu0 0
    %1033 = vmatmul.mubr.bf16.gmra.mxu0 %v621
    %v1034 = vpop.f32.mrf.mxu0
    %v1035 = vadd.f32 %v172, %v1034
    %v1036 = vpop.f32.mrf.mxu0
    %v1037 = vpop.f32.mrf.mxu0
    %v1038 = vadd.f32 %v172, %v1037
    %v1039 = vpop.f32.mrf.mxu0
    %1040 = vmatprep.mubr.bf16.mxu0 0
    %1041 = vmatmul.mubr.bf16.gmra.mxu0 %v624
    %v1042 = vpop.f32.mrf.mxu0
    %v1043 = vadd.f32 %v172, %v1042
    %v1044 = vpop.f32.mrf.mxu0
    %v1045 = vpop.f32.mrf.mxu0
    %v1046 = vadd.f32 %v172, %v1045
    %v1047 = vpop.f32.mrf.mxu0
    %1048 = vmatprep.mubr.bf16.mxu0 0
    %1049 = vmatmul.mubr.bf16.gmra.mxu0 %v627
    %v1050 = vpop.f32.mrf.mxu0
    %v1051 = vadd.f32 %v172, %v1050
    %v1052 = vpop.f32.mrf.mxu0
    %v1053 = vpop.f32.mrf.mxu0
    %v1054 = vadd.f32 %v172, %v1053
    %v1055 = vpop.f32.mrf.mxu0
    %1056 = vmatprep.mubr.bf16.mxu0 0
    %1057 = vmatmul.mubr.bf16.gmra.mxu0 %v630
    %v1058 = vpop.f32.mrf.mxu0
    %v1059 = vadd.f32 %v172, %v1058
    %v1060 = vpop.f32.mrf.mxu0
    %v1061 = vpop.f32.mrf.mxu0
    %v1062 = vadd.f32 %v172, %v1061
    %v1063 = vpop.f32.mrf.mxu0
    %1064 = vmatprep.mubr.bf16.mxu0 0
    %1065 = vmatmul.mubr.bf16.gmra.mxu0 %v633
    %v1066 = vpop.f32.mrf.mxu0
    %v1067 = vadd.f32 %v172, %v1066
    %v1068 = vpop.f32.mrf.mxu0
    %v1069 = vpop.f32.mrf.mxu0
    %v1070 = vadd.f32 %v172, %v1069
    %v1071 = vpop.f32.mrf.mxu0
    %1072 = vmatprep.mubr.bf16.mxu0 0
    %1073 = vmatmul.mubr.bf16.gmra.mxu0 %v636
    %v1074 = vpop.f32.mrf.mxu0
    %v1075 = vadd.f32 %v172, %v1074
    %v1076 = vpop.f32.mrf.mxu0
    %v1077 = vpop.f32.mrf.mxu0
    %v1078 = vadd.f32 %v172, %v1077
    %v1079 = vpop.f32.mrf.mxu0
    %1080 = vmatprep.mubr.bf16.mxu0 0
    %1081 = vmatmul.mubr.bf16.gmra.mxu0 %v639
    %v1082 = vpop.f32.mrf.mxu0
    %v1083 = vadd.f32 %v172, %v1082
    %v1084 = vpop.f32.mrf.mxu0
    %v1085 = vpop.f32.mrf.mxu0
    %v1086 = vadd.f32 %v172, %v1085
    %v1087 = vpop.f32.mrf.mxu0
    %1088 = vmatprep.mubr.bf16.mxu0 0
    %1089 = vmatmul.mubr.bf16.gmra.mxu0 %v642
    %v1090 = vpop.f32.mrf.mxu0
    %v1091 = vadd.f32 %v172, %v1090
    %v1092 = vpop.f32.mrf.mxu0
    %v1093 = vpop.f32.mrf.mxu0
    %v1094 = vadd.f32 %v172, %v1093
    %v1095 = vpop.f32.mrf.mxu0
    %1096 = vmatprep.mubr.bf16.mxu0 0
    %1097 = vmatmul.mubr.bf16.gmra.mxu0 %v645
    %v1098 = vpop.f32.mrf.mxu0
    %v1099 = vadd.f32 %v172, %v1098
    %v1100 = vpop.f32.mrf.mxu0
    %v1101 = vpop.f32.mrf.mxu0
    %v1102 = vadd.f32 %v172, %v1101
    %v1103 = vpop.f32.mrf.mxu0
    %1104 = vmatprep.mubr.bf16.mxu0 0
    %1105 = vmatmul.mubr.bf16.gmra.mxu0 %v648
    %v1106 = vpop.f32.mrf.mxu0
    %v1107 = vadd.f32 %v172, %v1106
    %v1108 = vpop.f32.mrf.mxu0
    %v1109 = vpop.f32.mrf.mxu0
    %v1110 = vadd.f32 %v172, %v1109
    %v1111 = vpop.f32.mrf.mxu0
    %1112 = vmatprep.mubr.bf16.mxu0 0
    %1113 = vmatmul.mubr.bf16.gmra.mxu0 %v651
    %v1114 = vpop.f32.mrf.mxu0
    %v1115 = vadd.f32 %v172, %v1114
    %v1116 = vpop.f32.mrf.mxu0
    %v1117 = vpop.f32.mrf.mxu0
    %v1118 = vadd.f32 %v172, %v1117
    %v1119 = vpop.f32.mrf.mxu0
    %1120 = vmatprep.mubr.bf16.mxu0 0
    %1121 = vmatmul.mubr.bf16.gmra.mxu0 %v654
    %v1122 = vpop.f32.mrf.mxu0
    %v1123 = vadd.f32 %v172, %v1122
    %v1124 = vpop.f32.mrf.mxu0
    %v1125 = vpop.f32.mrf.mxu0
    %v1126 = vadd.f32 %v172, %v1125
    %v1127 = vpop.f32.mrf.mxu0
    %1128 = vmatprep.mubr.bf16.mxu0 0
    %1129 = vmatmul.mubr.bf16.gmra.mxu0 %v657
    %v1130 = vpop.f32.mrf.mxu0
    %v1131 = vadd.f32 %v172, %v1130
    %v1132 = vpop.f32.mrf.mxu0
    %v1133 = vpop.f32.mrf.mxu0
    %v1134 = vadd.f32 %v172, %v1133
    %v1135 = vpop.f32.mrf.mxu0
    %1136 = vmatprep.mubr.bf16.mxu0 0
    %1137 = vmatmul.mubr.bf16.gmra.mxu0 %v660
    %v1138 = vpop.f32.mrf.mxu0
    %v1139 = vadd.f32 %v172, %v1138
    %v1140 = vpop.f32.mrf.mxu0
    %v1141 = vpop.f32.mrf.mxu0
    %v1142 = vadd.f32 %v172, %v1141
    %v1143 = vpop.f32.mrf.mxu0
    %1144 = vmatprep.mubr.bf16.mxu0 0
    %1145 = vmatmul.mubr.bf16.gmra.mxu0 %v663
    %v1146 = vpop.f32.mrf.mxu0
    %v1147 = vadd.f32 %v172, %v1146
    %v1148 = vpop.f32.mrf.mxu0
    %v1149 = vpop.f32.mrf.mxu0
    %v1150 = vadd.f32 %v172, %v1149
    %v1151 = vpop.f32.mrf.mxu0
    %1152 = vmatprep.mubr.bf16.mxu0 0
    %1153 = vmatmul.mubr.bf16.gmra.mxu0 %v666
    %v1154 = vpop.f32.mrf.mxu0
    %v1155 = vadd.f32 %v172, %v1154
    %v1156 = vpop.f32.mrf.mxu0
    %v1157 = vpop.f32.mrf.mxu0
    %v1158 = vadd.f32 %v172, %v1157
    %v1159 = vpop.f32.mrf.mxu0
    %1160 = vmatprep.mubr.bf16.mxu0 0
    %1161 = vmatmul.mubr.bf16.gmra.mxu0 %v669
    %v1162 = vpop.f32.mrf.mxu0
    %v1163 = vadd.f32 %v172, %v1162
    %v1164 = vpop.f32.mrf.mxu0
    %v1165 = vpop.f32.mrf.mxu0
    %v1166 = vadd.f32 %v172, %v1165
    %v1167 = vpop.f32.mrf.mxu0
    %1168 = vmatprep.mubr.bf16.mxu0 0
    %1169 = vmatmul.mubr.bf16.gmra.mxu0 %v672
    %v1170 = vpop.f32.mrf.mxu0
    %v1171 = vadd.f32 %v172, %v1170
    %v1172 = vpop.f32.mrf.mxu0
    %v1173 = vpop.f32.mrf.mxu0
    %v1174 = vadd.f32 %v172, %v1173
    %v1175 = vpop.f32.mrf.mxu0
    %1176 = vmatprep.mubr.bf16.mxu0 0
    %1177 = vmatmul.mubr.bf16.gmra.mxu0 %v675
    %v1178 = vpop.f32.mrf.mxu0
    %v1179 = vadd.f32 %v172, %v1178
    %v1180 = vpop.f32.mrf.mxu0
    %v1181 = vpop.f32.mrf.mxu0
    %v1182 = vadd.f32 %v172, %v1181
    %v1183 = vpop.f32.mrf.mxu0
    %1184 = vmatprep.mubr.bf16.mxu0 0
    %1185 = vmatmul.mubr.bf16.gmra.mxu0 %v678
    %v1186 = vpop.f32.mrf.mxu0
    %v1187 = vadd.f32 %v172, %v1186
    %v1188 = vpop.f32.mrf.mxu0
    %v1189 = vpop.f32.mrf.mxu0
    %v1190 = vadd.f32 %v172, %v1189
    %v1191 = vpop.f32.mrf.mxu0
    %1192 = vmatprep.mubr.bf16.mxu0 0
    %1193 = vmatmul.mubr.bf16.gmra.mxu0 %v681
    %v1194 = vpop.f32.mrf.mxu0
    %v1195 = vadd.f32 %v172, %v1194
    %v1196 = vpop.f32.mrf.mxu0
    %v1197 = vpop.f32.mrf.mxu0
    %v1198 = vadd.f32 %v172, %v1197
    %v1199 = vpop.f32.mrf.mxu0
    %1200 = vmatprep.mubr.bf16.mxu0 0
    %1201 = vmatmul.mubr.bf16.gmra.mxu0 %v684
    %v1202 = vpop.f32.mrf.mxu0
    %v1203 = vadd.f32 %v172, %v1202
    %v1204 = vpop.f32.mrf.mxu0
    %v1205 = vpop.f32.mrf.mxu0
    %v1206 = vadd.f32 %v172, %v1205
    %v1207 = vpop.f32.mrf.mxu0
    %1208 = vmatprep.mubr.bf16.mxu0 0
    %1209 = vmatmul.mubr.bf16.gmra.mxu0 %v687
    %v1210 = vpop.f32.mrf.mxu0
    %v1211 = vadd.f32 %v172, %v1210
    %v1212 = vpop.f32.mrf.mxu0
    %v1213 = vpop.f32.mrf.mxu0
    %v1214 = vpop.f32.mrf.mxu0
    %1215 = vdwg.mxu0
    %vm1216 = vcmask 261120
    %v1217 = vsel %vm1216, %v731, 0.0
    %v1218 = vsel %vm1216, %v734, 0.0
    %v1219 = vadd.f32 %v1217, %v1218
    %v1220 = vsel %vm1216, %v739, 0.0
    %v1221 = vadd.f32 %v1219, %v1220
    %v1222 = vsel %vm1216, %v742, 0.0
    %v1223 = vadd.f32 %v1221, %v1222
    %v1224 = vsel %vm1216, %v747, 0.0
    %v1225 = vadd.f32 %v1223, %v1224
    %v1226 = vsel %vm1216, %v750, 0.0
    %v1227 = vadd.f32 %v1225, %v1226
    %v1228 = vsel %vm1216, %v755, 0.0
    %v1229 = vadd.f32 %v1227, %v1228
    %v1230 = vsel %vm1216, %v758, 0.0
    %v1231 = vadd.f32 %v1229, %v1230
    %v1232 = vsel %vm1216, %v763, 0.0
    %v1233 = vadd.f32 %v1231, %v1232
    %v1234 = vsel %vm1216, %v766, 0.0
    %v1235 = vadd.f32 %v1233, %v1234
    %v1236 = vsel %vm1216, %v771, 0.0
    %v1237 = vadd.f32 %v1235, %v1236
    %v1238 = vsel %vm1216, %v774, 0.0
    %v1239 = vadd.f32 %v1237, %v1238
    %v1240 = vsel %vm1216, %v779, 0.0
    %v1241 = vadd.f32 %v1239, %v1240
    %v1242 = vsel %vm1216, %v782, 0.0
    %v1243 = vadd.f32 %v1241, %v1242
    %v1244 = vsel %vm1216, %v787, 0.0
    %v1245 = vadd.f32 %v1243, %v1244
    %v1246 = vsel %vm1216, %v790, 0.0
    %v1247 = vadd.f32 %v1245, %v1246
    %v1248 = vsel %vm1216, %v795, 0.0
    %v1249 = vadd.f32 %v1247, %v1248
    %v1250 = vsel %vm1216, %v798, 0.0
    %v1251 = vadd.f32 %v1249, %v1250
    %v1252 = vsel %vm1216, %v803, 0.0
    %v1253 = vadd.f32 %v1251, %v1252
    %v1254 = vsel %vm1216, %v806, 0.0
    %v1255 = vadd.f32 %v1253, %v1254
    %v1256 = vsel %vm1216, %v811, 0.0
    %v1257 = vadd.f32 %v1255, %v1256
    %v1258 = vsel %vm1216, %v814, 0.0
    %v1259 = vadd.f32 %v1257, %v1258
    %v1260 = vsel %vm1216, %v819, 0.0
    %v1261 = vadd.f32 %v1259, %v1260
    %v1262 = vsel %vm1216, %v822, 0.0
    %v1263 = vadd.f32 %v1261, %v1262
    %v1264 = vsel %vm1216, %v827, 0.0
    %v1265 = vadd.f32 %v1263, %v1264
    %v1266 = vsel %vm1216, %v830, 0.0
    %v1267 = vadd.f32 %v1265, %v1266
    %v1268 = vsel %vm1216, %v835, 0.0
    %v1269 = vadd.f32 %v1267, %v1268
    %v1270 = vsel %vm1216, %v838, 0.0
    %v1271 = vadd.f32 %v1269, %v1270
    %v1272 = vsel %vm1216, %v843, 0.0
    %v1273 = vadd.f32 %v1271, %v1272
    %v1274 = vsel %vm1216, %v846, 0.0
    %v1275 = vadd.f32 %v1273, %v1274
    %v1276 = vsel %vm1216, %v851, 0.0
    %v1277 = vadd.f32 %v1275, %v1276
    %v1278 = vsel %vm1216, %v854, 0.0
    %v1279 = vadd.f32 %v1277, %v1278
    %v1280 = vsel %vm1216, %v859, 0.0
    %v1281 = vadd.f32 %v1279, %v1280
    %v1282 = vsel %vm1216, %v862, 0.0
    %v1283 = vadd.f32 %v1281, %v1282
    %v1284 = vsel %vm1216, %v867, 0.0
    %v1285 = vadd.f32 %v1283, %v1284
    %v1286 = vsel %vm1216, %v870, 0.0
    %v1287 = vadd.f32 %v1285, %v1286
    %v1288 = vsel %vm1216, %v875, 0.0
    %v1289 = vadd.f32 %v1287, %v1288
    %v1290 = vsel %vm1216, %v878, 0.0
    %v1291 = vadd.f32 %v1289, %v1290
    %v1292 = vsel %vm1216, %v883, 0.0
    %v1293 = vadd.f32 %v1291, %v1292
    %v1294 = vsel %vm1216, %v886, 0.0
    %v1295 = vadd.f32 %v1293, %v1294
    %v1296 = vsel %vm1216, %v891, 0.0
    %v1297 = vadd.f32 %v1295, %v1296
    %v1298 = vsel %vm1216, %v894, 0.0
    %v1299 = vadd.f32 %v1297, %v1298
    %v1300 = vsel %vm1216, %v899, 0.0
    %v1301 = vadd.f32 %v1299, %v1300
    %v1302 = vsel %vm1216, %v902, 0.0
    %v1303 = vadd.f32 %v1301, %v1302
    %v1304 = vsel %vm1216, %v907, 0.0
    %v1305 = vadd.f32 %v1303, %v1304
    %v1306 = vsel %vm1216, %v910, 0.0
    %v1307 = vadd.f32 %v1305, %v1306
    %v1308 = vsel %vm1216, %v915, 0.0
    %v1309 = vadd.f32 %v1307, %v1308
    %v1310 = vsel %vm1216, %v918, 0.0
    %v1311 = vadd.f32 %v1309, %v1310
    %v1312 = vsel %vm1216, %v923, 0.0
    %v1313 = vadd.f32 %v1311, %v1312
    %v1314 = vsel %vm1216, %v926, 0.0
    %v1315 = vadd.f32 %v1313, %v1314
    %v1316 = vsel %vm1216, %v931, 0.0
    %v1317 = vadd.f32 %v1315, %v1316
    %v1318 = vsel %vm1216, %v934, 0.0
    %v1319 = vadd.f32 %v1317, %v1318
    %v1320 = vsel %vm1216, %v939, 0.0
    %v1321 = vadd.f32 %v1319, %v1320
    %v1322 = vsel %vm1216, %v942, 0.0
    %v1323 = vadd.f32 %v1321, %v1322
    %v1324 = vsel %vm1216, %v947, 0.0
    %v1325 = vadd.f32 %v1323, %v1324
    %v1326 = vsel %vm1216, %v950, 0.0
    %v1327 = vadd.f32 %v1325, %v1326
    %v1328 = vsel %vm1216, %v955, 0.0
    %v1329 = vadd.f32 %v1327, %v1328
    %v1330 = vsel %vm1216, %v958, 0.0
    %v1331 = vadd.f32 %v1329, %v1330
    %v1332 = vsel %vm1216, %v963, 0.0
    %v1333 = vadd.f32 %v1331, %v1332
    %v1334 = vsel %vm1216, %v966, 0.0
    %v1335 = vadd.f32 %v1333, %v1334
    %v1336 = vsel %vm1216, %v971, 0.0
    %v1337 = vadd.f32 %v1335, %v1336
    %v1338 = vsel %vm1216, %v974, 0.0
    %v1339 = vadd.f32 %v1337, %v1338
    %v1340 = vsel %vm1216, %v979, 0.0
    %v1341 = vadd.f32 %v1339, %v1340
    %v1342 = vsel %vm1216, %v982, 0.0
    %v1343 = vadd.f32 %v1341, %v1342
    %v1344 = vsel %vm1216, %v987, 0.0
    %v1345 = vadd.f32 %v1343, %v1344
    %v1346 = vsel %vm1216, %v990, 0.0
    %v1347 = vadd.f32 %v1345, %v1346
    %v1348 = vsel %vm1216, %v995, 0.0
    %v1349 = vadd.f32 %v1347, %v1348
    %v1350 = vsel %vm1216, %v998, 0.0
    %v1351 = vadd.f32 %v1349, %v1350
    %v1352 = vsel %vm1216, %v1003, 0.0
    %v1353 = vadd.f32 %v1351, %v1352
    %v1354 = vsel %vm1216, %v1006, 0.0
    %v1355 = vadd.f32 %v1353, %v1354
    %v1356 = vsel %vm1216, %v1011, 0.0
    %v1357 = vadd.f32 %v1355, %v1356
    %v1358 = vsel %vm1216, %v1014, 0.0
    %v1359 = vadd.f32 %v1357, %v1358
    %v1360 = vsel %vm1216, %v1019, 0.0
    %v1361 = vadd.f32 %v1359, %v1360
    %v1362 = vsel %vm1216, %v1022, 0.0
    %v1363 = vadd.f32 %v1361, %v1362
    %v1364 = vsel %vm1216, %v1027, 0.0
    %v1365 = vadd.f32 %v1363, %v1364
    %v1366 = vsel %vm1216, %v1030, 0.0
    %v1367 = vadd.f32 %v1365, %v1366
    %v1368 = vsel %vm1216, %v1035, 0.0
    %v1369 = vadd.f32 %v1367, %v1368
    %v1370 = vsel %vm1216, %v1038, 0.0
    %v1371 = vadd.f32 %v1369, %v1370
    %v1372 = vsel %vm1216, %v1043, 0.0
    %v1373 = vadd.f32 %v1371, %v1372
    %v1374 = vsel %vm1216, %v1046, 0.0
    %v1375 = vadd.f32 %v1373, %v1374
    %v1376 = vsel %vm1216, %v1051, 0.0
    %v1377 = vadd.f32 %v1375, %v1376
    %v1378 = vsel %vm1216, %v1054, 0.0
    %v1379 = vadd.f32 %v1377, %v1378
    %v1380 = vsel %vm1216, %v1059, 0.0
    %v1381 = vadd.f32 %v1379, %v1380
    %v1382 = vsel %vm1216, %v1062, 0.0
    %v1383 = vadd.f32 %v1381, %v1382
    %v1384 = vsel %vm1216, %v1067, 0.0
    %v1385 = vadd.f32 %v1383, %v1384
    %v1386 = vsel %vm1216, %v1070, 0.0
    %v1387 = vadd.f32 %v1385, %v1386
    %v1388 = vsel %vm1216, %v1075, 0.0
    %v1389 = vadd.f32 %v1387, %v1388
    %v1390 = vsel %vm1216, %v1078, 0.0
    %v1391 = vadd.f32 %v1389, %v1390
    %v1392 = vsel %vm1216, %v1083, 0.0
    %v1393 = vadd.f32 %v1391, %v1392
    %v1394 = vsel %vm1216, %v1086, 0.0
    %v1395 = vadd.f32 %v1393, %v1394
    %v1396 = vsel %vm1216, %v1091, 0.0
    %v1397 = vadd.f32 %v1395, %v1396
    %v1398 = vsel %vm1216, %v1094, 0.0
    %v1399 = vadd.f32 %v1397, %v1398
    %v1400 = vsel %vm1216, %v1099, 0.0
    %v1401 = vadd.f32 %v1399, %v1400
    %v1402 = vsel %vm1216, %v1102, 0.0
    %v1403 = vadd.f32 %v1401, %v1402
    %v1404 = vsel %vm1216, %v1107, 0.0
    %v1405 = vadd.f32 %v1403, %v1404
    %v1406 = vsel %vm1216, %v1110, 0.0
    %v1407 = vadd.f32 %v1405, %v1406
    %v1408 = vsel %vm1216, %v1115, 0.0
    %v1409 = vadd.f32 %v1407, %v1408
    %v1410 = vsel %vm1216, %v1118, 0.0
    %v1411 = vadd.f32 %v1409, %v1410
    %v1412 = vsel %vm1216, %v1123, 0.0
    %v1413 = vadd.f32 %v1411, %v1412
    %v1414 = vsel %vm1216, %v1126, 0.0
    %v1415 = vadd.f32 %v1413, %v1414
    %v1416 = vsel %vm1216, %v1131, 0.0
    %v1417 = vadd.f32 %v1415, %v1416
    %v1418 = vsel %vm1216, %v1134, 0.0
    %v1419 = vadd.f32 %v1417, %v1418
    %v1420 = vsel %vm1216, %v1139, 0.0
    %v1421 = vadd.f32 %v1419, %v1420
    %v1422 = vsel %vm1216, %v1142, 0.0
    %v1423 = vadd.f32 %v1421, %v1422
    %v1424 = vsel %vm1216, %v1147, 0.0
    %v1425 = vadd.f32 %v1423, %v1424
    %v1426 = vsel %vm1216, %v1150, 0.0
    %v1427 = vadd.f32 %v1425, %v1426
    %v1428 = vsel %vm1216, %v1155, 0.0
    %v1429 = vadd.f32 %v1427, %v1428
    %v1430 = vsel %vm1216, %v1158, 0.0
    %v1431 = vadd.f32 %v1429, %v1430
    %v1432 = vsel %vm1216, %v1163, 0.0
    %v1433 = vadd.f32 %v1431, %v1432
    %v1434 = vsel %vm1216, %v1166, 0.0
    %v1435 = vadd.f32 %v1433, %v1434
    %v1436 = vsel %vm1216, %v1171, 0.0
    %v1437 = vadd.f32 %v1435, %v1436
    %v1438 = vsel %vm1216, %v1174, 0.0
    %v1439 = vadd.f32 %v1437, %v1438
    %v1440 = vsel %vm1216, %v1179, 0.0
    %v1441 = vadd.f32 %v1439, %v1440
    %v1442 = vsel %vm1216, %v1182, 0.0
    %v1443 = vadd.f32 %v1441, %v1442
    %v1444 = vsel %vm1216, %v1187, 0.0
    %v1445 = vadd.f32 %v1443, %v1444
    %v1446 = vsel %vm1216, %v1190, 0.0
    %v1447 = vadd.f32 %v1445, %v1446
    %v1448 = vsel %vm1216, %v1195, 0.0
    %v1449 = vadd.f32 %v1447, %v1448
    %v1450 = vsel %vm1216, %v1198, 0.0
    %v1451 = vadd.f32 %v1449, %v1450
    %v1452 = vsel %vm1216, %v1203, 0.0
    %v1453 = vadd.f32 %v1451, %v1452
    %v1454 = vsel %vm1216, %v1206, 0.0
    %v1455 = vadd.f32 %v1453, %v1454
    %v1456 = vsel %vm1216, %v1211, 0.0
    %v1457 = vadd.f32 %v1455, %v1456
    %v1458 = vrot.slane %v1457, 4
    %v1459 = vadd.f32 %v1457, %v1458
    %v1460 = vrot.slane %v1459, 2
    %v1461 = vadd.f32 %v1459, %v1460
    %v1462 = vrot.slane %v1461, 1
    %v1463 = vadd.f32 %v1461, %v1462
    %v1464 = vrcp.pop 968.0
    %v1465 = vmul.f32 %v1463, %v1464
    %v1466 = vsub.f32 %v731, %v1465
    %v1467 = vsub.f32 %v734, %v1465
    %v1468 = vsub.f32 %v739, %v1465
    %v1469 = vsub.f32 %v742, %v1465
    %v1470 = vsub.f32 %v747, %v1465
    %v1471 = vsub.f32 %v750, %v1465
    %v1472 = vsub.f32 %v755, %v1465
    %v1473 = vsub.f32 %v758, %v1465
    %v1474 = vsub.f32 %v763, %v1465
    %v1475 = vsub.f32 %v766, %v1465
    %v1476 = vsub.f32 %v771, %v1465
    %v1477 = vsub.f32 %v774, %v1465
    %v1478 = vsub.f32 %v779, %v1465
    %v1479 = vsub.f32 %v782, %v1465
    %v1480 = vsub.f32 %v787, %v1465
    %v1481 = vsub.f32 %v790, %v1465
    %v1482 = vsub.f32 %v795, %v1465
    %v1483 = vsub.f32 %v798, %v1465
    %v1484 = vsub.f32 %v803, %v1465
    %v1485 = vsub.f32 %v806, %v1465
    %v1486 = vsub.f32 %v811, %v1465
    %v1487 = vsub.f32 %v814, %v1465
    %v1488 = vsub.f32 %v819, %v1465
    %v1489 = vsub.f32 %v822, %v1465
    %v1490 = vsub.f32 %v827, %v1465
    %v1491 = vsub.f32 %v830, %v1465
    %v1492 = vsub.f32 %v835, %v1465
    %v1493 = vsub.f32 %v838, %v1465
    %v1494 = vsub.f32 %v843, %v1465
    %v1495 = vsub.f32 %v846, %v1465
    %v1496 = vsub.f32 %v851, %v1465
    %v1497 = vsub.f32 %v854, %v1465
    %v1498 = vsub.f32 %v859, %v1465
    %v1499 = vsub.f32 %v862, %v1465
    %v1500 = vsub.f32 %v867, %v1465
    %v1501 = vsub.f32 %v870, %v1465
    %v1502 = vsub.f32 %v875, %v1465
    %v1503 = vsub.f32 %v878, %v1465
    %v1504 = vsub.f32 %v883, %v1465
    %v1505 = vsub.f32 %v886, %v1465
    %v1506 = vsub.f32 %v891, %v1465
    %v1507 = vsub.f32 %v894, %v1465
    %v1508 = vsub.f32 %v899, %v1465
    %v1509 = vsub.f32 %v902, %v1465
    %v1510 = vsub.f32 %v907, %v1465
    %v1511 = vsub.f32 %v910, %v1465
    %v1512 = vsub.f32 %v915, %v1465
    %v1513 = vsub.f32 %v918, %v1465
    %v1514 = vsub.f32 %v923, %v1465
    %v1515 = vsub.f32 %v926, %v1465
    %v1516 = vsub.f32 %v931, %v1465
    %v1517 = vsub.f32 %v934, %v1465
    %v1518 = vsub.f32 %v939, %v1465
    %v1519 = vsub.f32 %v942, %v1465
    %v1520 = vsub.f32 %v947, %v1465
    %v1521 = vsub.f32 %v950, %v1465
    %v1522 = vsub.f32 %v955, %v1465
    %v1523 = vsub.f32 %v958, %v1465
    %v1524 = vsub.f32 %v963, %v1465
    %v1525 = vsub.f32 %v966, %v1465
    %v1526 = vsub.f32 %v971, %v1465
    %v1527 = vsub.f32 %v974, %v1465
    %v1528 = vsub.f32 %v979, %v1465
    %v1529 = vsub.f32 %v982, %v1465
    %v1530 = vsub.f32 %v987, %v1465
    %v1531 = vsub.f32 %v990, %v1465
    %v1532 = vsub.f32 %v995, %v1465
    %v1533 = vsub.f32 %v998, %v1465
    %v1534 = vsub.f32 %v1003, %v1465
    %v1535 = vsub.f32 %v1006, %v1465
    %v1536 = vsub.f32 %v1011, %v1465
    %v1537 = vsub.f32 %v1014, %v1465
    %v1538 = vsub.f32 %v1019, %v1465
    %v1539 = vsub.f32 %v1022, %v1465
    %v1540 = vsub.f32 %v1027, %v1465
    %v1541 = vsub.f32 %v1030, %v1465
    %v1542 = vsub.f32 %v1035, %v1465
    %v1543 = vsub.f32 %v1038, %v1465
    %v1544 = vsub.f32 %v1043, %v1465
    %v1545 = vsub.f32 %v1046, %v1465
    %v1546 = vsub.f32 %v1051, %v1465
    %v1547 = vsub.f32 %v1054, %v1465
    %v1548 = vsub.f32 %v1059, %v1465
    %v1549 = vsub.f32 %v1062, %v1465
    %v1550 = vsub.f32 %v1067, %v1465
    %v1551 = vsub.f32 %v1070, %v1465
    %v1552 = vsub.f32 %v1075, %v1465
    %v1553 = vsub.f32 %v1078, %v1465
    %v1554 = vsub.f32 %v1083, %v1465
    %v1555 = vsub.f32 %v1086, %v1465
    %v1556 = vsub.f32 %v1091, %v1465
    %v1557 = vsub.f32 %v1094, %v1465
    %v1558 = vsub.f32 %v1099, %v1465
    %v1559 = vsub.f32 %v1102, %v1465
    %v1560 = vsub.f32 %v1107, %v1465
    %v1561 = vsub.f32 %v1110, %v1465
    %v1562 = vsub.f32 %v1115, %v1465
    %v1563 = vsub.f32 %v1118, %v1465
    %v1564 = vsub.f32 %v1123, %v1465
    %v1565 = vsub.f32 %v1126, %v1465
    %v1566 = vsub.f32 %v1131, %v1465
    %v1567 = vsub.f32 %v1134, %v1465
    %v1568 = vsub.f32 %v1139, %v1465
    %v1569 = vsub.f32 %v1142, %v1465
    %v1570 = vsub.f32 %v1147, %v1465
    %v1571 = vsub.f32 %v1150, %v1465
    %v1572 = vsub.f32 %v1155, %v1465
    %v1573 = vsub.f32 %v1158, %v1465
    %v1574 = vsub.f32 %v1163, %v1465
    %v1575 = vsub.f32 %v1166, %v1465
    %v1576 = vsub.f32 %v1171, %v1465
    %v1577 = vsub.f32 %v1174, %v1465
    %v1578 = vsub.f32 %v1179, %v1465
    %v1579 = vsub.f32 %v1182, %v1465
    %v1580 = vsub.f32 %v1187, %v1465
    %v1581 = vsub.f32 %v1190, %v1465
    %v1582 = vsub.f32 %v1195, %v1465
    %v1583 = vsub.f32 %v1198, %v1465
    %v1584 = vsub.f32 %v1203, %v1465
    %v1585 = vsub.f32 %v1206, %v1465
    %v1586 = vsub.f32 %v1211, %v1465
    %v1587 = vmul.f32 %v1466, %v1466
    %v1588 = vmul.f32 %v1467, %v1467
    %v1589 = vmul.f32 %v1468, %v1468
    %v1590 = vmul.f32 %v1469, %v1469
    %v1591 = vmul.f32 %v1470, %v1470
    %v1592 = vmul.f32 %v1471, %v1471
    %v1593 = vmul.f32 %v1472, %v1472
    %v1594 = vmul.f32 %v1473, %v1473
    %v1595 = vmul.f32 %v1474, %v1474
    %v1596 = vmul.f32 %v1475, %v1475
    %v1597 = vmul.f32 %v1476, %v1476
    %v1598 = vmul.f32 %v1477, %v1477
    %v1599 = vmul.f32 %v1478, %v1478
    %v1600 = vmul.f32 %v1479, %v1479
    %v1601 = vmul.f32 %v1480, %v1480
    %v1602 = vmul.f32 %v1481, %v1481
    %v1603 = vmul.f32 %v1482, %v1482
    %v1604 = vmul.f32 %v1483, %v1483
    %v1605 = vmul.f32 %v1484, %v1484
    %v1606 = vmul.f32 %v1485, %v1485
    %v1607 = vmul.f32 %v1486, %v1486
    %v1608 = vmul.f32 %v1487, %v1487
    %v1609 = vmul.f32 %v1488, %v1488
    %v1610 = vmul.f32 %v1489, %v1489
    %v1611 = vmul.f32 %v1490, %v1490
    %v1612 = vmul.f32 %v1491, %v1491
    %v1613 = vmul.f32 %v1492, %v1492
    %v1614 = vmul.f32 %v1493, %v1493
    %v1615 = vmul.f32 %v1494, %v1494
    %v1616 = vmul.f32 %v1495, %v1495
    %v1617 = vmul.f32 %v1496, %v1496
    %v1618 = vmul.f32 %v1497, %v1497
    %v1619 = vmul.f32 %v1498, %v1498
    %v1620 = vmul.f32 %v1499, %v1499
    %v1621 = vmul.f32 %v1500, %v1500
    %v1622 = vmul.f32 %v1501, %v1501
    %v1623 = vmul.f32 %v1502, %v1502
    %v1624 = vmul.f32 %v1503, %v1503
    %v1625 = vmul.f32 %v1504, %v1504
    %v1626 = vmul.f32 %v1505, %v1505
    %v1627 = vmul.f32 %v1506, %v1506
    %v1628 = vmul.f32 %v1507, %v1507
    %v1629 = vmul.f32 %v1508, %v1508
    %v1630 = vmul.f32 %v1509, %v1509
    %v1631 = vmul.f32 %v1510, %v1510
    %v1632 = vmul.f32 %v1511, %v1511
    %v1633 = vmul.f32 %v1512, %v1512
    %v1634 = vmul.f32 %v1513, %v1513
    %v1635 = vmul.f32 %v1514, %v1514
    %v1636 = vmul.f32 %v1515, %v1515
    %v1637 = vmul.f32 %v1516, %v1516
    %v1638 = vmul.f32 %v1517, %v1517
    %v1639 = vmul.f32 %v1518, %v1518
    %v1640 = vmul.f32 %v1519, %v1519
    %v1641 = vmul.f32 %v1520, %v1520
    %v1642 = vmul.f32 %v1521, %v1521
    %v1643 = vmul.f32 %v1522, %v1522
    %v1644 = vmul.f32 %v1523, %v1523
    %v1645 = vmul.f32 %v1524, %v1524
    %v1646 = vmul.f32 %v1525, %v1525
    %v1647 = vmul.f32 %v1526, %v1526
    %v1648 = vmul.f32 %v1527, %v1527
    %v1649 = vmul.f32 %v1528, %v1528
    %v1650 = vmul.f32 %v1529, %v1529
    %v1651 = vmul.f32 %v1530, %v1530
    %v1652 = vmul.f32 %v1531, %v1531
    %v1653 = vmul.f32 %v1532, %v1532
    %v1654 = vmul.f32 %v1533, %v1533
    %v1655 = vmul.f32 %v1534, %v1534
    %v1656 = vmul.f32 %v1535, %v1535
    %v1657 = vmul.f32 %v1536, %v1536
    %v1658 = vmul.f32 %v1537, %v1537
    %v1659 = vmul.f32 %v1538, %v1538
    %v1660 = vmul.f32 %v1539, %v1539
    %v1661 = vmul.f32 %v1540, %v1540
    %v1662 = vmul.f32 %v1541, %v1541
    %v1663 = vmul.f32 %v1542, %v1542
    %v1664 = vmul.f32 %v1543, %v1543
    %v1665 = vmul.f32 %v1544, %v1544
    %v1666 = vmul.f32 %v1545, %v1545
    %v1667 = vmul.f32 %v1546, %v1546
    %v1668 = vmul.f32 %v1547, %v1547
    %v1669 = vmul.f32 %v1548, %v1548
    %v1670 = vmul.f32 %v1549, %v1549
    %v1671 = vmul.f32 %v1550, %v1550
    %v1672 = vmul.f32 %v1551, %v1551
    %v1673 = vmul.f32 %v1552, %v1552
    %v1674 = vmul.f32 %v1553, %v1553
    %v1675 = vmul.f32 %v1554, %v1554
    %v1676 = vmul.f32 %v1555, %v1555
    %v1677 = vmul.f32 %v1556, %v1556
    %v1678 = vmul.f32 %v1557, %v1557
    %v1679 = vmul.f32 %v1558, %v1558
    %v1680 = vmul.f32 %v1559, %v1559
    %v1681 = vmul.f32 %v1560, %v1560
    %v1682 = vmul.f32 %v1561, %v1561
    %v1683 = vmul.f32 %v1562, %v1562
    %v1684 = vmul.f32 %v1563, %v1563
    %v1685 = vmul.f32 %v1564, %v1564
    %v1686 = vmul.f32 %v1565, %v1565
    %v1687 = vmul.f32 %v1566, %v1566
    %v1688 = vmul.f32 %v1567, %v1567
    %v1689 = vmul.f32 %v1568, %v1568
    %v1690 = vmul.f32 %v1569, %v1569
    %v1691 = vmul.f32 %v1570, %v1570
    %v1692 = vmul.f32 %v1571, %v1571
    %v1693 = vmul.f32 %v1572, %v1572
    %v1694 = vmul.f32 %v1573, %v1573
    %v1695 = vmul.f32 %v1574, %v1574
    %v1696 = vmul.f32 %v1575, %v1575
    %v1697 = vmul.f32 %v1576, %v1576
    %v1698 = vmul.f32 %v1577, %v1577
    %v1699 = vmul.f32 %v1578, %v1578
    %v1700 = vmul.f32 %v1579, %v1579
    %v1701 = vmul.f32 %v1580, %v1580
    %v1702 = vmul.f32 %v1581, %v1581
    %v1703 = vmul.f32 %v1582, %v1582
    %v1704 = vmul.f32 %v1583, %v1583
    %v1705 = vmul.f32 %v1584, %v1584
    %v1706 = vmul.f32 %v1585, %v1585
    %v1707 = vmul.f32 %v1586, %v1586
    %v1708 = vsel %vm1216, %v1587, 0.0
    %v1709 = vsel %vm1216, %v1588, 0.0
    %v1710 = vadd.f32 %v1708, %v1709
    %v1711 = vsel %vm1216, %v1589, 0.0
    %v1712 = vadd.f32 %v1710, %v1711
    %v1713 = vsel %vm1216, %v1590, 0.0
    %v1714 = vadd.f32 %v1712, %v1713
    %v1715 = vsel %vm1216, %v1591, 0.0
    %v1716 = vadd.f32 %v1714, %v1715
    %v1717 = vsel %vm1216, %v1592, 0.0
    %v1718 = vadd.f32 %v1716, %v1717
    %v1719 = vsel %vm1216, %v1593, 0.0
    %v1720 = vadd.f32 %v1718, %v1719
    %v1721 = vsel %vm1216, %v1594, 0.0
    %v1722 = vadd.f32 %v1720, %v1721
    %v1723 = vsel %vm1216, %v1595, 0.0
    %v1724 = vadd.f32 %v1722, %v1723
    %v1725 = vsel %vm1216, %v1596, 0.0
    %v1726 = vadd.f32 %v1724, %v1725
    %v1727 = vsel %vm1216, %v1597, 0.0
    %v1728 = vadd.f32 %v1726, %v1727
    %v1729 = vsel %vm1216, %v1598, 0.0
    %v1730 = vadd.f32 %v1728, %v1729
    %v1731 = vsel %vm1216, %v1599, 0.0
    %v1732 = vadd.f32 %v1730, %v1731
    %v1733 = vsel %vm1216, %v1600, 0.0
    %v1734 = vadd.f32 %v1732, %v1733
    %v1735 = vsel %vm1216, %v1601, 0.0
    %v1736 = vadd.f32 %v1734, %v1735
    %v1737 = vsel %vm1216, %v1602, 0.0
    %v1738 = vadd.f32 %v1736, %v1737
    %v1739 = vsel %vm1216, %v1603, 0.0
    %v1740 = vadd.f32 %v1738, %v1739
    %v1741 = vsel %vm1216, %v1604, 0.0
    %v1742 = vadd.f32 %v1740, %v1741
    %v1743 = vsel %vm1216, %v1605, 0.0
    %v1744 = vadd.f32 %v1742, %v1743
    %v1745 = vsel %vm1216, %v1606, 0.0
    %v1746 = vadd.f32 %v1744, %v1745
    %v1747 = vsel %vm1216, %v1607, 0.0
    %v1748 = vadd.f32 %v1746, %v1747
    %v1749 = vsel %vm1216, %v1608, 0.0
    %v1750 = vadd.f32 %v1748, %v1749
    %v1751 = vsel %vm1216, %v1609, 0.0
    %v1752 = vadd.f32 %v1750, %v1751
    %v1753 = vsel %vm1216, %v1610, 0.0
    %v1754 = vadd.f32 %v1752, %v1753
    %v1755 = vsel %vm1216, %v1611, 0.0
    %v1756 = vadd.f32 %v1754, %v1755
    %v1757 = vsel %vm1216, %v1612, 0.0
    %v1758 = vadd.f32 %v1756, %v1757
    %v1759 = vsel %vm1216, %v1613, 0.0
    %v1760 = vadd.f32 %v1758, %v1759
    %v1761 = vsel %vm1216, %v1614, 0.0
    %v1762 = vadd.f32 %v1760, %v1761
    %v1763 = vsel %vm1216, %v1615, 0.0
    %v1764 = vadd.f32 %v1762, %v1763
    %v1765 = vsel %vm1216, %v1616, 0.0
    %v1766 = vadd.f32 %v1764, %v1765
    %v1767 = vsel %vm1216, %v1617, 0.0
    %v1768 = vadd.f32 %v1766, %v1767
    %v1769 = vsel %vm1216, %v1618, 0.0
    %v1770 = vadd.f32 %v1768, %v1769
    %v1771 = vsel %vm1216, %v1619, 0.0
    %v1772 = vadd.f32 %v1770, %v1771
    %v1773 = vsel %vm1216, %v1620, 0.0
    %v1774 = vadd.f32 %v1772, %v1773
    %v1775 = vsel %vm1216, %v1621, 0.0
    %v1776 = vadd.f32 %v1774, %v1775
    %v1777 = vsel %vm1216, %v1622, 0.0
    %v1778 = vadd.f32 %v1776, %v1777
    %v1779 = vsel %vm1216, %v1623, 0.0
    %v1780 = vadd.f32 %v1778, %v1779
    %v1781 = vsel %vm1216, %v1624, 0.0
    %v1782 = vadd.f32 %v1780, %v1781
    %v1783 = vsel %vm1216, %v1625, 0.0
    %v1784 = vadd.f32 %v1782, %v1783
    %v1785 = vsel %vm1216, %v1626, 0.0
    %v1786 = vadd.f32 %v1784, %v1785
    %v1787 = vsel %vm1216, %v1627, 0.0
    %v1788 = vadd.f32 %v1786, %v1787
    %v1789 = vsel %vm1216, %v1628, 0.0
    %v1790 = vadd.f32 %v1788, %v1789
    %v1791 = vsel %vm1216, %v1629, 0.0
    %v1792 = vadd.f32 %v1790, %v1791
    %v1793 = vsel %vm1216, %v1630, 0.0
    %v1794 = vadd.f32 %v1792, %v1793
    %v1795 = vsel %vm1216, %v1631, 0.0
    %v1796 = vadd.f32 %v1794, %v1795
    %v1797 = vsel %vm1216, %v1632, 0.0
    %v1798 = vadd.f32 %v1796, %v1797
    %v1799 = vsel %vm1216, %v1633, 0.0
    %v1800 = vadd.f32 %v1798, %v1799
    %v1801 = vsel %vm1216, %v1634, 0.0
    %v1802 = vadd.f32 %v1800, %v1801
    %v1803 = vsel %vm1216, %v1635, 0.0
    %v1804 = vadd.f32 %v1802, %v1803
    %v1805 = vsel %vm1216, %v1636, 0.0
    %v1806 = vadd.f32 %v1804, %v1805
    %v1807 = vsel %vm1216, %v1637, 0.0
    %v1808 = vadd.f32 %v1806, %v1807
    %v1809 = vsel %vm1216, %v1638, 0.0
    %v1810 = vadd.f32 %v1808, %v1809
    %v1811 = vsel %vm1216, %v1639, 0.0
    %v1812 = vadd.f32 %v1810, %v1811
    %v1813 = vsel %vm1216, %v1640, 0.0
    %v1814 = vadd.f32 %v1812, %v1813
    %v1815 = vsel %vm1216, %v1641, 0.0
    %v1816 = vadd.f32 %v1814, %v1815
    %v1817 = vsel %vm1216, %v1642, 0.0
    %v1818 = vadd.f32 %v1816, %v1817
    %v1819 = vsel %vm1216, %v1643, 0.0
    %v1820 = vadd.f32 %v1818, %v1819
    %v1821 = vsel %vm1216, %v1644, 0.0
    %v1822 = vadd.f32 %v1820, %v1821
    %v1823 = vsel %vm1216, %v1645, 0.0
    %v1824 = vadd.f32 %v1822, %v1823
    %v1825 = vsel %vm1216, %v1646, 0.0
    %v1826 = vadd.f32 %v1824, %v1825
    %v1827 = vsel %vm1216, %v1647, 0.0
    %v1828 = vadd.f32 %v1826, %v1827
    %v1829 = vsel %vm1216, %v1648, 0.0
    %v1830 = vadd.f32 %v1828, %v1829
    %v1831 = vsel %vm1216, %v1649, 0.0
    %v1832 = vadd.f32 %v1830, %v1831
    %v1833 = vsel %vm1216, %v1650, 0.0
    %v1834 = vadd.f32 %v1832, %v1833
    %v1835 = vsel %vm1216, %v1651, 0.0
    %v1836 = vadd.f32 %v1834, %v1835
    %v1837 = vsel %vm1216, %v1652, 0.0
    %v1838 = vadd.f32 %v1836, %v1837
    %v1839 = vsel %vm1216, %v1653, 0.0
    %v1840 = vadd.f32 %v1838, %v1839
    %v1841 = vsel %vm1216, %v1654, 0.0
    %v1842 = vadd.f32 %v1840, %v1841
    %v1843 = vsel %vm1216, %v1655, 0.0
    %v1844 = vadd.f32 %v1842, %v1843
    %v1845 = vsel %vm1216, %v1656, 0.0
    %v1846 = vadd.f32 %v1844, %v1845
    %v1847 = vsel %vm1216, %v1657, 0.0
    %v1848 = vadd.f32 %v1846, %v1847
    %v1849 = vsel %vm1216, %v1658, 0.0
    %v1850 = vadd.f32 %v1848, %v1849
    %v1851 = vsel %vm1216, %v1659, 0.0
    %v1852 = vadd.f32 %v1850, %v1851
    %v1853 = vsel %vm1216, %v1660, 0.0
    %v1854 = vadd.f32 %v1852, %v1853
    %v1855 = vsel %vm1216, %v1661, 0.0
    %v1856 = vadd.f32 %v1854, %v1855
    %v1857 = vsel %vm1216, %v1662, 0.0
    %v1858 = vadd.f32 %v1856, %v1857
    %v1859 = vsel %vm1216, %v1663, 0.0
    %v1860 = vadd.f32 %v1858, %v1859
    %v1861 = vsel %vm1216, %v1664, 0.0
    %v1862 = vadd.f32 %v1860, %v1861
    %v1863 = vsel %vm1216, %v1665, 0.0
    %v1864 = vadd.f32 %v1862, %v1863
    %v1865 = vsel %vm1216, %v1666, 0.0
    %v1866 = vadd.f32 %v1864, %v1865
    %v1867 = vsel %vm1216, %v1667, 0.0
    %v1868 = vadd.f32 %v1866, %v1867
    %v1869 = vsel %vm1216, %v1668, 0.0
    %v1870 = vadd.f32 %v1868, %v1869
    %v1871 = vsel %vm1216, %v1669, 0.0
    %v1872 = vadd.f32 %v1870, %v1871
    %v1873 = vsel %vm1216, %v1670, 0.0
    %v1874 = vadd.f32 %v1872, %v1873
    %v1875 = vsel %vm1216, %v1671, 0.0
    %v1876 = vadd.f32 %v1874, %v1875
    %v1877 = vsel %vm1216, %v1672, 0.0
    %v1878 = vadd.f32 %v1876, %v1877
    %v1879 = vsel %vm1216, %v1673, 0.0
    %v1880 = vadd.f32 %v1878, %v1879
    %v1881 = vsel %vm1216, %v1674, 0.0
    %v1882 = vadd.f32 %v1880, %v1881
    %v1883 = vsel %vm1216, %v1675, 0.0
    %v1884 = vadd.f32 %v1882, %v1883
    %v1885 = vsel %vm1216, %v1676, 0.0
    %v1886 = vadd.f32 %v1884, %v1885
    %v1887 = vsel %vm1216, %v1677, 0.0
    %v1888 = vadd.f32 %v1886, %v1887
    %v1889 = vsel %vm1216, %v1678, 0.0
    %v1890 = vadd.f32 %v1888, %v1889
    %v1891 = vsel %vm1216, %v1679, 0.0
    %v1892 = vadd.f32 %v1890, %v1891
    %v1893 = vsel %vm1216, %v1680, 0.0
    %v1894 = vadd.f32 %v1892, %v1893
    %v1895 = vsel %vm1216, %v1681, 0.0
    %v1896 = vadd.f32 %v1894, %v1895
    %v1897 = vsel %vm1216, %v1682, 0.0
    %v1898 = vadd.f32 %v1896, %v1897
    %v1899 = vsel %vm1216, %v1683, 0.0
    %v1900 = vadd.f32 %v1898, %v1899
    %v1901 = vsel %vm1216, %v1684, 0.0
    %v1902 = vadd.f32 %v1900, %v1901
    %v1903 = vsel %vm1216, %v1685, 0.0
    %v1904 = vadd.f32 %v1902, %v1903
    %v1905 = vsel %vm1216, %v1686, 0.0
    %v1906 = vadd.f32 %v1904, %v1905
    %v1907 = vsel %vm1216, %v1687, 0.0
    %v1908 = vadd.f32 %v1906, %v1907
    %v1909 = vsel %vm1216, %v1688, 0.0
    %v1910 = vadd.f32 %v1908, %v1909
    %v1911 = vsel %vm1216, %v1689, 0.0
    %v1912 = vadd.f32 %v1910, %v1911
    %v1913 = vsel %vm1216, %v1690, 0.0
    %v1914 = vadd.f32 %v1912, %v1913
    %v1915 = vsel %vm1216, %v1691, 0.0
    %v1916 = vadd.f32 %v1914, %v1915
    %v1917 = vsel %vm1216, %v1692, 0.0
    %v1918 = vadd.f32 %v1916, %v1917
    %v1919 = vsel %vm1216, %v1693, 0.0
    %v1920 = vadd.f32 %v1918, %v1919
    %v1921 = vsel %vm1216, %v1694, 0.0
    %v1922 = vadd.f32 %v1920, %v1921
    %v1923 = vsel %vm1216, %v1695, 0.0
    %v1924 = vadd.f32 %v1922, %v1923
    %v1925 = vsel %vm1216, %v1696, 0.0
    %v1926 = vadd.f32 %v1924, %v1925
    %v1927 = vsel %vm1216, %v1697, 0.0
    %v1928 = vadd.f32 %v1926, %v1927
    %v1929 = vsel %vm1216, %v1698, 0.0
    %v1930 = vadd.f32 %v1928, %v1929
    %v1931 = vsel %vm1216, %v1699, 0.0
    %v1932 = vadd.f32 %v1930, %v1931
    %v1933 = vsel %vm1216, %v1700, 0.0
    %v1934 = vadd.f32 %v1932, %v1933
    %v1935 = vsel %vm1216, %v1701, 0.0
    %v1936 = vadd.f32 %v1934, %v1935
    %v1937 = vsel %vm1216, %v1702, 0.0
    %v1938 = vadd.f32 %v1936, %v1937
    %v1939 = vsel %vm1216, %v1703, 0.0
    %v1940 = vadd.f32 %v1938, %v1939
    %v1941 = vsel %vm1216, %v1704, 0.0
    %v1942 = vadd.f32 %v1940, %v1941
    %v1943 = vsel %vm1216, %v1705, 0.0
    %v1944 = vadd.f32 %v1942, %v1943
    %v1945 = vsel %vm1216, %v1706, 0.0
    %v1946 = vadd.f32 %v1944, %v1945
    %v1947 = vsel %vm1216, %v1707, 0.0
    %v1948 = vadd.f32 %v1946, %v1947
    %v1949 = vrot.slane %v1948, 4
    %v1950 = vadd.f32 %v1948, %v1949
    %v1951 = vrot.slane %v1950, 2
    %v1952 = vadd.f32 %v1950, %v1951
    %v1953 = vrot.slane %v1952, 1
    %v1954 = vadd.f32 %v1952, %v1953
    %v1955 = vmul.f32 %v1954, %v1464
    %v1956 = vadd.f32 %v1955, 1e-05
    %v1957 = vrsqrt.pop %v1956
    %v1958 = vmul.f32 %v1466, %v1957
    %v1959 = vmul.f32 %v1467, %v1957
    %v1960 = vmul.f32 %v1468, %v1957
    %v1961 = vmul.f32 %v1469, %v1957
    %v1962 = vmul.f32 %v1470, %v1957
    %v1963 = vmul.f32 %v1471, %v1957
    %v1964 = vmul.f32 %v1472, %v1957
    %v1965 = vmul.f32 %v1473, %v1957
    %v1966 = vmul.f32 %v1474, %v1957
    %v1967 = vmul.f32 %v1475, %v1957
    %v1968 = vmul.f32 %v1476, %v1957
    %v1969 = vmul.f32 %v1477, %v1957
    %v1970 = vmul.f32 %v1478, %v1957
    %v1971 = vmul.f32 %v1479, %v1957
    %v1972 = vmul.f32 %v1480, %v1957
    %v1973 = vmul.f32 %v1481, %v1957
    %v1974 = vmul.f32 %v1482, %v1957
    %v1975 = vmul.f32 %v1483, %v1957
    %v1976 = vmul.f32 %v1484, %v1957
    %v1977 = vmul.f32 %v1485, %v1957
    %v1978 = vmul.f32 %v1486, %v1957
    %v1979 = vmul.f32 %v1487, %v1957
    %v1980 = vmul.f32 %v1488, %v1957
    %v1981 = vmul.f32 %v1489, %v1957
    %v1982 = vmul.f32 %v1490, %v1957
    %v1983 = vmul.f32 %v1491, %v1957
    %v1984 = vmul.f32 %v1492, %v1957
    %v1985 = vmul.f32 %v1493, %v1957
    %v1986 = vmul.f32 %v1494, %v1957
    %v1987 = vmul.f32 %v1495, %v1957
    %v1988 = vmul.f32 %v1496, %v1957
    %v1989 = vmul.f32 %v1497, %v1957
    %v1990 = vmul.f32 %v1498, %v1957
    %v1991 = vmul.f32 %v1499, %v1957
    %v1992 = vmul.f32 %v1500, %v1957
    %v1993 = vmul.f32 %v1501, %v1957
    %v1994 = vmul.f32 %v1502, %v1957
    %v1995 = vmul.f32 %v1503, %v1957
    %v1996 = vmul.f32 %v1504, %v1957
    %v1997 = vmul.f32 %v1505, %v1957
    %v1998 = vmul.f32 %v1506, %v1957
    %v1999 = vmul.f32 %v1507, %v1957
    %v2000 = vmul.f32 %v1508, %v1957
    %v2001 = vmul.f32 %v1509, %v1957
    %v2002 = vmul.f32 %v1510, %v1957
    %v2003 = vmul.f32 %v1511, %v1957
    %v2004 = vmul.f32 %v1512, %v1957
    %v2005 = vmul.f32 %v1513, %v1957
    %v2006 = vmul.f32 %v1514, %v1957
    %v2007 = vmul.f32 %v1515, %v1957
    %v2008 = vmul.f32 %v1516, %v1957
    %v2009 = vmul.f32 %v1517, %v1957
    %v2010 = vmul.f32 %v1518, %v1957
    %v2011 = vmul.f32 %v1519, %v1957
    %v2012 = vmul.f32 %v1520, %v1957
    %v2013 = vmul.f32 %v1521, %v1957
    %v2014 = vmul.f32 %v1522, %v1957
    %v2015 = vmul.f32 %v1523, %v1957
    %v2016 = vmul.f32 %v1524, %v1957
    %v2017 = vmul.f32 %v1525, %v1957
    %v2018 = vmul.f32 %v1526, %v1957
    %v2019 = vmul.f32 %v1527, %v1957
    %v2020 = vmul.f32 %v1528, %v1957
    %v2021 = vmul.f32 %v1529, %v1957
    %v2022 = vmul.f32 %v1530, %v1957
    %v2023 = vmul.f32 %v1531, %v1957
    %v2024 = vmul.f32 %v1532, %v1957
    %v2025 = vmul.f32 %v1533, %v1957
    %v2026 = vmul.f32 %v1534, %v1957
    %v2027 = vmul.f32 %v1535, %v1957
    %v2028 = vmul.f32 %v1536, %v1957
    %v2029 = vmul.f32 %v1537, %v1957
    %v2030 = vmul.f32 %v1538, %v1957
    %v2031 = vmul.f32 %v1539, %v1957
    %v2032 = vmul.f32 %v1540, %v1957
    %v2033 = vmul.f32 %v1541, %v1957
    %v2034 = vmul.f32 %v1542, %v1957
    %v2035 = vmul.f32 %v1543, %v1957
    %v2036 = vmul.f32 %v1544, %v1957
    %v2037 = vmul.f32 %v1545, %v1957
    %v2038 = vmul.f32 %v1546, %v1957
    %v2039 = vmul.f32 %v1547, %v1957
    %v2040 = vmul.f32 %v1548, %v1957
    %v2041 = vmul.f32 %v1549, %v1957
    %v2042 = vmul.f32 %v1550, %v1957
    %v2043 = vmul.f32 %v1551, %v1957
    %v2044 = vmul.f32 %v1552, %v1957
    %v2045 = vmul.f32 %v1553, %v1957
    %v2046 = vmul.f32 %v1554, %v1957
    %v2047 = vmul.f32 %v1555, %v1957
    %v2048 = vmul.f32 %v1556, %v1957
    %v2049 = vmul.f32 %v1557, %v1957
    %v2050 = vmul.f32 %v1558, %v1957
    %v2051 = vmul.f32 %v1559, %v1957
    %v2052 = vmul.f32 %v1560, %v1957
    %v2053 = vmul.f32 %v1561, %v1957
    %v2054 = vmul.f32 %v1562, %v1957
    %v2055 = vmul.f32 %v1563, %v1957
    %v2056 = vmul.f32 %v1564, %v1957
    %v2057 = vmul.f32 %v1565, %v1957
    %v2058 = vmul.f32 %v1566, %v1957
    %v2059 = vmul.f32 %v1567, %v1957
    %v2060 = vmul.f32 %v1568, %v1957
    %v2061 = vmul.f32 %v1569, %v1957
    %v2062 = vmul.f32 %v1570, %v1957
    %v2063 = vmul.f32 %v1571, %v1957
    %v2064 = vmul.f32 %v1572, %v1957
    %v2065 = vmul.f32 %v1573, %v1957
    %v2066 = vmul.f32 %v1574, %v1957
    %v2067 = vmul.f32 %v1575, %v1957
    %v2068 = vmul.f32 %v1576, %v1957
    %v2069 = vmul.f32 %v1577, %v1957
    %v2070 = vmul.f32 %v1578, %v1957
    %v2071 = vmul.f32 %v1579, %v1957
    %v2072 = vmul.f32 %v1580, %v1957
    %v2073 = vmul.f32 %v1581, %v1957
    %v2074 = vmul.f32 %v1582, %v1957
    %v2075 = vmul.f32 %v1583, %v1957
    %v2076 = vmul.f32 %v1584, %v1957
    %v2077 = vmul.f32 %v1585, %v1957
    %v2078 = vmul.f32 %v1586, %v1957
    %v2079 = vld [vmem:[%s2 + $0x1] sm:$0x1]
    %v2080 = vlaneseq
    %v2081 = vshrl.u32 %v2080, 7
    %v2082 = vsub.s32 0, %v2081
    %v2083 = vrot.slane %v2079, %v2082
    %v2084 = vmul.f32 %v1958, %v2083
    %v2085 = vmul.f32 %v1959, %v2083
    %v2086 = vmul.f32 %v1960, %v2083
    %v2087 = vmul.f32 %v1961, %v2083
    %v2088 = vmul.f32 %v1962, %v2083
    %v2089 = vmul.f32 %v1963, %v2083
    %v2090 = vmul.f32 %v1964, %v2083
    %v2091 = vmul.f32 %v1965, %v2083
    %v2092 = vmul.f32 %v1966, %v2083
    %v2093 = vmul.f32 %v1967, %v2083
    %v2094 = vmul.f32 %v1968, %v2083
    %v2095 = vmul.f32 %v1969, %v2083
    %v2096 = vmul.f32 %v1970, %v2083
    %v2097 = vmul.f32 %v1971, %v2083
    %v2098 = vmul.f32 %v1972, %v2083
    %v2099 = vmul.f32 %v1973, %v2083
    %v2100 = vmul.f32 %v1974, %v2083
    %v2101 = vmul.f32 %v1975, %v2083
    %v2102 = vmul.f32 %v1976, %v2083
    %v2103 = vmul.f32 %v1977, %v2083
    %v2104 = vmul.f32 %v1978, %v2083
    %v2105 = vmul.f32 %v1979, %v2083
    %v2106 = vmul.f32 %v1980, %v2083
    %v2107 = vmul.f32 %v1981, %v2083
    %v2108 = vmul.f32 %v1982, %v2083
    %v2109 = vmul.f32 %v1983, %v2083
    %v2110 = vmul.f32 %v1984, %v2083
    %v2111 = vmul.f32 %v1985, %v2083
    %v2112 = vmul.f32 %v1986, %v2083
    %v2113 = vmul.f32 %v1987, %v2083
    %v2114 = vmul.f32 %v1988, %v2083
    %v2115 = vmul.f32 %v1989, %v2083
    %v2116 = vmul.f32 %v1990, %v2083
    %v2117 = vmul.f32 %v1991, %v2083
    %v2118 = vmul.f32 %v1992, %v2083
    %v2119 = vmul.f32 %v1993, %v2083
    %v2120 = vmul.f32 %v1994, %v2083
    %v2121 = vmul.f32 %v1995, %v2083
    %v2122 = vmul.f32 %v1996, %v2083
    %v2123 = vmul.f32 %v1997, %v2083
    %v2124 = vmul.f32 %v1998, %v2083
    %v2125 = vmul.f32 %v1999, %v2083
    %v2126 = vmul.f32 %v2000, %v2083
    %v2127 = vmul.f32 %v2001, %v2083
    %v2128 = vmul.f32 %v2002, %v2083
    %v2129 = vmul.f32 %v2003, %v2083
    %v2130 = vmul.f32 %v2004, %v2083
    %v2131 = vmul.f32 %v2005, %v2083
    %v2132 = vmul.f32 %v2006, %v2083
    %v2133 = vmul.f32 %v2007, %v2083
    %v2134 = vmul.f32 %v2008, %v2083
    %v2135 = vmul.f32 %v2009, %v2083
    %v2136 = vmul.f32 %v2010, %v2083
    %v2137 = vmul.f32 %v2011, %v2083
    %v2138 = vmul.f32 %v2012, %v2083
    %v2139 = vmul.f32 %v2013, %v2083
    %v2140 = vmul.f32 %v2014, %v2083
    %v2141 = vmul.f32 %v2015, %v2083
    %v2142 = vmul.f32 %v2016, %v2083
    %v2143 = vmul.f32 %v2017, %v2083
    %v2144 = vmul.f32 %v2018, %v2083
    %v2145 = vmul.f32 %v2019, %v2083
    %v2146 = vmul.f32 %v2020, %v2083
    %v2147 = vmul.f32 %v2021, %v2083
    %v2148 = vmul.f32 %v2022, %v2083
    %v2149 = vmul.f32 %v2023, %v2083
    %v2150 = vmul.f32 %v2024, %v2083
    %v2151 = vmul.f32 %v2025, %v2083
    %v2152 = vmul.f32 %v2026, %v2083
    %v2153 = vmul.f32 %v2027, %v2083
    %v2154 = vmul.f32 %v2028, %v2083
    %v2155 = vmul.f32 %v2029, %v2083
    %v2156 = vmul.f32 %v2030, %v2083
    %v2157 = vmul.f32 %v2031, %v2083
    %v2158 = vmul.f32 %v2032, %v2083
    %v2159 = vmul.f32 %v2033, %v2083
    %v2160 = vmul.f32 %v2034, %v2083
    %v2161 = vmul.f32 %v2035, %v2083
    %v2162 = vmul.f32 %v2036, %v2083
    %v2163 = vmul.f32 %v2037, %v2083
    %v2164 = vmul.f32 %v2038, %v2083
    %v2165 = vmul.f32 %v2039, %v2083
    %v2166 = vmul.f32 %v2040, %v2083
    %v2167 = vmul.f32 %v2041, %v2083
    %v2168 = vmul.f32 %v2042, %v2083
    %v2169 = vmul.f32 %v2043, %v2083
    %v2170 = vmul.f32 %v2044, %v2083
    %v2171 = vmul.f32 %v2045, %v2083
    %v2172 = vmul.f32 %v2046, %v2083
    %v2173 = vmul.f32 %v2047, %v2083
    %v2174 = vmul.f32 %v2048, %v2083
    %v2175 = vmul.f32 %v2049, %v2083
    %v2176 = vmul.f32 %v2050, %v2083
    %v2177 = vmul.f32 %v2051, %v2083
    %v2178 = vmul.f32 %v2052, %v2083
    %v2179 = vmul.f32 %v2053, %v2083
    %v2180 = vmul.f32 %v2054, %v2083
    %v2181 = vmul.f32 %v2055, %v2083
    %v2182 = vmul.f32 %v2056, %v2083
    %v2183 = vmul.f32 %v2057, %v2083
    %v2184 = vmul.f32 %v2058, %v2083
    %v2185 = vmul.f32 %v2059, %v2083
    %v2186 = vmul.f32 %v2060, %v2083
    %v2187 = vmul.f32 %v2061, %v2083
    %v2188 = vmul.f32 %v2062, %v2083
    %v2189 = vmul.f32 %v2063, %v2083
    %v2190 = vmul.f32 %v2064, %v2083
    %v2191 = vmul.f32 %v2065, %v2083
    %v2192 = vmul.f32 %v2066, %v2083
    %v2193 = vmul.f32 %v2067, %v2083
    %v2194 = vmul.f32 %v2068, %v2083
    %v2195 = vmul.f32 %v2069, %v2083
    %v2196 = vmul.f32 %v2070, %v2083
    %v2197 = vmul.f32 %v2071, %v2083
    %v2198 = vmul.f32 %v2072, %v2083
    %v2199 = vmul.f32 %v2073, %v2083
    %v2200 = vmul.f32 %v2074, %v2083
    %v2201 = vmul.f32 %v2075, %v2083
    %v2202 = vmul.f32 %v2076, %v2083
    %v2203 = vmul.f32 %v2077, %v2083
    %v2204 = vmul.f32 %v2078, %v2083
    %v2205 = vld [vmem:[%s2 + $0x2] sm:$0x1]
    %v2206 = vlaneseq
    %v2207 = vshrl.u32 %v2206, 7
    %v2208 = vsub.s32 0, %v2207
    %v2209 = vrot.slane %v2205, %v2208
    %v2210 = vadd.f32 %v2084, %v2209
    %v2211 = vadd.f32 %v2085, %v2209
    %v2212 = vadd.f32 %v2086, %v2209
    %v2213 = vadd.f32 %v2087, %v2209
    %v2214 = vadd.f32 %v2088, %v2209
    %v2215 = vadd.f32 %v2089, %v2209
    %v2216 = vadd.f32 %v2090, %v2209
    %v2217 = vadd.f32 %v2091, %v2209
    %v2218 = vadd.f32 %v2092, %v2209
    %v2219 = vadd.f32 %v2093, %v2209
    %v2220 = vadd.f32 %v2094, %v2209
    %v2221 = vadd.f32 %v2095, %v2209
    %v2222 = vadd.f32 %v2096, %v2209
    %v2223 = vadd.f32 %v2097, %v2209
    %v2224 = vadd.f32 %v2098, %v2209
    %v2225 = vadd.f32 %v2099, %v2209
    %v2226 = vadd.f32 %v2100, %v2209
    %v2227 = vadd.f32 %v2101, %v2209
    %v2228 = vadd.f32 %v2102, %v2209
    %v2229 = vadd.f32 %v2103, %v2209
    %v2230 = vadd.f32 %v2104, %v2209
    %v2231 = vadd.f32 %v2105, %v2209
    %v2232 = vadd.f32 %v2106, %v2209
    %v2233 = vadd.f32 %v2107, %v2209
    %v2234 = vadd.f32 %v2108, %v2209
    %v2235 = vadd.f32 %v2109, %v2209
    %v2236 = vadd.f32 %v2110, %v2209
    %v2237 = vadd.f32 %v2111, %v2209
    %v2238 = vadd.f32 %v2112, %v2209
    %v2239 = vadd.f32 %v2113, %v2209
    %v2240 = vadd.f32 %v2114, %v2209
    %v2241 = vadd.f32 %v2115, %v2209
    %v2242 = vadd.f32 %v2116, %v2209
    %v2243 = vadd.f32 %v2117, %v2209
    %v2244 = vadd.f32 %v2118, %v2209
    %v2245 = vadd.f32 %v2119, %v2209
    %v2246 = vadd.f32 %v2120, %v2209
    %v2247 = vadd.f32 %v2121, %v2209
    %v2248 = vadd.f32 %v2122, %v2209
    %v2249 = vadd.f32 %v2123, %v2209
    %v2250 = vadd.f32 %v2124, %v2209
    %v2251 = vadd.f32 %v2125, %v2209
    %v2252 = vadd.f32 %v2126, %v2209
    %v2253 = vadd.f32 %v2127, %v2209
    %v2254 = vadd.f32 %v2128, %v2209
    %v2255 = vadd.f32 %v2129, %v2209
    %v2256 = vadd.f32 %v2130, %v2209
    %v2257 = vadd.f32 %v2131, %v2209
    %v2258 = vadd.f32 %v2132, %v2209
    %v2259 = vadd.f32 %v2133, %v2209
    %v2260 = vadd.f32 %v2134, %v2209
    %v2261 = vadd.f32 %v2135, %v2209
    %v2262 = vadd.f32 %v2136, %v2209
    %v2263 = vadd.f32 %v2137, %v2209
    %v2264 = vadd.f32 %v2138, %v2209
    %v2265 = vadd.f32 %v2139, %v2209
    %v2266 = vadd.f32 %v2140, %v2209
    %v2267 = vadd.f32 %v2141, %v2209
    %v2268 = vadd.f32 %v2142, %v2209
    %v2269 = vadd.f32 %v2143, %v2209
    %v2270 = vadd.f32 %v2144, %v2209
    %v2271 = vadd.f32 %v2145, %v2209
    %v2272 = vadd.f32 %v2146, %v2209
    %v2273 = vadd.f32 %v2147, %v2209
    %v2274 = vadd.f32 %v2148, %v2209
    %v2275 = vadd.f32 %v2149, %v2209
    %v2276 = vadd.f32 %v2150, %v2209
    %v2277 = vadd.f32 %v2151, %v2209
    %v2278 = vadd.f32 %v2152, %v2209
    %v2279 = vadd.f32 %v2153, %v2209
    %v2280 = vadd.f32 %v2154, %v2209
    %v2281 = vadd.f32 %v2155, %v2209
    %v2282 = vadd.f32 %v2156, %v2209
    %v2283 = vadd.f32 %v2157, %v2209
    %v2284 = vadd.f32 %v2158, %v2209
    %v2285 = vadd.f32 %v2159, %v2209
    %v2286 = vadd.f32 %v2160, %v2209
    %v2287 = vadd.f32 %v2161, %v2209
    %v2288 = vadd.f32 %v2162, %v2209
    %v2289 = vadd.f32 %v2163, %v2209
    %v2290 = vadd.f32 %v2164, %v2209
    %v2291 = vadd.f32 %v2165, %v2209
    %v2292 = vadd.f32 %v2166, %v2209
    %v2293 = vadd.f32 %v2167, %v2209
    %v2294 = vadd.f32 %v2168, %v2209
    %v2295 = vadd.f32 %v2169, %v2209
    %v2296 = vadd.f32 %v2170, %v2209
    %v2297 = vadd.f32 %v2171, %v2209
    %v2298 = vadd.f32 %v2172, %v2209
    %v2299 = vadd.f32 %v2173, %v2209
    %v2300 = vadd.f32 %v2174, %v2209
    %v2301 = vadd.f32 %v2175, %v2209
    %v2302 = vadd.f32 %v2176, %v2209
    %v2303 = vadd.f32 %v2177, %v2209
    %v2304 = vadd.f32 %v2178, %v2209
    %v2305 = vadd.f32 %v2179, %v2209
    %v2306 = vadd.f32 %v2180, %v2209
    %v2307 = vadd.f32 %v2181, %v2209
    %v2308 = vadd.f32 %v2182, %v2209
    %v2309 = vadd.f32 %v2183, %v2209
    %v2310 = vadd.f32 %v2184, %v2209
    %v2311 = vadd.f32 %v2185, %v2209
    %v2312 = vadd.f32 %v2186, %v2209
    %v2313 = vadd.f32 %v2187, %v2209
    %v2314 = vadd.f32 %v2188, %v2209
    %v2315 = vadd.f32 %v2189, %v2209
    %v2316 = vadd.f32 %v2190, %v2209
    %v2317 = vadd.f32 %v2191, %v2209
    %v2318 = vadd.f32 %v2192, %v2209
    %v2319 = vadd.f32 %v2193, %v2209
    %v2320 = vadd.f32 %v2194, %v2209
    %v2321 = vadd.f32 %v2195, %v2209
    %v2322 = vadd.f32 %v2196, %v2209
    %v2323 = vadd.f32 %v2197, %v2209
    %v2324 = vadd.f32 %v2198, %v2209
    %v2325 = vadd.f32 %v2199, %v2209
    %v2326 = vadd.f32 %v2200, %v2209
    %v2327 = vadd.f32 %v2201, %v2209
    %v2328 = vadd.f32 %v2202, %v2209
    %v2329 = vadd.f32 %v2203, %v2209
    %v2330 = vadd.f32 %v2204, %v2209
    %v2331 = vmax.f32 %v2210, 0.0
    %v2332 = vmax.f32 %v2211, 0.0
    %v2333 = vmax.f32 %v2212, 0.0
    %v2334 = vmax.f32 %v2213, 0.0
    %v2335 = vmax.f32 %v2214, 0.0
    %v2336 = vmax.f32 %v2215, 0.0
    %v2337 = vmax.f32 %v2216, 0.0
    %v2338 = vmax.f32 %v2217, 0.0
    %v2339 = vmax.f32 %v2218, 0.0
    %v2340 = vmax.f32 %v2219, 0.0
    %v2341 = vmax.f32 %v2220, 0.0
    %v2342 = vmax.f32 %v2221, 0.0
    %v2343 = vmax.f32 %v2222, 0.0
    %v2344 = vmax.f32 %v2223, 0.0
    %v2345 = vmax.f32 %v2224, 0.0
    %v2346 = vmax.f32 %v2225, 0.0
    %v2347 = vmax.f32 %v2226, 0.0
    %v2348 = vmax.f32 %v2227, 0.0
    %v2349 = vmax.f32 %v2228, 0.0
    %v2350 = vmax.f32 %v2229, 0.0
    %v2351 = vmax.f32 %v2230, 0.0
    %v2352 = vmax.f32 %v2231, 0.0
    %v2353 = vmax.f32 %v2232, 0.0
    %v2354 = vmax.f32 %v2233, 0.0
    %v2355 = vmax.f32 %v2234, 0.0
    %v2356 = vmax.f32 %v2235, 0.0
    %v2357 = vmax.f32 %v2236, 0.0
    %v2358 = vmax.f32 %v2237, 0.0
    %v2359 = vmax.f32 %v2238, 0.0
    %v2360 = vmax.f32 %v2239, 0.0
    %v2361 = vmax.f32 %v2240, 0.0
    %v2362 = vmax.f32 %v2241, 0.0
    %v2363 = vmax.f32 %v2242, 0.0
    %v2364 = vmax.f32 %v2243, 0.0
    %v2365 = vmax.f32 %v2244, 0.0
    %v2366 = vmax.f32 %v2245, 0.0
    %v2367 = vmax.f32 %v2246, 0.0
    %v2368 = vmax.f32 %v2247, 0.0
    %v2369 = vmax.f32 %v2248, 0.0
    %v2370 = vmax.f32 %v2249, 0.0
    %v2371 = vmax.f32 %v2250, 0.0
    %v2372 = vmax.f32 %v2251, 0.0
    %v2373 = vmax.f32 %v2252, 0.0
    %v2374 = vmax.f32 %v2253, 0.0
    %v2375 = vmax.f32 %v2254, 0.0
    %v2376 = vmax.f32 %v2255, 0.0
    %v2377 = vmax.f32 %v2256, 0.0
    %v2378 = vmax.f32 %v2257, 0.0
    %v2379 = vmax.f32 %v2258, 0.0
    %v2380 = vmax.f32 %v2259, 0.0
    %v2381 = vmax.f32 %v2260, 0.0
    %v2382 = vmax.f32 %v2261, 0.0
    %v2383 = vmax.f32 %v2262, 0.0
    %v2384 = vmax.f32 %v2263, 0.0
    %v2385 = vmax.f32 %v2264, 0.0
    %v2386 = vmax.f32 %v2265, 0.0
    %v2387 = vmax.f32 %v2266, 0.0
    %v2388 = vmax.f32 %v2267, 0.0
    %v2389 = vmax.f32 %v2268, 0.0
    %v2390 = vmax.f32 %v2269, 0.0
    %v2391 = vmax.f32 %v2270, 0.0
    %v2392 = vmax.f32 %v2271, 0.0
    %v2393 = vmax.f32 %v2272, 0.0
    %v2394 = vmax.f32 %v2273, 0.0
    %v2395 = vmax.f32 %v2274, 0.0
    %v2396 = vmax.f32 %v2275, 0.0
    %v2397 = vmax.f32 %v2276, 0.0
    %v2398 = vmax.f32 %v2277, 0.0
    %v2399 = vmax.f32 %v2278, 0.0
    %v2400 = vmax.f32 %v2279, 0.0
    %v2401 = vmax.f32 %v2280, 0.0
    %v2402 = vmax.f32 %v2281, 0.0
    %v2403 = vmax.f32 %v2282, 0.0
    %v2404 = vmax.f32 %v2283, 0.0
    %v2405 = vmax.f32 %v2284, 0.0
    %v2406 = vmax.f32 %v2285, 0.0
    %v2407 = vmax.f32 %v2286, 0.0
    %v2408 = vmax.f32 %v2287, 0.0
    %v2409 = vmax.f32 %v2288, 0.0
    %v2410 = vmax.f32 %v2289, 0.0
    %v2411 = vmax.f32 %v2290, 0.0
    %v2412 = vmax.f32 %v2291, 0.0
    %v2413 = vmax.f32 %v2292, 0.0
    %v2414 = vmax.f32 %v2293, 0.0
    %v2415 = vmax.f32 %v2294, 0.0
    %v2416 = vmax.f32 %v2295, 0.0
    %v2417 = vmax.f32 %v2296, 0.0
    %v2418 = vmax.f32 %v2297, 0.0
    %v2419 = vmax.f32 %v2298, 0.0
    %v2420 = vmax.f32 %v2299, 0.0
    %v2421 = vmax.f32 %v2300, 0.0
    %v2422 = vmax.f32 %v2301, 0.0
    %v2423 = vmax.f32 %v2302, 0.0
    %v2424 = vmax.f32 %v2303, 0.0
    %v2425 = vmax.f32 %v2304, 0.0
    %v2426 = vmax.f32 %v2305, 0.0
    %v2427 = vmax.f32 %v2306, 0.0
    %v2428 = vmax.f32 %v2307, 0.0
    %v2429 = vmax.f32 %v2308, 0.0
    %v2430 = vmax.f32 %v2309, 0.0
    %v2431 = vmax.f32 %v2310, 0.0
    %v2432 = vmax.f32 %v2311, 0.0
    %v2433 = vmax.f32 %v2312, 0.0
    %v2434 = vmax.f32 %v2313, 0.0
    %v2435 = vmax.f32 %v2314, 0.0
    %v2436 = vmax.f32 %v2315, 0.0
    %v2437 = vmax.f32 %v2316, 0.0
    %v2438 = vmax.f32 %v2317, 0.0
    %v2439 = vmax.f32 %v2318, 0.0
    %v2440 = vmax.f32 %v2319, 0.0
    %v2441 = vmax.f32 %v2320, 0.0
    %v2442 = vmax.f32 %v2321, 0.0
    %v2443 = vmax.f32 %v2322, 0.0
    %v2444 = vmax.f32 %v2323, 0.0
    %v2445 = vmax.f32 %v2324, 0.0
    %v2446 = vmax.f32 %v2325, 0.0
    %v2447 = vmax.f32 %v2326, 0.0
    %v2448 = vmax.f32 %v2327, 0.0
    %v2449 = vmax.f32 %v2328, 0.0
    %v2450 = vmax.f32 %v2329, 0.0
    %v2451 = vmax.f32 %v2330, 0.0
    %v2452 = vld [vmem:[%s3] sm:$0xff]
    %v2453 = vld [vmem:[%s3 + $0x8] sm:$0xff]
    %v2454 = vld [vmem:[%s3 + $0x10] sm:$0xff]
    %v2455 = vld [vmem:[%s3 + $0x18] sm:$0xff]
    %v2456 = vld [vmem:[%s3 + $0x20] sm:$0xff]
    %v2457 = vld [vmem:[%s3 + $0x28] sm:$0xff]
    %v2458 = vld [vmem:[%s3 + $0x30] sm:$0xff]
    %v2459 = vld [vmem:[%s3 + $0x38] sm:$0xff]
    %v2460 = vld [vmem:[%s3 + $0x40] sm:$0xff]
    %v2461 = vld [vmem:[%s3 + $0x48] sm:$0xff]
    %v2462 = vld [vmem:[%s3 + $0x50] sm:$0xff]
    %v2463 = vld [vmem:[%s3 + $0x58] sm:$0xff]
    %v2464 = vld [vmem:[%s3 + $0x60] sm:$0xff]
    %v2465 = vld [vmem:[%s3 + $0x68] sm:$0xff]
    %v2466 = vld [vmem:[%s3 + $0x70] sm:$0xff]
    %v2467 = vld [vmem:[%s3 + $0x78] sm:$0xff]
    %v2468 = vld [vmem:[%s3 + $0x80] sm:$0xff]
    %v2469 = vld [vmem:[%s3 + $0x88] sm:$0xff]
    %v2470 = vld [vmem:[%s3 + $0x90] sm:$0xff]
    %v2471 = vld [vmem:[%s3 + $0x98] sm:$0xff]
    %v2472 = vld [vmem:[%s3 + $0xa0] sm:$0xff]
    %v2473 = vld [vmem:[%s3 + $0xa8] sm:$0xff]
    %v2474 = vld [vmem:[%s3 + $0xb0] sm:$0xff]
    %v2475 = vld [vmem:[%s3 + $0xb8] sm:$0xff]
    %v2476 = vld [vmem:[%s3 + $0xc0] sm:$0xff]
    %v2477 = vld [vmem:[%s3 + $0xc8] sm:$0xff]
    %v2478 = vld [vmem:[%s3 + $0xd0] sm:$0xff]
    %v2479 = vld [vmem:[%s3 + $0xd8] sm:$0xff]
    %v2480 = vld [vmem:[%s3 + $0xe0] sm:$0xff]
    %v2481 = vld [vmem:[%s3 + $0xe8] sm:$0xff]
    %v2482 = vld [vmem:[%s3 + $0xf0] sm:$0xff]
    %v2483 = vld [vmem:[%s3 + $0xf8] sm:$0xff]
    %v2484 = vld [vmem:[%s3 + $0x100] sm:$0xff]
    %v2485 = vld [vmem:[%s3 + $0x108] sm:$0xff]
    %v2486 = vld [vmem:[%s3 + $0x110] sm:$0xff]
    %v2487 = vld [vmem:[%s3 + $0x118] sm:$0xff]
    %v2488 = vld [vmem:[%s3 + $0x120] sm:$0xff]
    %v2489 = vld [vmem:[%s3 + $0x128] sm:$0xff]
    %v2490 = vld [vmem:[%s3 + $0x130] sm:$0xff]
    %v2491 = vld [vmem:[%s3 + $0x138] sm:$0xff]
    %v2492 = vld [vmem:[%s3 + $0x140] sm:$0xff]
    %v2493 = vld [vmem:[%s3 + $0x148] sm:$0xff]
    %v2494 = vld [vmem:[%s3 + $0x150] sm:$0xff]
    %v2495 = vld [vmem:[%s3 + $0x158] sm:$0xff]
    %v2496 = vld [vmem:[%s3 + $0x160] sm:$0xff]
    %v2497 = vld [vmem:[%s3 + $0x168] sm:$0xff]
    %v2498 = vld [vmem:[%s3 + $0x170] sm:$0xff]
    %v2499 = vld [vmem:[%s3 + $0x178] sm:$0xff]
    %v2500 = vld [vmem:[%s3 + $0x180] sm:$0xff]
    %v2501 = vld [vmem:[%s3 + $0x188] sm:$0xff]
    %v2502 = vld [vmem:[%s3 + $0x190] sm:$0xff]
    %v2503 = vld [vmem:[%s3 + $0x198] sm:$0xff]
    %v2504 = vld [vmem:[%s3 + $0x1a0] sm:$0xff]
    %v2505 = vld [vmem:[%s3 + $0x1a8] sm:$0xff]
    %v2506 = vld [vmem:[%s3 + $0x1b0] sm:$0xff]
    %v2507 = vld [vmem:[%s3 + $0x1b8] sm:$0xff]
    %v2508 = vld [vmem:[%s3 + $0x1c0] sm:$0xff]
    %v2509 = vld [vmem:[%s3 + $0x1c8] sm:$0xff]
    %v2510 = vld [vmem:[%s3 + $0x1d0] sm:$0xff]
    %v2511 = vld [vmem:[%s3 + $0x1d8] sm:$0xff]
    %v2512 = vld [vmem:[%s3 + $0x1e0] sm:$0xff]
    %v2513 = vld [vmem:[%s3 + $0x1e8] sm:$0xff]
    %v2514 = vld [vmem:[%s3 + $0x1f0] sm:$0xff]
    %v2515 = vld [vmem:[%s3 + $0x1f8] sm:$0xff]
    %v2516 = vld [vmem:[%s3 + $0x200] sm:$0xff]
    %v2517 = vld [vmem:[%s3 + $0x208] sm:$0xff]
    %v2518 = vld [vmem:[%s3 + $0x210] sm:$0xff]
    %v2519 = vld [vmem:[%s3 + $0x218] sm:$0xff]
    %v2520 = vld [vmem:[%s3 + $0x220] sm:$0xff]
    %v2521 = vld [vmem:[%s3 + $0x228] sm:$0xff]
    %v2522 = vld [vmem:[%s3 + $0x230] sm:$0xff]
    %v2523 = vld [vmem:[%s3 + $0x238] sm:$0xff]
    %vm2524 = vcmask 588800
    %v2526 = vsel %vm2524, %v2459, 0
    %v2529 = vsel %vm2524, %v2467, 0
    %v2532 = vsel %vm2524, %v2475, 0
    %v2535 = vsel %vm2524, %v2483, 0
    %v2538 = vsel %vm2524, %v2491, 0
    %v2541 = vsel %vm2524, %v2499, 0
    %v2544 = vsel %vm2524, %v2507, 0
    %v2547 = vsel %vm2524, %v2515, 0
    %v2550 = vsel %vm2524, %v2523, 0
    %2552 = vmatprep.subr.mxu0 0.0
    %2553 = vmatpush1.msra.mxu0 %v2346
    %2554 = vmatprep.subr.mxu0 0.0
    %2555 = vmatpush1.msra.mxu0 %v2345
    %2556 = vmatprep.subr.mxu0 0.0
    %2557 = vmatpush1.msra.mxu0 %v2344
    %2558 = vmatprep.subr.mxu0 0.0
    %2559 = vmatpush1.msra.mxu0 %v2343
    %2560 = vmatprep.subr.mxu0 0.0
    %2561 = vmatpush1.msra.mxu0 %v2342
    %2562 = vmatprep.subr.mxu0 0.0
    %2563 = vmatpush1.msra.mxu0 %v2341
    %2564 = vmatprep.subr.mxu0 0.0
    %2565 = vmatpush1.msra.mxu0 %v2340
    %2566 = vmatprep.subr.mxu0 0.0
    %2567 = vmatpush1.msra.mxu0 %v2339
    %2568 = vmatprep.subr.mxu0 0.0
    %2569 = vmatpush1.msra.mxu0 %v2338
    %2570 = vmatprep.subr.mxu0 0.0
    %2571 = vmatpush1.msra.mxu0 %v2337
    %2572 = vmatprep.subr.mxu0 0.0
    %2573 = vmatpush1.msra.mxu0 %v2336
    %2574 = vmatprep.subr.mxu0 0.0
    %2575 = vmatpush1.msra.mxu0 %v2335
    %2576 = vmatprep.subr.mxu0 0.0
    %2577 = vmatpush1.msra.mxu0 %v2334
    %2578 = vmatprep.subr.mxu0 0.0
    %2579 = vmatpush1.msra.mxu0 %v2333
    %2580 = vmatprep.subr.mxu0 0.0
    %2581 = vmatpush1.msra.mxu0 %v2332
    %2582 = vmatprep.subr.mxu0 0.0
    %2583 = vmatpush1.msra.mxu0 %v2331
    %2584 = vmatprep.subr.mxu0 0.0
    %2585 = vmatpush2.msra.mxu0 %v2362
    %2586 = vmatprep.subr.mxu0 0.0
    %2587 = vmatpush2.msra.mxu0 %v2361
    %2588 = vmatprep.subr.mxu0 0.0
    %2589 = vmatpush2.msra.mxu0 %v2360
    %2590 = vmatprep.subr.mxu0 0.0
    %2591 = vmatpush2.msra.mxu0 %v2359
    %2592 = vmatprep.subr.mxu0 0.0
    %2593 = vmatpush2.msra.mxu0 %v2358
    %2594 = vmatprep.subr.mxu0 0.0
    %2595 = vmatpush2.msra.mxu0 %v2357
    %2596 = vmatprep.subr.mxu0 0.0
    %2597 = vmatpush2.msra.mxu0 %v2356
    %2598 = vmatprep.subr.mxu0 0.0
    %2599 = vmatpush2.msra.mxu0 %v2355
    %2600 = vmatprep.subr.mxu0 0.0
    %2601 = vmatpush2.msra.mxu0 %v2354
    %2602 = vmatprep.subr.mxu0 0.0
    %2603 = vmatpush2.msra.mxu0 %v2353
    %2604 = vmatprep.subr.mxu0 0.0
    %2605 = vmatpush2.msra.mxu0 %v2352
    %2606 = vmatprep.subr.mxu0 0.0
    %2607 = vmatpush2.msra.mxu0 %v2351
    %2608 = vmatprep.subr.mxu0 0.0
    %2609 = vmatpush2.msra.mxu0 %v2350
    %2610 = vmatprep.subr.mxu0 0.0
    %2611 = vmatpush2.msra.mxu0 %v2349
    %2612 = vmatprep.subr.mxu0 0.0
    %2613 = vmatpush2.msra.mxu0 %v2348
    %2614 = vmatprep.subr.mxu0 0.0
    %2615 = vmatpush2.msra.mxu0 %v2347
    %2616 = vmatprep.mubr.f32.mxu0 %v2453
    %2617 = vmatmul.mubr.f32.gmra.mxu0 %v2452
    %v2618 = vpop.f32.mrf.mxu0
    %v2619 = vadd.f32 0.0, %v2618
    %v2620 = vpop.f32.mrf.mxu0
    %2621 = vmatprep.mubr.f32.mxu0 %v2461
    %2622 = vmatmul.mubr.f32.gmra.mxu0 %v2460
    %v2623 = vpop.f32.mrf.mxu0
    %v2624 = vadd.f32 0.0, %v2623
    %v2625 = vpop.f32.mrf.mxu0
    %2626 = vmatprep.mubr.f32.mxu0 %v2469
    %2627 = vmatmul.mubr.f32.gmra.mxu0 %v2468
    %v2628 = vpop.f32.mrf.mxu0
    %v2629 = vadd.f32 0.0, %v2628
    %v2630 = vpop.f32.mrf.mxu0
    %2631 = vmatprep.mubr.f32.mxu0 %v2477
    %2632 = vmatmul.mubr.f32.gmra.mxu0 %v2476
    %v2633 = vpop.f32.mrf.mxu0
    %v2634 = vadd.f32 0.0, %v2633
    %v2635 = vpop.f32.mrf.mxu0
    %2636 = vmatprep.mubr.f32.mxu0 %v2485
    %2637 = vmatmul.mubr.f32.gmra.mxu0 %v2484
    %v2638 = vpop.f32.mrf.mxu0
    %v2639 = vadd.f32 0.0, %v2638
    %v2640 = vpop.f32.mrf.mxu0
    %2641 = vmatprep.mubr.f32.mxu0 %v2493
    %2642 = vmatmul.mubr.f32.gmra.mxu0 %v2492
    %v2643 = vpop.f32.mrf.mxu0
    %v2644 = vadd.f32 0.0, %v2643
    %v2645 = vpop.f32.mrf.mxu0
    %2646 = vmatprep.mubr.f32.mxu0 %v2501
    %2647 = vmatmul.mubr.f32.gmra.mxu0 %v2500
    %v2648 = vpop.f32.mrf.mxu0
    %v2649 = vadd.f32 0.0, %v2648
    %v2650 = vpop.f32.mrf.mxu0
    %2651 = vmatprep.mubr.f32.mxu0 %v2509
    %2652 = vmatmul.mubr.f32.gmra.mxu0 %v2508
    %v2653 = vpop.f32.mrf.mxu0
    %v2654 = vadd.f32 0.0, %v2653
    %v2655 = vpop.f32.mrf.mxu0
    %2656 = vmatprep.mubr.f32.mxu0 %v2517
    %2657 = vmatmul.mubr.f32.gmra.mxu0 %v2516
    %v2658 = vpop.f32.mrf.mxu0
    %v2659 = vadd.f32 0.0, %v2658
    %v2660 = vpop.f32.mrf.mxu0
    %2661 = vdwg.mxu0
    %2662 = vmatprep.subr.mxu0 0.0
    %2663 = vmatpush1.msra.mxu0 %v2378
    %2664 = vmatprep.subr.mxu0 0.0
    %2665 = vmatpush1.msra.mxu0 %v2377
    %2666 = vmatprep.subr.mxu0 0.0
    %2667 = vmatpush1.msra.mxu0 %v2376
    %2668 = vmatprep.subr.mxu0 0.0
    %2669 = vmatpush1.msra.mxu0 %v2375
    %2670 = vmatprep.subr.mxu0 0.0
    %2671 = vmatpush1.msra.mxu0 %v2374
    %2672 = vmatprep.subr.mxu0 0.0
    %2673 = vmatpush1.msra.mxu0 %v2373
    %2674 = vmatprep.subr.mxu0 0.0
    %2675 = vmatpush1.msra.mxu0 %v2372
    %2676 = vmatprep.subr.mxu0 0.0
    %2677 = vmatpush1.msra.mxu0 %v2371
    %2678 = vmatprep.subr.mxu0 0.0
    %2679 = vmatpush1.msra.mxu0 %v2370
    %2680 = vmatprep.subr.mxu0 0.0
    %2681 = vmatpush1.msra.mxu0 %v2369
    %2682 = vmatprep.subr.mxu0 0.0
    %2683 = vmatpush1.msra.mxu0 %v2368
    %2684 = vmatprep.subr.mxu0 0.0
    %2685 = vmatpush1.msra.mxu0 %v2367
    %2686 = vmatprep.subr.mxu0 0.0
    %2687 = vmatpush1.msra.mxu0 %v2366
    %2688 = vmatprep.subr.mxu0 0.0
    %2689 = vmatpush1.msra.mxu0 %v2365
    %2690 = vmatprep.subr.mxu0 0.0
    %2691 = vmatpush1.msra.mxu0 %v2364
    %2692 = vmatprep.subr.mxu0 0.0
    %2693 = vmatpush1.msra.mxu0 %v2363
    %2694 = vmatprep.subr.mxu0 0.0
    %2695 = vmatpush2.msra.mxu0 %v2394
    %2696 = vmatprep.subr.mxu0 0.0
    %2697 = vmatpush2.msra.mxu0 %v2393
    %2698 = vmatprep.subr.mxu0 0.0
    %2699 = vmatpush2.msra.mxu0 %v2392
    %2700 = vmatprep.subr.mxu0 0.0
    %2701 = vmatpush2.msra.mxu0 %v2391
    %2702 = vmatprep.subr.mxu0 0.0
    %2703 = vmatpush2.msra.mxu0 %v2390
    %2704 = vmatprep.subr.mxu0 0.0
    %2705 = vmatpush2.msra.mxu0 %v2389
    %2706 = vmatprep.subr.mxu0 0.0
    %2707 = vmatpush2.msra.mxu0 %v2388
    %2708 = vmatprep.subr.mxu0 0.0
    %2709 = vmatpush2.msra.mxu0 %v2387
    %2710 = vmatprep.subr.mxu0 0.0
    %2711 = vmatpush2.msra.mxu0 %v2386
    %2712 = vmatprep.subr.mxu0 0.0
    %2713 = vmatpush2.msra.mxu0 %v2385
    %2714 = vmatprep.subr.mxu0 0.0
    %2715 = vmatpush2.msra.mxu0 %v2384
    %2716 = vmatprep.subr.mxu0 0.0
    %2717 = vmatpush2.msra.mxu0 %v2383
    %2718 = vmatprep.subr.mxu0 0.0
    %2719 = vmatpush2.msra.mxu0 %v2382
    %2720 = vmatprep.subr.mxu0 0.0
    %2721 = vmatpush2.msra.mxu0 %v2381
    %2722 = vmatprep.subr.mxu0 0.0
    %2723 = vmatpush2.msra.mxu0 %v2380
    %2724 = vmatprep.subr.mxu0 0.0
    %2725 = vmatpush2.msra.mxu0 %v2379
    %2726 = vmatprep.mubr.f32.mxu0 %v2455
    %2727 = vmatmul.mubr.f32.gmra.mxu0 %v2454
    %v2728 = vpop.f32.mrf.mxu0
    %v2729 = vadd.f32 %v2619, %v2728
    %v2730 = vpop.f32.mrf.mxu0
    %2731 = vmatprep.mubr.f32.mxu0 %v2463
    %2732 = vmatmul.mubr.f32.gmra.mxu0 %v2462
    %v2733 = vpop.f32.mrf.mxu0
    %v2734 = vadd.f32 %v2624, %v2733
    %v2735 = vpop.f32.mrf.mxu0
    %2736 = vmatprep.mubr.f32.mxu0 %v2471
    %2737 = vmatmul.mubr.f32.gmra.mxu0 %v2470
    %v2738 = vpop.f32.mrf.mxu0
    %v2739 = vadd.f32 %v2629, %v2738
    %v2740 = vpop.f32.mrf.mxu0
    %2741 = vmatprep.mubr.f32.mxu0 %v2479
    %2742 = vmatmul.mubr.f32.gmra.mxu0 %v2478
    %v2743 = vpop.f32.mrf.mxu0
    %v2744 = vadd.f32 %v2634, %v2743
    %v2745 = vpop.f32.mrf.mxu0
    %2746 = vmatprep.mubr.f32.mxu0 %v2487
    %2747 = vmatmul.mubr.f32.gmra.mxu0 %v2486
    %v2748 = vpop.f32.mrf.mxu0
    %v2749 = vadd.f32 %v2639, %v2748
    %v2750 = vpop.f32.mrf.mxu0
    %2751 = vmatprep.mubr.f32.mxu0 %v2495
    %2752 = vmatmul.mubr.f32.gmra.mxu0 %v2494
    %v2753 = vpop.f32.mrf.mxu0
    %v2754 = vadd.f32 %v2644, %v2753
    %v2755 = vpop.f32.mrf.mxu0
    %2756 = vmatprep.mubr.f32.mxu0 %v2503
    %2757 = vmatmul.mubr.f32.gmra.mxu0 %v2502
    %v2758 = vpop.f32.mrf.mxu0
    %v2759 = vadd.f32 %v2649, %v2758
    %v2760 = vpop.f32.mrf.mxu0
    %2761 = vmatprep.mubr.f32.mxu0 %v2511
    %2762 = vmatmul.mubr.f32.gmra.mxu0 %v2510
    %v2763 = vpop.f32.mrf.mxu0
    %v2764 = vadd.f32 %v2654, %v2763
    %v2765 = vpop.f32.mrf.mxu0
    %2766 = vmatprep.mubr.f32.mxu0 %v2519
    %2767 = vmatmul.mubr.f32.gmra.mxu0 %v2518
    %v2768 = vpop.f32.mrf.mxu0
    %v2769 = vadd.f32 %v2659, %v2768
    %v2770 = vpop.f32.mrf.mxu0
    %2771 = vdwg.mxu0
    %2772 = vmatprep.subr.mxu0 0.0
    %2773 = vmatpush1.msra.mxu0 %v2410
    %2774 = vmatprep.subr.mxu0 0.0
    %2775 = vmatpush1.msra.mxu0 %v2409
    %2776 = vmatprep.subr.mxu0 0.0
    %2777 = vmatpush1.msra.mxu0 %v2408
    %2778 = vmatprep.subr.mxu0 0.0
    %2779 = vmatpush1.msra.mxu0 %v2407
    %2780 = vmatprep.subr.mxu0 0.0
    %2781 = vmatpush1.msra.mxu0 %v2406
    %2782 = vmatprep.subr.mxu0 0.0
    %2783 = vmatpush1.msra.mxu0 %v2405
    %2784 = vmatprep.subr.mxu0 0.0
    %2785 = vmatpush1.msra.mxu0 %v2404
    %2786 = vmatprep.subr.mxu0 0.0
    %2787 = vmatpush1.msra.mxu0 %v2403
    %2788 = vmatprep.subr.mxu0 0.0
    %2789 = vmatpush1.msra.mxu0 %v2402
    %2790 = vmatprep.subr.mxu0 0.0
    %2791 = vmatpush1.msra.mxu0 %v2401
    %2792 = vmatprep.subr.mxu0 0.0
    %2793 = vmatpush1.msra.mxu0 %v2400
    %2794 = vmatprep.subr.mxu0 0.0
    %2795 = vmatpush1.msra.mxu0 %v2399
    %2796 = vmatprep.subr.mxu0 0.0
    %2797 = vmatpush1.msra.mxu0 %v2398
    %2798 = vmatprep.subr.mxu0 0.0
    %2799 = vmatpush1.msra.mxu0 %v2397
    %2800 = vmatprep.subr.mxu0 0.0
    %2801 = vmatpush1.msra.mxu0 %v2396
    %2802 = vmatprep.subr.mxu0 0.0
    %2803 = vmatpush1.msra.mxu0 %v2395
    %2804 = vmatprep.subr.mxu0 0.0
    %2805 = vmatpush2.msra.mxu0 %v2426
    %2806 = vmatprep.subr.mxu0 0.0
    %2807 = vmatpush2.msra.mxu0 %v2425
    %2808 = vmatprep.subr.mxu0 0.0
    %2809 = vmatpush2.msra.mxu0 %v2424
    %2810 = vmatprep.subr.mxu0 0.0
    %2811 = vmatpush2.msra.mxu0 %v2423
    %2812 = vmatprep.subr.mxu0 0.0
    %2813 = vmatpush2.msra.mxu0 %v2422
    %2814 = vmatprep.subr.mxu0 0.0
    %2815 = vmatpush2.msra.mxu0 %v2421
    %2816 = vmatprep.subr.mxu0 0.0
    %2817 = vmatpush2.msra.mxu0 %v2420
    %2818 = vmatprep.subr.mxu0 0.0
    %2819 = vmatpush2.msra.mxu0 %v2419
    %2820 = vmatprep.subr.mxu0 0.0
    %2821 = vmatpush2.msra.mxu0 %v2418
    %2822 = vmatprep.subr.mxu0 0.0
    %2823 = vmatpush2.msra.mxu0 %v2417
    %2824 = vmatprep.subr.mxu0 0.0
    %2825 = vmatpush2.msra.mxu0 %v2416
    %2826 = vmatprep.subr.mxu0 0.0
    %2827 = vmatpush2.msra.mxu0 %v2415
    %2828 = vmatprep.subr.mxu0 0.0
    %2829 = vmatpush2.msra.mxu0 %v2414
    %2830 = vmatprep.subr.mxu0 0.0
    %2831 = vmatpush2.msra.mxu0 %v2413
    %2832 = vmatprep.subr.mxu0 0.0
    %2833 = vmatpush2.msra.mxu0 %v2412
    %2834 = vmatprep.subr.mxu0 0.0
    %2835 = vmatpush2.msra.mxu0 %v2411
    %2836 = vmatprep.mubr.f32.mxu0 %v2457
    %2837 = vmatmul.mubr.f32.gmra.mxu0 %v2456
    %v2838 = vpop.f32.mrf.mxu0
    %v2839 = vadd.f32 %v2729, %v2838
    %v2840 = vpop.f32.mrf.mxu0
    %2841 = vmatprep.mubr.f32.mxu0 %v2465
    %2842 = vmatmul.mubr.f32.gmra.mxu0 %v2464
    %v2843 = vpop.f32.mrf.mxu0
    %v2844 = vadd.f32 %v2734, %v2843
    %v2845 = vpop.f32.mrf.mxu0
    %2846 = vmatprep.mubr.f32.mxu0 %v2473
    %2847 = vmatmul.mubr.f32.gmra.mxu0 %v2472
    %v2848 = vpop.f32.mrf.mxu0
    %v2849 = vadd.f32 %v2739, %v2848
    %v2850 = vpop.f32.mrf.mxu0
    %2851 = vmatprep.mubr.f32.mxu0 %v2481
    %2852 = vmatmul.mubr.f32.gmra.mxu0 %v2480
    %v2853 = vpop.f32.mrf.mxu0
    %v2854 = vadd.f32 %v2744, %v2853
    %v2855 = vpop.f32.mrf.mxu0
    %2856 = vmatprep.mubr.f32.mxu0 %v2489
    %2857 = vmatmul.mubr.f32.gmra.mxu0 %v2488
    %v2858 = vpop.f32.mrf.mxu0
    %v2859 = vadd.f32 %v2749, %v2858
    %v2860 = vpop.f32.mrf.mxu0
    %2861 = vmatprep.mubr.f32.mxu0 %v2497
    %2862 = vmatmul.mubr.f32.gmra.mxu0 %v2496
    %v2863 = vpop.f32.mrf.mxu0
    %v2864 = vadd.f32 %v2754, %v2863
    %v2865 = vpop.f32.mrf.mxu0
    %2866 = vmatprep.mubr.f32.mxu0 %v2505
    %2867 = vmatmul.mubr.f32.gmra.mxu0 %v2504
    %v2868 = vpop.f32.mrf.mxu0
    %v2869 = vadd.f32 %v2759, %v2868
    %v2870 = vpop.f32.mrf.mxu0
    %2871 = vmatprep.mubr.f32.mxu0 %v2513
    %2872 = vmatmul.mubr.f32.gmra.mxu0 %v2512
    %v2873 = vpop.f32.mrf.mxu0
    %v2874 = vadd.f32 %v2764, %v2873
    %v2875 = vpop.f32.mrf.mxu0
    %2876 = vmatprep.mubr.f32.mxu0 %v2521
    %2877 = vmatmul.mubr.f32.gmra.mxu0 %v2520
    %v2878 = vpop.f32.mrf.mxu0
    %v2879 = vadd.f32 %v2769, %v2878
    %v2880 = vpop.f32.mrf.mxu0
    %2881 = vdwg.mxu0
    %2882 = vmatprep.subr.mxu0 0.0
    %2883 = vmatpush1.msra.mxu0 %v2442
    %2884 = vmatprep.subr.mxu0 0.0
    %2885 = vmatpush1.msra.mxu0 %v2441
    %2886 = vmatprep.subr.mxu0 0.0
    %2887 = vmatpush1.msra.mxu0 %v2440
    %2888 = vmatprep.subr.mxu0 0.0
    %2889 = vmatpush1.msra.mxu0 %v2439
    %2890 = vmatprep.subr.mxu0 0.0
    %2891 = vmatpush1.msra.mxu0 %v2438
    %2892 = vmatprep.subr.mxu0 0.0
    %2893 = vmatpush1.msra.mxu0 %v2437
    %2894 = vmatprep.subr.mxu0 0.0
    %2895 = vmatpush1.msra.mxu0 %v2436
    %2896 = vmatprep.subr.mxu0 0.0
    %2897 = vmatpush1.msra.mxu0 %v2435
    %2898 = vmatprep.subr.mxu0 0.0
    %2899 = vmatpush1.msra.mxu0 %v2434
    %2900 = vmatprep.subr.mxu0 0.0
    %2901 = vmatpush1.msra.mxu0 %v2433
    %2902 = vmatprep.subr.mxu0 0.0
    %2903 = vmatpush1.msra.mxu0 %v2432
    %2904 = vmatprep.subr.mxu0 0.0
    %2905 = vmatpush1.msra.mxu0 %v2431
    %2906 = vmatprep.subr.mxu0 0.0
    %2907 = vmatpush1.msra.mxu0 %v2430
    %2908 = vmatprep.subr.mxu0 0.0
    %2909 = vmatpush1.msra.mxu0 %v2429
    %2910 = vmatprep.subr.mxu0 0.0
    %2911 = vmatpush1.msra.mxu0 %v2428
    %2912 = vmatprep.subr.mxu0 0.0
    %2913 = vmatpush1.msra.mxu0 %v2427
    %2914 = vmatprep.subr.mxu0 0.0
    %2915 = vmatpush2.msra.mxu0 0.0
    %2916 = vmatprep.subr.mxu0 0.0
    %2917 = vmatpush2.msra.mxu0 0.0
    %2918 = vmatprep.subr.mxu0 0.0
    %2919 = vmatpush2.msra.mxu0 0.0
    %2920 = vmatprep.subr.mxu0 0.0
    %2921 = vmatpush2.msra.mxu0 0.0
    %2922 = vmatprep.subr.mxu0 0.0
    %2923 = vmatpush2.msra.mxu0 0.0
    %2924 = vmatprep.subr.mxu0 0.0
    %2925 = vmatpush2.msra.mxu0 0.0
    %2926 = vmatprep.subr.mxu0 0.0
    %2927 = vmatpush2.msra.mxu0 0.0
    %2928 = vmatprep.subr.mxu0 0.0
    %2929 = vmatpush2.msra.mxu0 %v2451
    %2930 = vmatprep.subr.mxu0 0.0
    %2931 = vmatpush2.msra.mxu0 %v2450
    %2932 = vmatprep.subr.mxu0 0.0
    %2933 = vmatpush2.msra.mxu0 %v2449
    %2934 = vmatprep.subr.mxu0 0.0
    %2935 = vmatpush2.msra.mxu0 %v2448
    %2936 = vmatprep.subr.mxu0 0.0
    %2937 = vmatpush2.msra.mxu0 %v2447
    %2938 = vmatprep.subr.mxu0 0.0
    %2939 = vmatpush2.msra.mxu0 %v2446
    %2940 = vmatprep.subr.mxu0 0.0
    %2941 = vmatpush2.msra.mxu0 %v2445
    %2942 = vmatprep.subr.mxu0 0.0
    %2943 = vmatpush2.msra.mxu0 %v2444
    %2944 = vmatprep.subr.mxu0 0.0
    %2945 = vmatpush2.msra.mxu0 %v2443
    %2946 = vmatprep.mubr.f32.mxu0 %v2526
    %2947 = vmatmul.mubr.f32.gmra.mxu0 %v2458
    %v2948 = vpop.f32.mrf.mxu0
    %v2949 = vadd.f32 %v2839, %v2948
    %v2950 = vpop.f32.mrf.mxu0
    %2951 = vmatprep.mubr.f32.mxu0 %v2529
    %2952 = vmatmul.mubr.f32.gmra.mxu0 %v2466
    %v2953 = vpop.f32.mrf.mxu0
    %v2954 = vadd.f32 %v2844, %v2953
    %v2955 = vpop.f32.mrf.mxu0
    %2956 = vmatprep.mubr.f32.mxu0 %v2532
    %2957 = vmatmul.mubr.f32.gmra.mxu0 %v2474
    %v2958 = vpop.f32.mrf.mxu0
    %v2959 = vadd.f32 %v2849, %v2958
    %v2960 = vpop.f32.mrf.mxu0
    %2961 = vmatprep.mubr.f32.mxu0 %v2535
    %2962 = vmatmul.mubr.f32.gmra.mxu0 %v2482
    %v2963 = vpop.f32.mrf.mxu0
    %v2964 = vadd.f32 %v2854, %v2963
    %v2965 = vpop.f32.mrf.mxu0
    %2966 = vmatprep.mubr.f32.mxu0 %v2538
    %2967 = vmatmul.mubr.f32.gmra.mxu0 %v2490
    %v2968 = vpop.f32.mrf.mxu0
    %v2969 = vadd.f32 %v2859, %v2968
    %v2970 = vpop.f32.mrf.mxu0
    %2971 = vmatprep.mubr.f32.mxu0 %v2541
    %2972 = vmatmul.mubr.f32.gmra.mxu0 %v2498
    %v2973 = vpop.f32.mrf.mxu0
    %v2974 = vadd.f32 %v2864, %v2973
    %v2975 = vpop.f32.mrf.mxu0
    %2976 = vmatprep.mubr.f32.mxu0 %v2544
    %2977 = vmatmul.mubr.f32.gmra.mxu0 %v2506
    %v2978 = vpop.f32.mrf.mxu0
    %v2979 = vadd.f32 %v2869, %v2978
    %v2980 = vpop.f32.mrf.mxu0
    %2981 = vmatprep.mubr.f32.mxu0 %v2547
    %2982 = vmatmul.mubr.f32.gmra.mxu0 %v2514
    %v2983 = vpop.f32.mrf.mxu0
    %v2984 = vadd.f32 %v2874, %v2983
    %v2985 = vpop.f32.mrf.mxu0
    %2986 = vmatprep.mubr.f32.mxu0 %v2550
    %2987 = vmatmul.mubr.f32.gmra.mxu0 %v2522
    %v2988 = vpop.f32.mrf.mxu0
    %v2989 = vadd.f32 %v2879, %v2988
    %v2990 = vpop.f32.mrf.mxu0
    %2991 = vdwg.mxu0
    %v2992 = vld [vmem:[%s4] sm:$0xff]
    %v2993 = vld [vmem:[%s4 + $0x8] sm:$0xff]
    %v2994 = vld [vmem:[%s4 + $0x10] sm:$0xff]
    %v2995 = vld [vmem:[%s4 + $0x18] sm:$0xff]
    %v2996 = vld [vmem:[%s4 + $0x20] sm:$0xff]
    %v2997 = vld [vmem:[%s4 + $0x28] sm:$0xff]
    %v2998 = vld [vmem:[%s4 + $0x30] sm:$0xff]
    %v2999 = vld [vmem:[%s4 + $0x38] sm:$0xff]
    %v3000 = vld [vmem:[%s4 + $0x40] sm:$0xff]
    %v3001 = vld [vmem:[%s4 + $0x48] sm:$0xff]
    %v3002 = vld [vmem:[%s4 + $0x50] sm:$0xff]
    %v3003 = vld [vmem:[%s4 + $0x58] sm:$0xff]
    %v3004 = vld [vmem:[%s4 + $0x60] sm:$0xff]
    %v3005 = vld [vmem:[%s4 + $0x68] sm:$0xff]
    %v3006 = vld [vmem:[%s4 + $0x70] sm:$0xff]
    %v3007 = vld [vmem:[%s4 + $0x78] sm:$0xff]
    %v3008 = vld [vmem:[%s4 + $0x80] sm:$0xff]
    %v3009 = vld [vmem:[%s4 + $0x88] sm:$0xff]
    %v3010 = vld [vmem:[%s4 + $0x90] sm:$0xff]
    %v3011 = vld [vmem:[%s4 + $0x98] sm:$0xff]
    %v3012 = vld [vmem:[%s4 + $0xa0] sm:$0xff]
    %v3013 = vld [vmem:[%s4 + $0xa8] sm:$0xff]
    %v3014 = vld [vmem:[%s4 + $0xb0] sm:$0xff]
    %v3015 = vld [vmem:[%s4 + $0xb8] sm:$0xff]
    %v3016 = vld [vmem:[%s4 + $0xc0] sm:$0xff]
    %v3017 = vld [vmem:[%s4 + $0xc8] sm:$0xff]
    %v3018 = vld [vmem:[%s4 + $0xd0] sm:$0xff]
    %v3019 = vld [vmem:[%s4 + $0xd8] sm:$0xff]
    %v3020 = vld [vmem:[%s4 + $0xe0] sm:$0xff]
    %v3021 = vld [vmem:[%s4 + $0xe8] sm:$0xff]
    %v3022 = vld [vmem:[%s4 + $0xf0] sm:$0xff]
    %v3023 = vld [vmem:[%s4 + $0xf8] sm:$0xff]
    %v3024 = vld [vmem:[%s4 + $0x100] sm:$0xff]
    %v3025 = vld [vmem:[%s4 + $0x108] sm:$0xff]
    %v3026 = vld [vmem:[%s4 + $0x110] sm:$0xff]
    %v3027 = vld [vmem:[%s4 + $0x118] sm:$0xff]
    %v3029 = vsel %vm1216, %v2954, 0
    %3031 = vmatprep.subr.mxu0 0.0
    %3032 = vmatpush1.msra.mxu0 0.0
    %3033 = vmatprep.subr.mxu0 0.0
    %3034 = vmatpush1.msra.mxu0 0.0
    %3035 = vmatprep.subr.mxu0 0.0
    %3036 = vmatpush1.msra.mxu0 0.0
    %3037 = vmatprep.subr.mxu0 0.0
    %3038 = vmatpush1.msra.mxu0 0.0
    %3039 = vmatprep.subr.mxu0 0.0
    %3040 = vmatpush1.msra.mxu0 0.0
    %3041 = vmatprep.subr.mxu0 0.0
    %3042 = vmatpush1.msra.mxu0 0.0
    %3043 = vmatprep.subr.mxu0 0.0
    %3044 = vmatpush1.msra.mxu0 0.0
    %3045 = vmatprep.subr.mxu0 0.0
    %3046 = vmatpush1.msra.mxu0 0.0
    %3047 = vmatprep.subr.mxu0 0.0
    %3048 = vmatpush1.msra.mxu0 0.0
    %3049 = vmatprep.subr.mxu0 0.0
    %3050 = vmatpush1.msra.mxu0 0.0
    %3051 = vmatprep.subr.mxu0 0.0
    %3052 = vmatpush1.msra.mxu0 0.0
    %3053 = vmatprep.subr.mxu0 0.0
    %3054 = vmatpush1.msra.mxu0 0.0
    %3055 = vmatprep.subr.mxu0 0.0
    %3056 = vmatpush1.msra.mxu0 %v2999
    %3057 = vmatprep.subr.mxu0 0.0
    %3058 = vmatpush1.msra.mxu0 %v2998
    %3059 = vmatprep.subr.mxu0 0.0
    %3060 = vmatpush1.msra.mxu0 %v2997
    %3061 = vmatprep.subr.mxu0 0.0
    %3062 = vmatpush1.msra.mxu0 %v2996
    %3063 = vmatprep.subr.mxu0 0.0
    %3064 = vmatpush2.msra.mxu0 0.0
    %3065 = vmatprep.subr.mxu0 0.0
    %3066 = vmatpush2.msra.mxu0 0.0
    %3067 = vmatprep.subr.mxu0 0.0
    %3068 = vmatpush2.msra.mxu0 0.0
    %3069 = vmatprep.subr.mxu0 0.0
    %3070 = vmatpush2.msra.mxu0 0.0
    %3071 = vmatprep.subr.mxu0 0.0
    %3072 = vmatpush2.msra.mxu0 0.0
    %3073 = vmatprep.subr.mxu0 0.0
    %3074 = vmatpush2.msra.mxu0 0.0
    %3075 = vmatprep.subr.mxu0 0.0
    %3076 = vmatpush2.msra.mxu0 0.0
    %3077 = vmatprep.subr.mxu0 0.0
    %3078 = vmatpush2.msra.mxu0 0.0
    %3079 = vmatprep.subr.mxu0 0.0
    %3080 = vmatpush2.msra.mxu0 0.0
    %3081 = vmatprep.subr.mxu0 0.0
    %3082 = vmatpush2.msra.mxu0 0.0
    %3083 = vmatprep.subr.mxu0 0.0
    %3084 = vmatpush2.msra.mxu0 0.0
    %3085 = vmatprep.subr.mxu0 0.0
    %3086 = vmatpush2.msra.mxu0 0.0
    %3087 = vmatprep.subr.mxu0 0.0
    %3088 = vmatpush2.msra.mxu0 0.0
    %3089 = vmatprep.subr.mxu0 0.0
    %3090 = vmatpush2.msra.mxu0 0.0
    %3091 = vmatprep.subr.mxu0 0.0
    %3092 = vmatpush2.msra.mxu0 0.0
    %3093 = vmatprep.subr.mxu0 0.0
    %3094 = vmatpush2.msra.mxu0 0.0
    %3095 = vmatprep.mubr.f32.mxu0 0.0
    %3096 = vmatmul.mubr.f32.gmra.mxu0 %v3029
    %v3097 = vpop.f32.mrf.mxu0
    %v3098 = vadd.f32 0.0, %v3097
    %v3099 = vpop.f32.mrf.mxu0
    %3100 = vdwg.mxu0
    %v3102 = vsel %vm1216, %v2949, 0
    %3104 = vmatprep.subr.mxu0 0.0
    %3105 = vmatpush1.msra.mxu0 0.0
    %3106 = vmatprep.subr.mxu0 0.0
    %3107 = vmatpush1.msra.mxu0 0.0
    %3108 = vmatprep.subr.mxu0 0.0
    %3109 = vmatpush1.msra.mxu0 0.0
    %3110 = vmatprep.subr.mxu0 0.0
    %3111 = vmatpush1.msra.mxu0 0.0
    %3112 = vmatprep.subr.mxu0 0.0
    %3113 = vmatpush1.msra.mxu0 0.0
    %3114 = vmatprep.subr.mxu0 0.0
    %3115 = vmatpush1.msra.mxu0 0.0
    %3116 = vmatprep.subr.mxu0 0.0
    %3117 = vmatpush1.msra.mxu0 0.0
    %3118 = vmatprep.subr.mxu0 0.0
    %3119 = vmatpush1.msra.mxu0 0.0
    %3120 = vmatprep.subr.mxu0 0.0
    %3121 = vmatpush1.msra.mxu0 0.0
    %3122 = vmatprep.subr.mxu0 0.0
    %3123 = vmatpush1.msra.mxu0 0.0
    %3124 = vmatprep.subr.mxu0 0.0
    %3125 = vmatpush1.msra.mxu0 0.0
    %3126 = vmatprep.subr.mxu0 0.0
    %3127 = vmatpush1.msra.mxu0 0.0
    %3128 = vmatprep.subr.mxu0 0.0
    %3129 = vmatpush1.msra.mxu0 %v2995
    %3130 = vmatprep.subr.mxu0 0.0
    %3131 = vmatpush1.msra.mxu0 %v2994
    %3132 = vmatprep.subr.mxu0 0.0
    %3133 = vmatpush1.msra.mxu0 %v2993
    %3134 = vmatprep.subr.mxu0 0.0
    %3135 = vmatpush1.msra.mxu0 %v2992
    %3136 = vmatprep.subr.mxu0 0.0
    %3137 = vmatpush2.msra.mxu0 0.0
    %3138 = vmatprep.subr.mxu0 0.0
    %3139 = vmatpush2.msra.mxu0 0.0
    %3140 = vmatprep.subr.mxu0 0.0
    %3141 = vmatpush2.msra.mxu0 0.0
    %3142 = vmatprep.subr.mxu0 0.0
    %3143 = vmatpush2.msra.mxu0 0.0
    %3144 = vmatprep.subr.mxu0 0.0
    %3145 = vmatpush2.msra.mxu0 0.0
    %3146 = vmatprep.subr.mxu0 0.0
    %3147 = vmatpush2.msra.mxu0 0.0
    %3148 = vmatprep.subr.mxu0 0.0
    %3149 = vmatpush2.msra.mxu0 0.0
    %3150 = vmatprep.subr.mxu0 0.0
    %3151 = vmatpush2.msra.mxu0 0.0
    %3152 = vmatprep.subr.mxu0 0.0
    %3153 = vmatpush2.msra.mxu0 0.0
    %3154 = vmatprep.subr.mxu0 0.0
    %3155 = vmatpush2.msra.mxu0 0.0
    %3156 = vmatprep.subr.mxu0 0.0
    %3157 = vmatpush2.msra.mxu0 0.0
    %3158 = vmatprep.subr.mxu0 0.0
    %3159 = vmatpush2.msra.mxu0 0.0
    %3160 = vmatprep.subr.mxu0 0.0
    %3161 = vmatpush2.msra.mxu0 0.0
    %3162 = vmatprep.subr.mxu0 0.0
    %3163 = vmatpush2.msra.mxu0 0.0
    %3164 = vmatprep.subr.mxu0 0.0
    %3165 = vmatpush2.msra.mxu0 0.0
    %3166 = vmatprep.subr.mxu0 0.0
    %3167 = vmatpush2.msra.mxu0 0.0
    %3168 = vmatprep.mubr.f32.mxu0 0.0
    %3169 = vmatmul.mubr.f32.gmra.mxu0 %v3102
    %v3170 = vpop.f32.mrf.mxu0
    %v3171 = vadd.f32 %v3098, %v3170
    %v3172 = vpop.f32.mrf.mxu0
    %3173 = vdwg.mxu0
    %v3175 = vsel %vm1216, %v2959, 0
    %3177 = vmatprep.subr.mxu0 0.0
    %3178 = vmatpush1.msra.mxu0 0.0
    %3179 = vmatprep.subr.mxu0 0.0
    %3180 = vmatpush1.msra.mxu0 0.0
    %3181 = vmatprep.subr.mxu0 0.0
    %3182 = vmatpush1.msra.mxu0 0.0
    %3183 = vmatprep.subr.mxu0 0.0
    %3184 = vmatpush1.msra.mxu0 0.0
    %3185 = vmatprep.subr.mxu0 0.0
    %3186 = vmatpush1.msra.mxu0 0.0
    %3187 = vmatprep.subr.mxu0 0.0
    %3188 = vmatpush1.msra.mxu0 0.0
    %3189 = vmatprep.subr.mxu0 0.0
    %3190 = vmatpush1.msra.mxu0 0.0
    %3191 = vmatprep.subr.mxu0 0.0
    %3192 = vmatpush1.msra.mxu0 0.0
    %3193 = vmatprep.subr.mxu0 0.0
    %3194 = vmatpush1.msra.mxu0 0.0
    %3195 = vmatprep.subr.mxu0 0.0
    %3196 = vmatpush1.msra.mxu0 0.0
    %3197 = vmatprep.subr.mxu0 0.0
    %3198 = vmatpush1.msra.mxu0 0.0
    %3199 = vmatprep.subr.mxu0 0.0
    %3200 = vmatpush1.msra.mxu0 0.0
    %3201 = vmatprep.subr.mxu0 0.0
    %3202 = vmatpush1.msra.mxu0 %v3003
    %3203 = vmatprep.subr.mxu0 0.0
    %3204 = vmatpush1.msra.mxu0 %v3002
    %3205 = vmatprep.subr.mxu0 0.0
    %3206 = vmatpush1.msra.mxu0 %v3001
    %3207 = vmatprep.subr.mxu0 0.0
    %3208 = vmatpush1.msra.mxu0 %v3000
    %3209 = vmatprep.subr.mxu0 0.0
    %3210 = vmatpush2.msra.mxu0 0.0
    %3211 = vmatprep.subr.mxu0 0.0
    %3212 = vmatpush2.msra.mxu0 0.0
    %3213 = vmatprep.subr.mxu0 0.0
    %3214 = vmatpush2.msra.mxu0 0.0
    %3215 = vmatprep.subr.mxu0 0.0
    %3216 = vmatpush2.msra.mxu0 0.0
    %3217 = vmatprep.subr.mxu0 0.0
    %3218 = vmatpush2.msra.mxu0 0.0
    %3219 = vmatprep.subr.mxu0 0.0
    %3220 = vmatpush2.msra.mxu0 0.0
    %3221 = vmatprep.subr.mxu0 0.0
    %3222 = vmatpush2.msra.mxu0 0.0
    %3223 = vmatprep.subr.mxu0 0.0
    %3224 = vmatpush2.msra.mxu0 0.0
    %3225 = vmatprep.subr.mxu0 0.0
    %3226 = vmatpush2.msra.mxu0 0.0
    %3227 = vmatprep.subr.mxu0 0.0
    %3228 = vmatpush2.msra.mxu0 0.0
    %3229 = vmatprep.subr.mxu0 0.0
    %3230 = vmatpush2.msra.mxu0 0.0
    %3231 = vmatprep.subr.mxu0 0.0
    %3232 = vmatpush2.msra.mxu0 0.0
    %3233 = vmatprep.subr.mxu0 0.0
    %3234 = vmatpush2.msra.mxu0 0.0
    %3235 = vmatprep.subr.mxu0 0.0
    %3236 = vmatpush2.msra.mxu0 0.0
    %3237 = vmatprep.subr.mxu0 0.0
    %3238 = vmatpush2.msra.mxu0 0.0
    %3239 = vmatprep.subr.mxu0 0.0
    %3240 = vmatpush2.msra.mxu0 0.0
    %3241 = vmatprep.mubr.f32.mxu0 0.0
    %3242 = vmatmul.mubr.f32.gmra.mxu0 %v3175
    %v3243 = vpop.f32.mrf.mxu0
    %v3244 = vadd.f32 0.0, %v3243
    %v3245 = vpop.f32.mrf.mxu0
    %3246 = vdwg.mxu0
    %v3247 = vadd.f32 %v3171, %v3244
    %v3249 = vsel %vm1216, %v2964, 0
    %3251 = vmatprep.subr.mxu0 0.0
    %3252 = vmatpush1.msra.mxu0 0.0
    %3253 = vmatprep.subr.mxu0 0.0
    %3254 = vmatpush1.msra.mxu0 0.0
    %3255 = vmatprep.subr.mxu0 0.0
    %3256 = vmatpush1.msra.mxu0 0.0
    %3257 = vmatprep.subr.mxu0 0.0
    %3258 = vmatpush1.msra.mxu0 0.0
    %3259 = vmatprep.subr.mxu0 0.0
    %3260 = vmatpush1.msra.mxu0 0.0
    %3261 = vmatprep.subr.mxu0 0.0
    %3262 = vmatpush1.msra.mxu0 0.0
    %3263 = vmatprep.subr.mxu0 0.0
    %3264 = vmatpush1.msra.mxu0 0.0
    %3265 = vmatprep.subr.mxu0 0.0
    %3266 = vmatpush1.msra.mxu0 0.0
    %3267 = vmatprep.subr.mxu0 0.0
    %3268 = vmatpush1.msra.mxu0 0.0
    %3269 = vmatprep.subr.mxu0 0.0
    %3270 = vmatpush1.msra.mxu0 0.0
    %3271 = vmatprep.subr.mxu0 0.0
    %3272 = vmatpush1.msra.mxu0 0.0
    %3273 = vmatprep.subr.mxu0 0.0
    %3274 = vmatpush1.msra.mxu0 0.0
    %3275 = vmatprep.subr.mxu0 0.0
    %3276 = vmatpush1.msra.mxu0 %v3007
    %3277 = vmatprep.subr.mxu0 0.0
    %3278 = vmatpush1.msra.mxu0 %v3006
    %3279 = vmatprep.subr.mxu0 0.0
    %3280 = vmatpush1.msra.mxu0 %v3005
    %3281 = vmatprep.subr.mxu0 0.0
    %3282 = vmatpush1.msra.mxu0 %v3004
    %3283 = vmatprep.subr.mxu0 0.0
    %3284 = vmatpush2.msra.mxu0 0.0
    %3285 = vmatprep.subr.mxu0 0.0
    %3286 = vmatpush2.msra.mxu0 0.0
    %3287 = vmatprep.subr.mxu0 0.0
    %3288 = vmatpush2.msra.mxu0 0.0
    %3289 = vmatprep.subr.mxu0 0.0
    %3290 = vmatpush2.msra.mxu0 0.0
    %3291 = vmatprep.subr.mxu0 0.0
    %3292 = vmatpush2.msra.mxu0 0.0
    %3293 = vmatprep.subr.mxu0 0.0
    %3294 = vmatpush2.msra.mxu0 0.0
    %3295 = vmatprep.subr.mxu0 0.0
    %3296 = vmatpush2.msra.mxu0 0.0
    %3297 = vmatprep.subr.mxu0 0.0
    %3298 = vmatpush2.msra.mxu0 0.0
    %3299 = vmatprep.subr.mxu0 0.0
    %3300 = vmatpush2.msra.mxu0 0.0
    %3301 = vmatprep.subr.mxu0 0.0
    %3302 = vmatpush2.msra.mxu0 0.0
    %3303 = vmatprep.subr.mxu0 0.0
    %3304 = vmatpush2.msra.mxu0 0.0
    %3305 = vmatprep.subr.mxu0 0.0
    %3306 = vmatpush2.msra.mxu0 0.0
    %3307 = vmatprep.subr.mxu0 0.0
    %3308 = vmatpush2.msra.mxu0 0.0
    %3309 = vmatprep.subr.mxu0 0.0
    %3310 = vmatpush2.msra.mxu0 0.0
    %3311 = vmatprep.subr.mxu0 0.0
    %3312 = vmatpush2.msra.mxu0 0.0
    %3313 = vmatprep.subr.mxu0 0.0
    %3314 = vmatpush2.msra.mxu0 0.0
    %3315 = vmatprep.mubr.f32.mxu0 0.0
    %3316 = vmatmul.mubr.f32.gmra.mxu0 %v3249
    %v3317 = vpop.f32.mrf.mxu0
    %v3318 = vadd.f32 0.0, %v3317
    %v3319 = vpop.f32.mrf.mxu0
    %3320 = vdwg.mxu0
    %v3321 = vadd.f32 %v3247, %v3318
    %v3323 = vsel %vm1216, %v2969, 0
    %3325 = vmatprep.subr.mxu0 0.0
    %3326 = vmatpush1.msra.mxu0 0.0
    %3327 = vmatprep.subr.mxu0 0.0
    %3328 = vmatpush1.msra.mxu0 0.0
    %3329 = vmatprep.subr.mxu0 0.0
    %3330 = vmatpush1.msra.mxu0 0.0
    %3331 = vmatprep.subr.mxu0 0.0
    %3332 = vmatpush1.msra.mxu0 0.0
    %3333 = vmatprep.subr.mxu0 0.0
    %3334 = vmatpush1.msra.mxu0 0.0
    %3335 = vmatprep.subr.mxu0 0.0
    %3336 = vmatpush1.msra.mxu0 0.0
    %3337 = vmatprep.subr.mxu0 0.0
    %3338 = vmatpush1.msra.mxu0 0.0
    %3339 = vmatprep.subr.mxu0 0.0
    %3340 = vmatpush1.msra.mxu0 0.0
    %3341 = vmatprep.subr.mxu0 0.0
    %3342 = vmatpush1.msra.mxu0 0.0
    %3343 = vmatprep.subr.mxu0 0.0
    %3344 = vmatpush1.msra.mxu0 0.0
    %3345 = vmatprep.subr.mxu0 0.0
    %3346 = vmatpush1.msra.mxu0 0.0
    %3347 = vmatprep.subr.mxu0 0.0
    %3348 = vmatpush1.msra.mxu0 0.0
    %3349 = vmatprep.subr.mxu0 0.0
    %3350 = vmatpush1.msra.mxu0 %v3011
    %3351 = vmatprep.subr.mxu0 0.0
    %3352 = vmatpush1.msra.mxu0 %v3010
    %3353 = vmatprep.subr.mxu0 0.0
    %3354 = vmatpush1.msra.mxu0 %v3009
    %3355 = vmatprep.subr.mxu0 0.0
    %3356 = vmatpush1.msra.mxu0 %v3008
    %3357 = vmatprep.subr.mxu0 0.0
    %3358 = vmatpush2.msra.mxu0 0.0
    %3359 = vmatprep.subr.mxu0 0.0
    %3360 = vmatpush2.msra.mxu0 0.0
    %3361 = vmatprep.subr.mxu0 0.0
    %3362 = vmatpush2.msra.mxu0 0.0
    %3363 = vmatprep.subr.mxu0 0.0
    %3364 = vmatpush2.msra.mxu0 0.0
    %3365 = vmatprep.subr.mxu0 0.0
    %3366 = vmatpush2.msra.mxu0 0.0
    %3367 = vmatprep.subr.mxu0 0.0
    %3368 = vmatpush2.msra.mxu0 0.0
    %3369 = vmatprep.subr.mxu0 0.0
    %3370 = vmatpush2.msra.mxu0 0.0
    %3371 = vmatprep.subr.mxu0 0.0
    %3372 = vmatpush2.msra.mxu0 0.0
    %3373 = vmatprep.subr.mxu0 0.0
    %3374 = vmatpush2.msra.mxu0 0.0
    %3375 = vmatprep.subr.mxu0 0.0
    %3376 = vmatpush2.msra.mxu0 0.0
    %3377 = vmatprep.subr.mxu0 0.0
    %3378 = vmatpush2.msra.mxu0 0.0
    %3379 = vmatprep.subr.mxu0 0.0
    %3380 = vmatpush2.msra.mxu0 0.0
    %3381 = vmatprep.subr.mxu0 0.0
    %3382 = vmatpush2.msra.mxu0 0.0
    %3383 = vmatprep.subr.mxu0 0.0
    %3384 = vmatpush2.msra.mxu0 0.0
    %3385 = vmatprep.subr.mxu0 0.0
    %3386 = vmatpush2.msra.mxu0 0.0
    %3387 = vmatprep.subr.mxu0 0.0
    %3388 = vmatpush2.msra.mxu0 0.0
    %3389 = vmatprep.mubr.f32.mxu0 0.0
    %3390 = vmatmul.mubr.f32.gmra.mxu0 %v3323
    %v3391 = vpop.f32.mrf.mxu0
    %v3392 = vadd.f32 0.0, %v3391
    %v3393 = vpop.f32.mrf.mxu0
    %3394 = vdwg.mxu0
    %v3395 = vadd.f32 %v3321, %v3392
    %v3397 = vsel %vm1216, %v2974, 0
    %3399 = vmatprep.subr.mxu0 0.0
    %3400 = vmatpush1.msra.mxu0 0.0
    %3401 = vmatprep.subr.mxu0 0.0
    %3402 = vmatpush1.msra.mxu0 0.0
    %3403 = vmatprep.subr.mxu0 0.0
    %3404 = vmatpush1.msra.mxu0 0.0
    %3405 = vmatprep.subr.mxu0 0.0
    %3406 = vmatpush1.msra.mxu0 0.0
    %3407 = vmatprep.subr.mxu0 0.0
    %3408 = vmatpush1.msra.mxu0 0.0
    %3409 = vmatprep.subr.mxu0 0.0
    %3410 = vmatpush1.msra.mxu0 0.0
    %3411 = vmatprep.subr.mxu0 0.0
    %3412 = vmatpush1.msra.mxu0 0.0
    %3413 = vmatprep.subr.mxu0 0.0
    %3414 = vmatpush1.msra.mxu0 0.0
    %3415 = vmatprep.subr.mxu0 0.0
    %3416 = vmatpush1.msra.mxu0 0.0
    %3417 = vmatprep.subr.mxu0 0.0
    %3418 = vmatpush1.msra.mxu0 0.0
    %3419 = vmatprep.subr.mxu0 0.0
    %3420 = vmatpush1.msra.mxu0 0.0
    %3421 = vmatprep.subr.mxu0 0.0
    %3422 = vmatpush1.msra.mxu0 0.0
    %3423 = vmatprep.subr.mxu0 0.0
    %3424 = vmatpush1.msra.mxu0 %v3015
    %3425 = vmatprep.subr.mxu0 0.0
    %3426 = vmatpush1.msra.mxu0 %v3014
    %3427 = vmatprep.subr.mxu0 0.0
    %3428 = vmatpush1.msra.mxu0 %v3013
    %3429 = vmatprep.subr.mxu0 0.0
    %3430 = vmatpush1.msra.mxu0 %v3012
    %3431 = vmatprep.subr.mxu0 0.0
    %3432 = vmatpush2.msra.mxu0 0.0
    %3433 = vmatprep.subr.mxu0 0.0
    %3434 = vmatpush2.msra.mxu0 0.0
    %3435 = vmatprep.subr.mxu0 0.0
    %3436 = vmatpush2.msra.mxu0 0.0
    %3437 = vmatprep.subr.mxu0 0.0
    %3438 = vmatpush2.msra.mxu0 0.0
    %3439 = vmatprep.subr.mxu0 0.0
    %3440 = vmatpush2.msra.mxu0 0.0
    %3441 = vmatprep.subr.mxu0 0.0
    %3442 = vmatpush2.msra.mxu0 0.0
    %3443 = vmatprep.subr.mxu0 0.0
    %3444 = vmatpush2.msra.mxu0 0.0
    %3445 = vmatprep.subr.mxu0 0.0
    %3446 = vmatpush2.msra.mxu0 0.0
    %3447 = vmatprep.subr.mxu0 0.0
    %3448 = vmatpush2.msra.mxu0 0.0
    %3449 = vmatprep.subr.mxu0 0.0
    %3450 = vmatpush2.msra.mxu0 0.0
    %3451 = vmatprep.subr.mxu0 0.0
    %3452 = vmatpush2.msra.mxu0 0.0
    %3453 = vmatprep.subr.mxu0 0.0
    %3454 = vmatpush2.msra.mxu0 0.0
    %3455 = vmatprep.subr.mxu0 0.0
    %3456 = vmatpush2.msra.mxu0 0.0
    %3457 = vmatprep.subr.mxu0 0.0
    %3458 = vmatpush2.msra.mxu0 0.0
    %3459 = vmatprep.subr.mxu0 0.0
    %3460 = vmatpush2.msra.mxu0 0.0
    %3461 = vmatprep.subr.mxu0 0.0
    %3462 = vmatpush2.msra.mxu0 0.0
    %3463 = vmatprep.mubr.f32.mxu0 0.0
    %3464 = vmatmul.mubr.f32.gmra.mxu0 %v3397
    %v3465 = vpop.f32.mrf.mxu0
    %v3466 = vadd.f32 0.0, %v3465
    %v3467 = vpop.f32.mrf.mxu0
    %3468 = vdwg.mxu0
    %v3469 = vadd.f32 %v3395, %v3466
    %v3471 = vsel %vm1216, %v2979, 0
    %3473 = vmatprep.subr.mxu0 0.0
    %3474 = vmatpush1.msra.mxu0 0.0
    %3475 = vmatprep.subr.mxu0 0.0
    %3476 = vmatpush1.msra.mxu0 0.0
    %3477 = vmatprep.subr.mxu0 0.0
    %3478 = vmatpush1.msra.mxu0 0.0
    %3479 = vmatprep.subr.mxu0 0.0
    %3480 = vmatpush1.msra.mxu0 0.0
    %3481 = vmatprep.subr.mxu0 0.0
    %3482 = vmatpush1.msra.mxu0 0.0
    %3483 = vmatprep.subr.mxu0 0.0
    %3484 = vmatpush1.msra.mxu0 0.0
    %3485 = vmatprep.subr.mxu0 0.0
    %3486 = vmatpush1.msra.mxu0 0.0
    %3487 = vmatprep.subr.mxu0 0.0
    %3488 = vmatpush1.msra.mxu0 0.0
    %3489 = vmatprep.subr.mxu0 0.0
    %3490 = vmatpush1.msra.mxu0 0.0
    %3491 = vmatprep.subr.mxu0 0.0
    %3492 = vmatpush1.msra.mxu0 0.0
    %3493 = vmatprep.subr.mxu0 0.0
    %3494 = vmatpush1.msra.mxu0 0.0
    %3495 = vmatprep.subr.mxu0 0.0
    %3496 = vmatpush1.msra.mxu0 0.0
    %3497 = vmatprep.subr.mxu0 0.0
    %3498 = vmatpush1.msra.mxu0 %v3019
    %3499 = vmatprep.subr.mxu0 0.0
    %3500 = vmatpush1.msra.mxu0 %v3018
    %3501 = vmatprep.subr.mxu0 0.0
    %3502 = vmatpush1.msra.mxu0 %v3017
    %3503 = vmatprep.subr.mxu0 0.0
    %3504 = vmatpush1.msra.mxu0 %v3016
    %3505 = vmatprep.subr.mxu0 0.0
    %3506 = vmatpush2.msra.mxu0 0.0
    %3507 = vmatprep.subr.mxu0 0.0
    %3508 = vmatpush2.msra.mxu0 0.0
    %3509 = vmatprep.subr.mxu0 0.0
    %3510 = vmatpush2.msra.mxu0 0.0
    %3511 = vmatprep.subr.mxu0 0.0
    %3512 = vmatpush2.msra.mxu0 0.0
    %3513 = vmatprep.subr.mxu0 0.0
    %3514 = vmatpush2.msra.mxu0 0.0
    %3515 = vmatprep.subr.mxu0 0.0
    %3516 = vmatpush2.msra.mxu0 0.0
    %3517 = vmatprep.subr.mxu0 0.0
    %3518 = vmatpush2.msra.mxu0 0.0
    %3519 = vmatprep.subr.mxu0 0.0
    %3520 = vmatpush2.msra.mxu0 0.0
    %3521 = vmatprep.subr.mxu0 0.0
    %3522 = vmatpush2.msra.mxu0 0.0
    %3523 = vmatprep.subr.mxu0 0.0
    %3524 = vmatpush2.msra.mxu0 0.0
    %3525 = vmatprep.subr.mxu0 0.0
    %3526 = vmatpush2.msra.mxu0 0.0
    %3527 = vmatprep.subr.mxu0 0.0
    %3528 = vmatpush2.msra.mxu0 0.0
    %3529 = vmatprep.subr.mxu0 0.0
    %3530 = vmatpush2.msra.mxu0 0.0
    %3531 = vmatprep.subr.mxu0 0.0
    %3532 = vmatpush2.msra.mxu0 0.0
    %3533 = vmatprep.subr.mxu0 0.0
    %3534 = vmatpush2.msra.mxu0 0.0
    %3535 = vmatprep.subr.mxu0 0.0
    %3536 = vmatpush2.msra.mxu0 0.0
    %3537 = vmatprep.mubr.f32.mxu0 0.0
    %3538 = vmatmul.mubr.f32.gmra.mxu0 %v3471
    %v3539 = vpop.f32.mrf.mxu0
    %v3540 = vadd.f32 0.0, %v3539
    %v3541 = vpop.f32.mrf.mxu0
    %3542 = vdwg.mxu0
    %v3543 = vadd.f32 %v3469, %v3540
    %v3545 = vsel %vm1216, %v2984, 0
    %3547 = vmatprep.subr.mxu0 0.0
    %3548 = vmatpush1.msra.mxu0 0.0
    %3549 = vmatprep.subr.mxu0 0.0
    %3550 = vmatpush1.msra.mxu0 0.0
    %3551 = vmatprep.subr.mxu0 0.0
    %3552 = vmatpush1.msra.mxu0 0.0
    %3553 = vmatprep.subr.mxu0 0.0
    %3554 = vmatpush1.msra.mxu0 0.0
    %3555 = vmatprep.subr.mxu0 0.0
    %3556 = vmatpush1.msra.mxu0 0.0
    %3557 = vmatprep.subr.mxu0 0.0
    %3558 = vmatpush1.msra.mxu0 0.0
    %3559 = vmatprep.subr.mxu0 0.0
    %3560 = vmatpush1.msra.mxu0 0.0
    %3561 = vmatprep.subr.mxu0 0.0
    %3562 = vmatpush1.msra.mxu0 0.0
    %3563 = vmatprep.subr.mxu0 0.0
    %3564 = vmatpush1.msra.mxu0 0.0
    %3565 = vmatprep.subr.mxu0 0.0
    %3566 = vmatpush1.msra.mxu0 0.0
    %3567 = vmatprep.subr.mxu0 0.0
    %3568 = vmatpush1.msra.mxu0 0.0
    %3569 = vmatprep.subr.mxu0 0.0
    %3570 = vmatpush1.msra.mxu0 0.0
    %3571 = vmatprep.subr.mxu0 0.0
    %3572 = vmatpush1.msra.mxu0 %v3023
    %3573 = vmatprep.subr.mxu0 0.0
    %3574 = vmatpush1.msra.mxu0 %v3022
    %3575 = vmatprep.subr.mxu0 0.0
    %3576 = vmatpush1.msra.mxu0 %v3021
    %3577 = vmatprep.subr.mxu0 0.0
    %3578 = vmatpush1.msra.mxu0 %v3020
    %3579 = vmatprep.subr.mxu0 0.0
    %3580 = vmatpush2.msra.mxu0 0.0
    %3581 = vmatprep.subr.mxu0 0.0
    %3582 = vmatpush2.msra.mxu0 0.0
    %3583 = vmatprep.subr.mxu0 0.0
    %3584 = vmatpush2.msra.mxu0 0.0
    %3585 = vmatprep.subr.mxu0 0.0
    %3586 = vmatpush2.msra.mxu0 0.0
    %3587 = vmatprep.subr.mxu0 0.0
    %3588 = vmatpush2.msra.mxu0 0.0
    %3589 = vmatprep.subr.mxu0 0.0
    %3590 = vmatpush2.msra.mxu0 0.0
    %3591 = vmatprep.subr.mxu0 0.0
    %3592 = vmatpush2.msra.mxu0 0.0
    %3593 = vmatprep.subr.mxu0 0.0
    %3594 = vmatpush2.msra.mxu0 0.0
    %3595 = vmatprep.subr.mxu0 0.0
    %3596 = vmatpush2.msra.mxu0 0.0
    %3597 = vmatprep.subr.mxu0 0.0
    %3598 = vmatpush2.msra.mxu0 0.0
    %3599 = vmatprep.subr.mxu0 0.0
    %3600 = vmatpush2.msra.mxu0 0.0
    %3601 = vmatprep.subr.mxu0 0.0
    %3602 = vmatpush2.msra.mxu0 0.0
    %3603 = vmatprep.subr.mxu0 0.0
    %3604 = vmatpush2.msra.mxu0 0.0
    %3605 = vmatprep.subr.mxu0 0.0
    %3606 = vmatpush2.msra.mxu0 0.0
    %3607 = vmatprep.subr.mxu0 0.0
    %3608 = vmatpush2.msra.mxu0 0.0
    %3609 = vmatprep.subr.mxu0 0.0
    %3610 = vmatpush2.msra.mxu0 0.0
    %3611 = vmatprep.mubr.f32.mxu0 0.0
    %3612 = vmatmul.mubr.f32.gmra.mxu0 %v3545
    %v3613 = vpop.f32.mrf.mxu0
    %v3614 = vadd.f32 0.0, %v3613
    %v3615 = vpop.f32.mrf.mxu0
    %3616 = vdwg.mxu0
    %v3617 = vadd.f32 %v3543, %v3614
    %v3619 = vsel %vm1216, %v2989, 0
    %3621 = vmatprep.subr.mxu0 0.0
    %3622 = vmatpush1.msra.mxu0 0.0
    %3623 = vmatprep.subr.mxu0 0.0
    %3624 = vmatpush1.msra.mxu0 0.0
    %3625 = vmatprep.subr.mxu0 0.0
    %3626 = vmatpush1.msra.mxu0 0.0
    %3627 = vmatprep.subr.mxu0 0.0
    %3628 = vmatpush1.msra.mxu0 0.0
    %3629 = vmatprep.subr.mxu0 0.0
    %3630 = vmatpush1.msra.mxu0 0.0
    %3631 = vmatprep.subr.mxu0 0.0
    %3632 = vmatpush1.msra.mxu0 0.0
    %3633 = vmatprep.subr.mxu0 0.0
    %3634 = vmatpush1.msra.mxu0 0.0
    %3635 = vmatprep.subr.mxu0 0.0
    %3636 = vmatpush1.msra.mxu0 0.0
    %3637 = vmatprep.subr.mxu0 0.0
    %3638 = vmatpush1.msra.mxu0 0.0
    %3639 = vmatprep.subr.mxu0 0.0
    %3640 = vmatpush1.msra.mxu0 0.0
    %3641 = vmatprep.subr.mxu0 0.0
    %3642 = vmatpush1.msra.mxu0 0.0
    %3643 = vmatprep.subr.mxu0 0.0
    %3644 = vmatpush1.msra.mxu0 0.0
    %3645 = vmatprep.subr.mxu0 0.0
    %3646 = vmatpush1.msra.mxu0 %v3027
    %3647 = vmatprep.subr.mxu0 0.0
    %3648 = vmatpush1.msra.mxu0 %v3026
    %3649 = vmatprep.subr.mxu0 0.0
    %3650 = vmatpush1.msra.mxu0 %v3025
    %3651 = vmatprep.subr.mxu0 0.0
    %3652 = vmatpush1.msra.mxu0 %v3024
    %3653 = vmatprep.subr.mxu0 0.0
    %3654 = vmatpush2.msra.mxu0 0.0
    %3655 = vmatprep.subr.mxu0 0.0
    %3656 = vmatpush2.msra.mxu0 0.0
    %3657 = vmatprep.subr.mxu0 0.0
    %3658 = vmatpush2.msra.mxu0 0.0
    %3659 = vmatprep.subr.mxu0 0.0
    %3660 = vmatpush2.msra.mxu0 0.0
    %3661 = vmatprep.subr.mxu0 0.0
    %3662 = vmatpush2.msra.mxu0 0.0
    %3663 = vmatprep.subr.mxu0 0.0
    %3664 = vmatpush2.msra.mxu0 0.0
    %3665 = vmatprep.subr.mxu0 0.0
    %3666 = vmatpush2.msra.mxu0 0.0
    %3667 = vmatprep.subr.mxu0 0.0
    %3668 = vmatpush2.msra.mxu0 0.0
    %3669 = vmatprep.subr.mxu0 0.0
    %3670 = vmatpush2.msra.mxu0 0.0
    %3671 = vmatprep.subr.mxu0 0.0
    %3672 = vmatpush2.msra.mxu0 0.0
    %3673 = vmatprep.subr.mxu0 0.0
    %3674 = vmatpush2.msra.mxu0 0.0
    %3675 = vmatprep.subr.mxu0 0.0
    %3676 = vmatpush2.msra.mxu0 0.0
    %3677 = vmatprep.subr.mxu0 0.0
    %3678 = vmatpush2.msra.mxu0 0.0
    %3679 = vmatprep.subr.mxu0 0.0
    %3680 = vmatpush2.msra.mxu0 0.0
    %3681 = vmatprep.subr.mxu0 0.0
    %3682 = vmatpush2.msra.mxu0 0.0
    %3683 = vmatprep.subr.mxu0 0.0
    %3684 = vmatpush2.msra.mxu0 0.0
    %3685 = vmatprep.mubr.f32.mxu0 0.0
    %3686 = vmatmul.mubr.f32.gmra.mxu0 %v3619
    %v3687 = vpop.f32.mrf.mxu0
    %v3688 = vadd.f32 0.0, %v3687
    %v3689 = vpop.f32.mrf.mxu0
    %3690 = vdwg.mxu0
    %v3691 = vadd.f32 %v3617, %v3688
    %v3692 = vld [vmem:[%s5] sm:$0x1]
    %v3693 = vlaneseq
    %v3694 = vshrl.u32 %v3693, 7
    %v3695 = vsub.s32 0, %v3694
    %v3696 = vrot.slane %v3692, %v3695
    %v3697 = vadd.f32 %v3691, %v3696
    %v3698 = vsel %vm1216, %v3697, 0.0
    %v3699 = vrot.slane %v3698, 4
    %v3700 = vadd.f32 %v3698, %v3699
    %v3701 = vrot.slane %v3700, 2
    %v3702 = vadd.f32 %v3700, %v3701
    %v3703 = vrot.slane %v3702, 1
    %v3704 = vadd.f32 %v3702, %v3703
    %v3705 = vrcp.pop 8.0
    %v3706 = vmul.f32 %v3704, %v3705
    %v3707 = vsub.f32 %v3697, %v3706
    %v3708 = vmul.f32 %v3707, %v3707
    %v3709 = vsel %vm1216, %v3708, 0.0
    %v3710 = vrot.slane %v3709, 4
    %v3711 = vadd.f32 %v3709, %v3710
    %v3712 = vrot.slane %v3711, 2
    %v3713 = vadd.f32 %v3711, %v3712
    %v3714 = vrot.slane %v3713, 1
    %v3715 = vadd.f32 %v3713, %v3714
    %v3716 = vmul.f32 %v3715, %v3705
    %v3717 = vadd.f32 %v3716, 1e-05
    %v3718 = vrsqrt.pop %v3717
    %v3719 = vmul.f32 %v3707, %v3718
    %v3720 = vld [vmem:[%s5 + $0x1] sm:$0x1]
    %v3721 = vlaneseq
    %v3722 = vshrl.u32 %v3721, 7
    %v3723 = vsub.s32 0, %v3722
    %v3724 = vrot.slane %v3720, %v3723
    %v3725 = vmul.f32 %v3719, %v3724
    %v3726 = vld [vmem:[%s5 + $0x2] sm:$0x1]
    %v3727 = vlaneseq
    %v3728 = vshrl.u32 %v3727, 7
    %v3729 = vsub.s32 0, %v3728
    %v3730 = vrot.slane %v3726, %v3729
    %v3731 = vadd.f32 %v3725, %v3730
    %v3732 = vmax.f32 %v3731, 0.0
    %v3733 = vld [vmem:[%s6] sm:$0xff]
    %v3734 = vld [vmem:[%s6 + $0x8] sm:$0xff]
    %v3735 = vld [vmem:[%s6 + $0x10] sm:$0xff]
    %v3736 = vld [vmem:[%s6 + $0x18] sm:$0xff]
    %v3737 = vld [vmem:[%s6 + $0x20] sm:$0xff]
    %v3738 = vld [vmem:[%s6 + $0x28] sm:$0xff]
    %v3739 = vld [vmem:[%s6 + $0x30] sm:$0xff]
    %v3740 = vld [vmem:[%s6 + $0x38] sm:$0xff]
    %v3741 = vld [vmem:[%s6 + $0x40] sm:$0xff]
    %v3742 = vld [vmem:[%s6 + $0x48] sm:$0xff]
    %v3743 = vld [vmem:[%s6 + $0x50] sm:$0xff]
    %v3744 = vld [vmem:[%s6 + $0x58] sm:$0xff]
    %v3745 = vld [vmem:[%s6 + $0x60] sm:$0xff]
    %v3746 = vld [vmem:[%s6 + $0x68] sm:$0xff]
    %v3747 = vld [vmem:[%s6 + $0x70] sm:$0xff]
    %v3748 = vld [vmem:[%s6 + $0x78] sm:$0xff]
    %v3750 = vrot.slane %v3732, 2
    %v3751 = vsel %vm1216, %v3750, 0
    %3753 = vmatprep.subr.mxu0 0.0
    %3754 = vmatpush1.msra.mxu0 0.0
    %3755 = vmatprep.subr.mxu0 0.0
    %3756 = vmatpush1.msra.mxu0 0.0
    %3757 = vmatprep.subr.mxu0 0.0
    %3758 = vmatpush1.msra.mxu0 0.0
    %3759 = vmatprep.subr.mxu0 0.0
    %3760 = vmatpush1.msra.mxu0 0.0
    %3761 = vmatprep.subr.mxu0 0.0
    %3762 = vmatpush1.msra.mxu0 0.0
    %3763 = vmatprep.subr.mxu0 0.0
    %3764 = vmatpush1.msra.mxu0 0.0
    %3765 = vmatprep.subr.mxu0 0.0
    %3766 = vmatpush1.msra.mxu0 0.0
    %3767 = vmatprep.subr.mxu0 0.0
    %3768 = vmatpush1.msra.mxu0 0.0
    %3769 = vmatprep.subr.mxu0 0.0
    %3770 = vmatpush1.msra.mxu0 0.0
    %3771 = vmatprep.subr.mxu0 0.0
    %3772 = vmatpush1.msra.mxu0 0.0
    %3773 = vmatprep.subr.mxu0 0.0
    %3774 = vmatpush1.msra.mxu0 0.0
    %3775 = vmatprep.subr.mxu0 0.0
    %3776 = vmatpush1.msra.mxu0 0.0
    %3777 = vmatprep.subr.mxu0 0.0
    %3778 = vmatpush1.msra.mxu0 %v3740
    %3779 = vmatprep.subr.mxu0 0.0
    %3780 = vmatpush1.msra.mxu0 %v3739
    %3781 = vmatprep.subr.mxu0 0.0
    %3782 = vmatpush1.msra.mxu0 %v3738
    %3783 = vmatprep.subr.mxu0 0.0
    %3784 = vmatpush1.msra.mxu0 %v3737
    %3785 = vmatprep.subr.mxu0 0.0
    %3786 = vmatpush2.msra.mxu0 0.0
    %3787 = vmatprep.subr.mxu0 0.0
    %3788 = vmatpush2.msra.mxu0 0.0
    %3789 = vmatprep.subr.mxu0 0.0
    %3790 = vmatpush2.msra.mxu0 0.0
    %3791 = vmatprep.subr.mxu0 0.0
    %3792 = vmatpush2.msra.mxu0 0.0
    %3793 = vmatprep.subr.mxu0 0.0
    %3794 = vmatpush2.msra.mxu0 0.0
    %3795 = vmatprep.subr.mxu0 0.0
    %3796 = vmatpush2.msra.mxu0 0.0
    %3797 = vmatprep.subr.mxu0 0.0
    %3798 = vmatpush2.msra.mxu0 0.0
    %3799 = vmatprep.subr.mxu0 0.0
    %3800 = vmatpush2.msra.mxu0 0.0
    %3801 = vmatprep.subr.mxu0 0.0
    %3802 = vmatpush2.msra.mxu0 0.0
    %3803 = vmatprep.subr.mxu0 0.0
    %3804 = vmatpush2.msra.mxu0 0.0
    %3805 = vmatprep.subr.mxu0 0.0
    %3806 = vmatpush2.msra.mxu0 0.0
    %3807 = vmatprep.subr.mxu0 0.0
    %3808 = vmatpush2.msra.mxu0 0.0
    %3809 = vmatprep.subr.mxu0 0.0
    %3810 = vmatpush2.msra.mxu0 0.0
    %3811 = vmatprep.subr.mxu0 0.0
    %3812 = vmatpush2.msra.mxu0 0.0
    %3813 = vmatprep.subr.mxu0 0.0
    %3814 = vmatpush2.msra.mxu0 0.0
    %3815 = vmatprep.subr.mxu0 0.0
    %3816 = vmatpush2.msra.mxu0 0.0
    %3817 = vmatprep.mubr.f32.mxu0 0.0
    %3818 = vmatmul.mubr.f32.gmra.mxu0 %v3751
    %v3819 = vpop.f32.mrf.mxu0
    %v3820 = vadd.f32 0.0, %v3819
    %v3821 = vpop.f32.mrf.mxu0
    %3822 = vdwg.mxu0
    %v3823 = vsel %vm1216, %v3732, 0
    %3825 = vmatprep.subr.mxu0 0.0
    %3826 = vmatpush1.msra.mxu0 0.0
    %3827 = vmatprep.subr.mxu0 0.0
    %3828 = vmatpush1.msra.mxu0 0.0
    %3829 = vmatprep.subr.mxu0 0.0
    %3830 = vmatpush1.msra.mxu0 0.0
    %3831 = vmatprep.subr.mxu0 0.0
    %3832 = vmatpush1.msra.mxu0 0.0
    %3833 = vmatprep.subr.mxu0 0.0
    %3834 = vmatpush1.msra.mxu0 0.0
    %3835 = vmatprep.subr.mxu0 0.0
    %3836 = vmatpush1.msra.mxu0 0.0
    %3837 = vmatprep.subr.mxu0 0.0
    %3838 = vmatpush1.msra.mxu0 0.0
    %3839 = vmatprep.subr.mxu0 0.0
    %3840 = vmatpush1.msra.mxu0 0.0
    %3841 = vmatprep.subr.mxu0 0.0
    %3842 = vmatpush1.msra.mxu0 0.0
    %3843 = vmatprep.subr.mxu0 0.0
    %3844 = vmatpush1.msra.mxu0 0.0
    %3845 = vmatprep.subr.mxu0 0.0
    %3846 = vmatpush1.msra.mxu0 0.0
    %3847 = vmatprep.subr.mxu0 0.0
    %3848 = vmatpush1.msra.mxu0 0.0
    %3849 = vmatprep.subr.mxu0 0.0
    %3850 = vmatpush1.msra.mxu0 %v3736
    %3851 = vmatprep.subr.mxu0 0.0
    %3852 = vmatpush1.msra.mxu0 %v3735
    %3853 = vmatprep.subr.mxu0 0.0
    %3854 = vmatpush1.msra.mxu0 %v3734
    %3855 = vmatprep.subr.mxu0 0.0
    %3856 = vmatpush1.msra.mxu0 %v3733
    %3857 = vmatprep.subr.mxu0 0.0
    %3858 = vmatpush2.msra.mxu0 0.0
    %3859 = vmatprep.subr.mxu0 0.0
    %3860 = vmatpush2.msra.mxu0 0.0
    %3861 = vmatprep.subr.mxu0 0.0
    %3862 = vmatpush2.msra.mxu0 0.0
    %3863 = vmatprep.subr.mxu0 0.0
    %3864 = vmatpush2.msra.mxu0 0.0
    %3865 = vmatprep.subr.mxu0 0.0
    %3866 = vmatpush2.msra.mxu0 0.0
    %3867 = vmatprep.subr.mxu0 0.0
    %3868 = vmatpush2.msra.mxu0 0.0
    %3869 = vmatprep.subr.mxu0 0.0
    %3870 = vmatpush2.msra.mxu0 0.0
    %3871 = vmatprep.subr.mxu0 0.0
    %3872 = vmatpush2.msra.mxu0 0.0
    %3873 = vmatprep.subr.mxu0 0.0
    %3874 = vmatpush2.msra.mxu0 0.0
    %3875 = vmatprep.subr.mxu0 0.0
    %3876 = vmatpush2.msra.mxu0 0.0
    %3877 = vmatprep.subr.mxu0 0.0
    %3878 = vmatpush2.msra.mxu0 0.0
    %3879 = vmatprep.subr.mxu0 0.0
    %3880 = vmatpush2.msra.mxu0 0.0
    %3881 = vmatprep.subr.mxu0 0.0
    %3882 = vmatpush2.msra.mxu0 0.0
    %3883 = vmatprep.subr.mxu0 0.0
    %3884 = vmatpush2.msra.mxu0 0.0
    %3885 = vmatprep.subr.mxu0 0.0
    %3886 = vmatpush2.msra.mxu0 0.0
    %3887 = vmatprep.subr.mxu0 0.0
    %3888 = vmatpush2.msra.mxu0 0.0
    %3889 = vmatprep.mubr.f32.mxu0 0.0
    %3890 = vmatmul.mubr.f32.gmra.mxu0 %v3823
    %v3891 = vpop.f32.mrf.mxu0
    %v3892 = vadd.f32 %v3820, %v3891
    %v3893 = vpop.f32.mrf.mxu0
    %3894 = vdwg.mxu0
    %v3895 = vrot.slane %v3732, 4
    %v3896 = vsel %vm1216, %v3895, 0
    %3898 = vmatprep.subr.mxu0 0.0
    %3899 = vmatpush1.msra.mxu0 0.0
    %3900 = vmatprep.subr.mxu0 0.0
    %3901 = vmatpush1.msra.mxu0 0.0
    %3902 = vmatprep.subr.mxu0 0.0
    %3903 = vmatpush1.msra.mxu0 0.0
    %3904 = vmatprep.subr.mxu0 0.0
    %3905 = vmatpush1.msra.mxu0 0.0
    %3906 = vmatprep.subr.mxu0 0.0
    %3907 = vmatpush1.msra.mxu0 0.0
    %3908 = vmatprep.subr.mxu0 0.0
    %3909 = vmatpush1.msra.mxu0 0.0
    %3910 = vmatprep.subr.mxu0 0.0
    %3911 = vmatpush1.msra.mxu0 0.0
    %3912 = vmatprep.subr.mxu0 0.0
    %3913 = vmatpush1.msra.mxu0 0.0
    %3914 = vmatprep.subr.mxu0 0.0
    %3915 = vmatpush1.msra.mxu0 0.0
    %3916 = vmatprep.subr.mxu0 0.0
    %3917 = vmatpush1.msra.mxu0 0.0
    %3918 = vmatprep.subr.mxu0 0.0
    %3919 = vmatpush1.msra.mxu0 0.0
    %3920 = vmatprep.subr.mxu0 0.0
    %3921 = vmatpush1.msra.mxu0 0.0
    %3922 = vmatprep.subr.mxu0 0.0
    %3923 = vmatpush1.msra.mxu0 %v3744
    %3924 = vmatprep.subr.mxu0 0.0
    %3925 = vmatpush1.msra.mxu0 %v3743
    %3926 = vmatprep.subr.mxu0 0.0
    %3927 = vmatpush1.msra.mxu0 %v3742
    %3928 = vmatprep.subr.mxu0 0.0
    %3929 = vmatpush1.msra.mxu0 %v3741
    %3930 = vmatprep.subr.mxu0 0.0
    %3931 = vmatpush2.msra.mxu0 0.0
    %3932 = vmatprep.subr.mxu0 0.0
    %3933 = vmatpush2.msra.mxu0 0.0
    %3934 = vmatprep.subr.mxu0 0.0
    %3935 = vmatpush2.msra.mxu0 0.0
    %3936 = vmatprep.subr.mxu0 0.0
    %3937 = vmatpush2.msra.mxu0 0.0
    %3938 = vmatprep.subr.mxu0 0.0
    %3939 = vmatpush2.msra.mxu0 0.0
    %3940 = vmatprep.subr.mxu0 0.0
    %3941 = vmatpush2.msra.mxu0 0.0
    %3942 = vmatprep.subr.mxu0 0.0
    %3943 = vmatpush2.msra.mxu0 0.0
    %3944 = vmatprep.subr.mxu0 0.0
    %3945 = vmatpush2.msra.mxu0 0.0
    %3946 = vmatprep.subr.mxu0 0.0
    %3947 = vmatpush2.msra.mxu0 0.0
    %3948 = vmatprep.subr.mxu0 0.0
    %3949 = vmatpush2.msra.mxu0 0.0
    %3950 = vmatprep.subr.mxu0 0.0
    %3951 = vmatpush2.msra.mxu0 0.0
    %3952 = vmatprep.subr.mxu0 0.0
    %3953 = vmatpush2.msra.mxu0 0.0
    %3954 = vmatprep.subr.mxu0 0.0
    %3955 = vmatpush2.msra.mxu0 0.0
    %3956 = vmatprep.subr.mxu0 0.0
    %3957 = vmatpush2.msra.mxu0 0.0
    %3958 = vmatprep.subr.mxu0 0.0
    %3959 = vmatpush2.msra.mxu0 0.0
    %3960 = vmatprep.subr.mxu0 0.0
    %3961 = vmatpush2.msra.mxu0 0.0
    %3962 = vmatprep.mubr.f32.mxu0 0.0
    %3963 = vmatmul.mubr.f32.gmra.mxu0 %v3896
    %v3964 = vpop.f32.mrf.mxu0
    %v3965 = vadd.f32 0.0, %v3964
    %v3966 = vpop.f32.mrf.mxu0
    %3967 = vdwg.mxu0
    %v3968 = vadd.f32 %v3892, %v3965
    %v3969 = vrot.slane %v3732, 6
    %v3970 = vsel %vm1216, %v3969, 0
    %3972 = vmatprep.subr.mxu0 0.0
    %3973 = vmatpush1.msra.mxu0 0.0
    %3974 = vmatprep.subr.mxu0 0.0
    %3975 = vmatpush1.msra.mxu0 0.0
    %3976 = vmatprep.subr.mxu0 0.0
    %3977 = vmatpush1.msra.mxu0 0.0
    %3978 = vmatprep.subr.mxu0 0.0
    %3979 = vmatpush1.msra.mxu0 0.0
    %3980 = vmatprep.subr.mxu0 0.0
    %3981 = vmatpush1.msra.mxu0 0.0
    %3982 = vmatprep.subr.mxu0 0.0
    %3983 = vmatpush1.msra.mxu0 0.0
    %3984 = vmatprep.subr.mxu0 0.0
    %3985 = vmatpush1.msra.mxu0 0.0
    %3986 = vmatprep.subr.mxu0 0.0
    %3987 = vmatpush1.msra.mxu0 0.0
    %3988 = vmatprep.subr.mxu0 0.0
    %3989 = vmatpush1.msra.mxu0 0.0
    %3990 = vmatprep.subr.mxu0 0.0
    %3991 = vmatpush1.msra.mxu0 0.0
    %3992 = vmatprep.subr.mxu0 0.0
    %3993 = vmatpush1.msra.mxu0 0.0
    %3994 = vmatprep.subr.mxu0 0.0
    %3995 = vmatpush1.msra.mxu0 0.0
    %3996 = vmatprep.subr.mxu0 0.0
    %3997 = vmatpush1.msra.mxu0 %v3748
    %3998 = vmatprep.subr.mxu0 0.0
    %3999 = vmatpush1.msra.mxu0 %v3747
    %4000 = vmatprep.subr.mxu0 0.0
    %4001 = vmatpush1.msra.mxu0 %v3746
    %4002 = vmatprep.subr.mxu0 0.0
    %4003 = vmatpush1.msra.mxu0 %v3745
    %4004 = vmatprep.subr.mxu0 0.0
    %4005 = vmatpush2.msra.mxu0 0.0
    %4006 = vmatprep.subr.mxu0 0.0
    %4007 = vmatpush2.msra.mxu0 0.0
    %4008 = vmatprep.subr.mxu0 0.0
    %4009 = vmatpush2.msra.mxu0 0.0
    %4010 = vmatprep.subr.mxu0 0.0
    %4011 = vmatpush2.msra.mxu0 0.0
    %4012 = vmatprep.subr.mxu0 0.0
    %4013 = vmatpush2.msra.mxu0 0.0
    %4014 = vmatprep.subr.mxu0 0.0
    %4015 = vmatpush2.msra.mxu0 0.0
    %4016 = vmatprep.subr.mxu0 0.0
    %4017 = vmatpush2.msra.mxu0 0.0
    %4018 = vmatprep.subr.mxu0 0.0
    %4019 = vmatpush2.msra.mxu0 0.0
    %4020 = vmatprep.subr.mxu0 0.0
    %4021 = vmatpush2.msra.mxu0 0.0
    %4022 = vmatprep.subr.mxu0 0.0
    %4023 = vmatpush2.msra.mxu0 0.0
    %4024 = vmatprep.subr.mxu0 0.0
    %4025 = vmatpush2.msra.mxu0 0.0
    %4026 = vmatprep.subr.mxu0 0.0
    %4027 = vmatpush2.msra.mxu0 0.0
    %4028 = vmatprep.subr.mxu0 0.0
    %4029 = vmatpush2.msra.mxu0 0.0
    %4030 = vmatprep.subr.mxu0 0.0
    %4031 = vmatpush2.msra.mxu0 0.0
    %4032 = vmatprep.subr.mxu0 0.0
    %4033 = vmatpush2.msra.mxu0 0.0
    %4034 = vmatprep.subr.mxu0 0.0
    %4035 = vmatpush2.msra.mxu0 0.0
    %4036 = vmatprep.mubr.f32.mxu0 0.0
    %4037 = vmatmul.mubr.f32.gmra.mxu0 %v3970
    %v4038 = vpop.f32.mrf.mxu0
    %v4039 = vadd.f32 0.0, %v4038
    %v4040 = vpop.f32.mrf.mxu0
    %4041 = vdwg.mxu0
    %v4042 = vadd.f32 %v3968, %v4039
    %v4043 = vld [vmem:[%s7] sm:$0x1]
    %v4045 = vlaneseq
    %v4046 = vshrl.u32 %v4045, 7
    %v4047 = vsub.s32 0, %v4046
    %v4048 = vrot.slane %v4043, %v4047
    %v4050 = vadd.f32 %v4042, %v4048
    %v4051 = vmax.f32 %v4050, 0.0
    %v4052 = vld [vmem:[%s8] sm:$0xff]
    %v4053 = vld [vmem:[%s8 + $0x8] sm:$0xff]
    %v4054 = vld [vmem:[%s8 + $0x10] sm:$0xff]
    %v4055 = vld [vmem:[%s8 + $0x18] sm:$0xff]
    %v4056 = vld [vmem:[%s8 + $0x20] sm:$0xff]
    %v4057 = vld [vmem:[%s8 + $0x28] sm:$0xff]
    %v4058 = vld [vmem:[%s8 + $0x30] sm:$0xff]
    %v4059 = vld [vmem:[%s8 + $0x38] sm:$0xff]
    %v4060 = vld [vmem:[%s8 + $0x40] sm:$0xff]
    %v4061 = vld [vmem:[%s8 + $0x48] sm:$0xff]
    %v4062 = vld [vmem:[%s8 + $0x50] sm:$0xff]
    %v4063 = vld [vmem:[%s8 + $0x58] sm:$0xff]
    %v4064 = vld [vmem:[%s8 + $0x60] sm:$0xff]
    %v4065 = vld [vmem:[%s8 + $0x68] sm:$0xff]
    %v4066 = vld [vmem:[%s8 + $0x70] sm:$0xff]
    %v4067 = vld [vmem:[%s8 + $0x78] sm:$0xff]
    %v4068 = vld [vmem:[%s9] sm:$0x1]
    %v4070 = vlaneseq
    %v4071 = vshrl.u32 %v4070, 7
    %v4072 = vsub.s32 0, %v4071
    %v4073 = vrot.slane %v4068, %v4072
    %4075 = vmatprep.subr.mxu0 0.0
    %4076 = vmatpush1.msra.mxu0 %v4067
    %4077 = vmatprep.subr.mxu0 0.0
    %4078 = vmatpush1.msra.mxu0 %v4066
    %4079 = vmatprep.subr.mxu0 0.0
    %4080 = vmatpush1.msra.mxu0 %v4065
    %4081 = vmatprep.subr.mxu0 0.0
    %4082 = vmatpush1.msra.mxu0 %v4064
    %4083 = vmatprep.subr.mxu0 0.0
    %4084 = vmatpush1.msra.mxu0 %v4063
    %4085 = vmatprep.subr.mxu0 0.0
    %4086 = vmatpush1.msra.mxu0 %v4062
    %4087 = vmatprep.subr.mxu0 0.0
    %4088 = vmatpush1.msra.mxu0 %v4061
    %4089 = vmatprep.subr.mxu0 0.0
    %4090 = vmatpush1.msra.mxu0 %v4060
    %4091 = vmatprep.subr.mxu0 0.0
    %4092 = vmatpush1.msra.mxu0 %v4059
    %4093 = vmatprep.subr.mxu0 0.0
    %4094 = vmatpush1.msra.mxu0 %v4058
    %4095 = vmatprep.subr.mxu0 0.0
    %4096 = vmatpush1.msra.mxu0 %v4057
    %4097 = vmatprep.subr.mxu0 0.0
    %4098 = vmatpush1.msra.mxu0 %v4056
    %4099 = vmatprep.subr.mxu0 0.0
    %4100 = vmatpush1.msra.mxu0 %v4055
    %4101 = vmatprep.subr.mxu0 0.0
    %4102 = vmatpush1.msra.mxu0 %v4054
    %4103 = vmatprep.subr.mxu0 0.0
    %4104 = vmatpush1.msra.mxu0 %v4053
    %4105 = vmatprep.subr.mxu0 0.0
    %4106 = vmatpush1.msra.mxu0 %v4052
    %4107 = vmatprep.subr.mxu0 0.0
    %4108 = vmatpush2.msra.mxu0 0.0
    %4109 = vmatprep.subr.mxu0 0.0
    %4110 = vmatpush2.msra.mxu0 0.0
    %4111 = vmatprep.subr.mxu0 0.0
    %4112 = vmatpush2.msra.mxu0 0.0
    %4113 = vmatprep.subr.mxu0 0.0
    %4114 = vmatpush2.msra.mxu0 0.0
    %4115 = vmatprep.subr.mxu0 0.0
    %4116 = vmatpush2.msra.mxu0 0.0
    %4117 = vmatprep.subr.mxu0 0.0
    %4118 = vmatpush2.msra.mxu0 0.0
    %4119 = vmatprep.subr.mxu0 0.0
    %4120 = vmatpush2.msra.mxu0 0.0
    %4121 = vmatprep.subr.mxu0 0.0
    %4122 = vmatpush2.msra.mxu0 0.0
    %4123 = vmatprep.subr.mxu0 0.0
    %4124 = vmatpush2.msra.mxu0 0.0
    %4125 = vmatprep.subr.mxu0 0.0
    %4126 = vmatpush2.msra.mxu0 0.0
    %4127 = vmatprep.subr.mxu0 0.0
    %4128 = vmatpush2.msra.mxu0 0.0
    %4129 = vmatprep.subr.mxu0 0.0
    %4130 = vmatpush2.msra.mxu0 0.0
    %4131 = vmatprep.subr.mxu0 0.0
    %4132 = vmatpush2.msra.mxu0 0.0
    %4133 = vmatprep.subr.mxu0 0.0
    %4134 = vmatpush2.msra.mxu0 0.0
    %4135 = vmatprep.subr.mxu0 0.0
    %4136 = vmatpush2.msra.mxu0 0.0
    %4137 = vmatprep.subr.mxu0 0.0
    %4138 = vmatpush2.msra.mxu0 0.0
    %4139 = vmatprep.mubr.f32.mxu0 0.0
    %4140 = vmatmul.mubr.f32.gmra.mxu0 %v4051
    %v4141 = vpop.f32.mrf.mxu0
    %v4142 = vadd.f32 %v4073, %v4141
    %v4143 = vpop.f32.mrf.mxu0
    %4144 = vdwg.mxu0
    %4145 = vst [vmem:[#allocation2] sm:$0x3] %v4142
    // Predicated region
    $region42: #{cnn_forward.1} parent=1 // pred_check
      _
    $region43: #{cnn_forward.1} parent=1 // pred_check_branch
      %4147 = sbr.rel (0) target = $region45
    $region44: #{cnn_forward.1} parent=1 // pred_region
      %s4149 = ssub.s32 32, 32
      %4150 = vsyncadd [#allocation3], %s4149
      %s4152 = sshll.u32 [#allocation2], 4
      %s4153 = int_to_ptr.vmem [resolvable:$true] %s4152
      %4155 = dma.vmem_to_hbm [thread:$0]  %s4153, 32, %s10, [#allocation3]
    $region45: #{cnn_forward.1} parent=1 // pred_fallthru
      _
    // Predicated region
    $region46: #{cnn_forward.1} parent=1 // pred_check
      _
    $region47: #{cnn_forward.1} parent=1 // pred_check_branch
      %4157 = sbr.rel (0) target = $region49
    $region48: #{cnn_forward.1} parent=1 // pred_region
      %4158 = dma.done [#allocation3], 32
    $region49: #{cnn_forward.1} parent=1 // pred_fallthru
      _
    %4159 = vsyncpa [#allocation3], 1

</llo_original>
